<compile_context>
chip_gen: v7x
topology: tpu7x:2x2x1
jax: 0.10.0
libtpu: 0.0.40
codegen_flags: <defaults>
</compile_context>

<pallas_src>
import functools

import jax
import jax.numpy as jnp
from jax.experimental import pallas as pl
from jax.experimental.pallas import tpu as pltpu


def _depool_kernel(x_ref, w_ref, scale_ref, bias_ref, o_ref, *,
                   TH, Wp, Wh, Cin, KH, KW, activation):
    # x_ref:     (R*Cin, 2*Wh) bf16   rows fused as (slab_row, channel), cols = [even | odd]
    # w_ref:     (KW, Cout, KH*Cin) bf16
    # scale_ref: (Cout, 1) f32        folded BatchNorm scale
    # bias_ref:  (Cout, 1) f32        folded BatchNorm bias
    # o_ref:     (Cout, TH, Wp) f32   NCHW-native output tile
    scale = scale_ref[...]
    bias = bias_ref[...]
    # Hoist the KW weight slices (small, reused for every row).
    w_taps = [w_ref[kw] for kw in range(KW)]

    for i in range(TH):                      # pooled output row (static unroll)
        m = None
        for dr in range(2):                  # pooling row phase
            rr = 2 * i + dr                  # conv row within the slab
            row_base = rr * Cin
            for dw in range(2):              # pooling column phase
                acc = None
                for kw in range(KW):         # column taps (kh taps fused into K)
                    p = (dw + kw) % 2        # column parity plane
                    off = (dw + kw) // 2     # offset inside the parity plane
                    xs = x_ref[pl.ds(row_base, KH * Cin),
                               pl.ds(p * Wh + off, Wp)]          # (KH*Cin, Wp) bf16
                    d = jnp.dot(w_taps[kw], xs,
                                preferred_element_type=jnp.float32)  # (Cout, Wp) f32
                    acc = d if acc is None else acc + d
                y = acc * scale + bias       # BatchNorm affine (before the pool max)
                m = y if m is None else jnp.maximum(m, y)  # 2x2 max-pool over the 4 phases
        if activation:
            # Mish: x * tanh(softplus(x)), numerically stable softplus.
            sp = jnp.maximum(m, 0.0) + jnp.log1p(jnp.exp(-jnp.abs(m)))
            m = m * jnp.tanh(sp)
        o_ref[:, i, :] = m.astype(o_ref.dtype)


def depooling_forward(x_nchw, conv_w, gamma, beta, running_mean, running_var,
                      *, eps=1e-3, activation=False, row_tile=16):
    N, Cin, H, W = x_nchw.shape
    Cout, Cin2, KH, KW = conv_w.shape
    assert Cin2 == Cin and KH == 3 and KW == 3, "specialized to module defaults"
    Ho, Wo = H - KH + 1, W - KW + 1          # conv: stride=1, dilation=1, padding=0
    Hp, Wp = Ho // 2, Wo // 2                # maxpool: k=2, s=2, padding=0 (floor mode)
    assert Hp >= 1 and Wp >= 1
    Wh = Wp + 1                              # columns per parity plane (even / odd)

    # Row tiling: TH pooled rows per grid step.
    if Hp <= row_tile:
        TH, NT = Hp, 1
    else:
        TH = row_tile
        assert TH % 8 == 0                   # (8,128) constraint on the output block
        NT = -(-Hp // TH)
    Hp_pad = NT * TH
    R = 2 * TH + KH - 1                      # slab rows per tile (incl. 2-row halo)

    x_bf = x_nchw.astype(jnp.bfloat16)
    w_bf = conv_w.astype(jnp.bfloat16)

    # Columns de-interleaved into [even | odd] pooling-parity planes (only the used cols).
    x_cols = jnp.concatenate(
        [x_bf[..., 0:2 * Wh:2], x_bf[..., 1:2 * Wh:2]], axis=-1)     # (N, Cin, H, 2*Wh)

    # Overlapping row slabs (halo gather; bottom padding via index clipping).
    row_idx = jnp.clip(
        2 * TH * jnp.arange(NT, dtype=jnp.int32)[:, None]
        + jnp.arange(R, dtype=jnp.int32)[None, :], 0, H - 1)          # (NT, R)
    slabs = jnp.take(x_cols, row_idx, axis=2)                         # (N, Cin, NT, R, 2Wh)
    slabs = jnp.transpose(slabs, (0, 2, 3, 1, 4))                     # (N, NT, R, Cin, 2Wh)
    slabs = slabs.reshape(N, NT, R * Cin, 2 * Wh)                     # (row,chan) fused

    # Weight: (Cout, Cin, KH, KW) -> per-kw (Cout, KH*Cin), contraction order (kh, ci)
    # to match the fused (slab_row, channel) axis of the slabs.
    w_taps = jnp.transpose(w_bf, (3, 0, 2, 1)).reshape(KW, Cout, KH * Cin)

    # TODO(synk): BatchNorm is implemented in inference mode (running statistics);
    # training-mode batch statistics over the conv output are not computed in-kernel.
    scale = (gamma / jnp.sqrt(running_var + eps)).astype(jnp.float32)
    bias = (beta - running_mean * scale).astype(jnp.float32)
    scale = scale.reshape(Cout, 1)
    bias = bias.reshape(Cout, 1)

    kernel = functools.partial(_depool_kernel, TH=TH, Wp=Wp, Wh=Wh,
                               Cin=Cin, KH=KH, KW=KW, activation=activation)
    out = pl.pallas_call(
        kernel,
        out_shape=jax.ShapeDtypeStruct((N, Cout, Hp_pad, Wp), jnp.float32),
        grid_spec=pltpu.PrefetchScalarGridSpec(
            num_scalar_prefetch=0,
            grid=(N, NT),
            in_specs=[
                pl.BlockSpec((None, None, R * Cin, 2 * Wh), lambda n, t: (n, t, 0, 0)),
                pl.BlockSpec((KW, Cout, KH * Cin), lambda n, t: (0, 0, 0)),
                pl.BlockSpec((Cout, 1), lambda n, t: (0, 0)),
                pl.BlockSpec((Cout, 1), lambda n, t: (0, 0)),
            ],
            out_specs=pl.BlockSpec((None, Cout, TH, Wp), lambda n, t: (n, 0, t, 0)),
        ),
        # Both grid axes independent -> shard across v7x's 2 TensorCores.
        compiler_params=pltpu.CompilerParams(
            dimension_semantics=("parallel", "parallel")),
    )(slabs, w_taps, scale, bias)

    return out[:, :, :Hp, :] if Hp_pad != Hp else out


def reference_forward(x_nchw, conv_w, gamma, beta, running_mean, running_var,
                      *, eps=1e-3, activation=False):
    y = jax.lax.conv_general_dilated(
        x_nchw.astype(jnp.float32), conv_w.astype(jnp.float32),
        window_strides=(1, 1), padding="VALID",
        dimension_numbers=("NCHW", "OIHW", "NCHW"),
        precision=jax.lax.Precision.HIGHEST)
    scale = gamma / jnp.sqrt(running_var + eps)
    bias = beta - running_mean * scale
    y = y * scale[None, :, None, None] + bias[None, :, None, None]
    y = jax.lax.reduce_window(y, -jnp.inf, jax.lax.max,
                              (1, 1, 2, 2), (1, 1, 2, 2), "VALID")
    if activation:
        y = y * jnp.tanh(jax.nn.softplus(y))
    return y


if __name__ == "__main__":
    key = jax.random.PRNGKey(0)
    k1, k2, k3, k4, k5, k6 = jax.random.split(key, 6)

    Cin, Cout, KH, KW = 4, 8, 3, 3
    eps = 1e-3

    conv_w = jax.random.normal(k2, (Cout, Cin, KH, KW), jnp.float32) * 0.1
    gamma = jax.random.uniform(k3, (Cout,), jnp.float32, minval=0.5, maxval=1.5)
    beta = jax.random.normal(k4, (Cout,), jnp.float32) * 0.1
    rmean = jax.random.normal(k5, (Cout,), jnp.float32) * 0.1
    rvar = jax.random.uniform(k6, (Cout,), jnp.float32, minval=0.5, maxval=1.5)

    # bf16-quantized copies so the f32 reference sees the same streaming values the
    # kernel does (kernel streams bf16, accumulates f32).
    w_q = conv_w.astype(jnp.bfloat16).astype(jnp.float32)

    # Two spatial sizes: the small default and one that exercises row tiling + padding.
    for (N, H, W) in [(2, 16, 16), (2, 70, 40)]:
        x = jax.random.normal(k1, (N, Cin, H, W), jnp.float32)
        x_q = x.astype(jnp.bfloat16).astype(jnp.float32)
        Hp, Wp = (H - KH + 1) // 2, (W - KW + 1) // 2
        for act in (False, True):   # default config (activation=False) plus Mish path
            out = depooling_forward(x, conv_w, gamma, beta, rmean, rvar,
                                    eps=eps, activation=act)
            out = jax.block_until_ready(out)
            ref = reference_forward(x_q, w_q, gamma, beta, rmean, rvar,
                                    eps=eps, activation=act)
            assert out.shape == (N, Cout, Hp, Wp), out.shape
            err = float(jnp.max(jnp.abs(out - ref)))
            assert err < 1e-3, f"mismatch (H={H}, W={W}, activation={act}): max abs err {err}"

    print("KERNEL_OK")
</pallas_src>

<mosaic_0001>
module attributes {stable_mosaic.version = 11 : i64} {
  func.func @_depool_kernel(%arg0: i32, %arg1: i32, %arg2: memref<1x1x64x16xbf16, #tpu.memory_space<vmem>>, %arg3: memref<3x8x12xbf16, #tpu.memory_space<vmem>>, %arg4: memref<8x1xf32, #tpu.memory_space<vmem>>, %arg5: memref<8x1xf32, #tpu.memory_space<vmem>>, %arg6: memref<1x8x7x7xf32, #tpu.memory_space<vmem>>) attributes {dimension_semantics = [#tpu.dimension_semantics<parallel>, #tpu.dimension_semantics<parallel>], iteration_bounds = array<i64: 2, 1>, scalar_prefetch = 0 : i64, scratch_operands = 0 : i64, tpu.core_type = #tpu.core_type<tc>, window_params = [{transform_indices = @transform_0, window_bounds = array<i64: 1, 1, 64, 16>}, {pipeline_mode = #tpu.pipeline_mode<synchronous>, transform_indices = @transform_1, window_bounds = array<i64: 3, 8, 12>}, {pipeline_mode = #tpu.pipeline_mode<synchronous>, transform_indices = @transform_2, window_bounds = array<i64: 8, 1>}, {pipeline_mode = #tpu.pipeline_mode<synchronous>, transform_indices = @transform_3, window_bounds = array<i64: 8, 1>}, {transform_indices = @transform_4, window_bounds = array<i64: 1, 8, 7, 7>}]} {
    %c0 = arith.constant 0 : index
    %c0_0 = arith.constant 0 : index
    %0 = vector.load %arg4[%c0, %c0_0] : memref<8x1xf32, #tpu.memory_space<vmem>>, vector<8x1xf32>
    %c0_1 = arith.constant 0 : index
    %c0_2 = arith.constant 0 : index
    %1 = vector.load %arg5[%c0_1, %c0_2] : memref<8x1xf32, #tpu.memory_space<vmem>>, vector<8x1xf32>
    %c0_3 = arith.constant 0 : index
    %c0_4 = arith.constant 0 : index
    %c0_5 = arith.constant 0 : index
    %2 = vector.load %arg3[%c0_3, %c0_4, %c0_5] : memref<3x8x12xbf16, #tpu.memory_space<vmem>>, vector<1x8x12xbf16>
    %3 = vector.shape_cast %2 : vector<1x8x12xbf16> to vector<8x12xbf16>
    %c1 = arith.constant 1 : index
    %c0_6 = arith.constant 0 : index
    %c0_7 = arith.constant 0 : index
    %4 = vector.load %arg3[%c1, %c0_6, %c0_7] : memref<3x8x12xbf16, #tpu.memory_space<vmem>>, vector<1x8x12xbf16>
    %5 = vector.shape_cast %4 : vector<1x8x12xbf16> to vector<8x12xbf16>
    %c2 = arith.constant 2 : index
    %c0_8 = arith.constant 0 : index
    %c0_9 = arith.constant 0 : index
    %6 = vector.load %arg3[%c2, %c0_8, %c0_9] : memref<3x8x12xbf16, #tpu.memory_space<vmem>>, vector<1x8x12xbf16>
    %7 = vector.shape_cast %6 : vector<1x8x12xbf16> to vector<8x12xbf16>
    %c0_10 = arith.constant 0 : index
    %c0_11 = arith.constant 0 : index
    %c0_12 = arith.constant 0 : index
    %c0_13 = arith.constant 0 : index
    %8 = vector.load %arg2[%c0_10, %c0_11, %c0_12, %c0_13] : memref<1x1x64x16xbf16, #tpu.memory_space<vmem>>, vector<1x1x12x7xbf16>
    %9 = vector.shape_cast %8 : vector<1x1x12x7xbf16> to vector<12x7xbf16>
    %cst = arith.constant dense<0.000000e+00> : vector<8x7xf32>
    %10 = tpu.matmul %3, %9, %cst {dimension_numbers = #tpu.dot_dimension_numbers<[1], [0], [0], [1], [0, 0, 1, 1], [], []>} : vector<8x12xbf16>, vector<12x7xbf16>, vector<8x7xf32> -> vector<8x7xf32>
    %c0_14 = arith.constant 0 : index
    %c0_15 = arith.constant 0 : index
    %c0_16 = arith.constant 0 : index
    %c8 = arith.constant 8 : index
    %11 = vector.load %arg2[%c0_14, %c0_15, %c0_16, %c8] : memref<1x1x64x16xbf16, #tpu.memory_space<vmem>>, vector<1x1x12x7xbf16>
    %12 = vector.shape_cast %11 : vector<1x1x12x7xbf16> to vector<12x7xbf16>
    %cst_17 = arith.constant dense<0.000000e+00> : vector<8x7xf32>
    %13 = tpu.matmul %5, %12, %cst_17 {dimension_numbers = #tpu.dot_dimension_numbers<[1], [0], [0], [1], [0, 0, 1, 1], [], []>} : vector<8x12xbf16>, vector<12x7xbf16>, vector<8x7xf32> -> vector<8x7xf32>
    %14 = arith.addf %10, %13 : vector<8x7xf32>
    %c0_18 = arith.constant 0 : index
    %c0_19 = arith.constant 0 : index
    %c0_20 = arith.constant 0 : index
    %c1_21 = arith.constant 1 : index
    %15 = vector.load %arg2[%c0_18, %c0_19, %c0_20, %c1_21] : memref<1x1x64x16xbf16, #tpu.memory_space<vmem>>, vector<1x1x12x7xbf16>
    %16 = vector.shape_cast %15 : vector<1x1x12x7xbf16> to vector<12x7xbf16>
    %cst_22 = arith.constant dense<0.000000e+00> : vector<8x7xf32>
    %17 = tpu.matmul %7, %16, %cst_22 {dimension_numbers = #tpu.dot_dimension_numbers<[1], [0], [0], [1], [0, 0, 1, 1], [], []>} : vector<8x12xbf16>, vector<12x7xbf16>, vector<8x7xf32> -> vector<8x7xf32>
    %18 = arith.addf %14, %17 : vector<8x7xf32>
    %19 = vector.broadcast %0 : vector<8x1xf32> to vector<8x7xf32>
    %20 = arith.mulf %18, %19 : vector<8x7xf32>
    %21 = vector.broadcast %1 : vector<8x1xf32> to vector<8x7xf32>
    %22 = arith.addf %20, %21 : vector<8x7xf32>
    %c0_23 = arith.constant 0 : index
    %c0_24 = arith.constant 0 : index
    %c0_25 = arith.constant 0 : index
    %c8_26 = arith.constant 8 : index
    %23 = vector.load %arg2[%c0_23, %c0_24, %c0_25, %c8_26] : memref<1x1x64x16xbf16, #tpu.memory_space<vmem>>, vector<1x1x12x7xbf16>
    %24 = vector.shape_cast %23 : vector<1x1x12x7xbf16> to vector<12x7xbf16>
    %cst_27 = arith.constant dense<0.000000e+00> : vector<8x7xf32>
    %25 = tpu.matmul %3, %24, %cst_27 {dimension_numbers = #tpu.dot_dimension_numbers<[1], [0], [0], [1], [0, 0, 1, 1], [], []>} : vector<8x12xbf16>, vector<12x7xbf16>, vector<8x7xf32> -> vector<8x7xf32>
    %c0_28 = arith.constant 0 : index
    %c0_29 = arith.constant 0 : index
    %c0_30 = arith.constant 0 : index
    %c1_31 = arith.constant 1 : index
    %26 = vector.load %arg2[%c0_28, %c0_29, %c0_30, %c1_31] : memref<1x1x64x16xbf16, #tpu.memory_space<vmem>>, vector<1x1x12x7xbf16>
    %27 = vector.shape_cast %26 : vector<1x1x12x7xbf16> to vector<12x7xbf16>
    %cst_32 = arith.constant dense<0.000000e+00> : vector<8x7xf32>
    %28 = tpu.matmul %5, %27, %cst_32 {dimension_numbers = #tpu.dot_dimension_numbers<[1], [0], [0], [1], [0, 0, 1, 1], [], []>} : vector<8x12xbf16>, vector<12x7xbf16>, vector<8x7xf32> -> vector<8x7xf32>
    %29 = arith.addf %25, %28 : vector<8x7xf32>
    %c0_33 = arith.constant 0 : index
    %c0_34 = arith.constant 0 : index
    %c0_35 = arith.constant 0 : index
    %c9 = arith.constant 9 : index
    %30 = vector.load %arg2[%c0_33, %c0_34, %c0_35, %c9] : memref<1x1x64x16xbf16, #tpu.memory_space<vmem>>, vector<1x1x12x7xbf16>
    %31 = vector.shape_cast %30 : vector<1x1x12x7xbf16> to vector<12x7xbf16>
    %cst_36 = arith.constant dense<0.000000e+00> : vector<8x7xf32>
    %32 = tpu.matmul %7, %31, %cst_36 {dimension_numbers = #tpu.dot_dimension_numbers<[1], [0], [0], [1], [0, 0, 1, 1], [], []>} : vector<8x12xbf16>, vector<12x7xbf16>, vector<8x7xf32> -> vector<8x7xf32>
    %33 = arith.addf %29, %32 : vector<8x7xf32>
    %34 = vector.broadcast %0 : vector<8x1xf32> to vector<8x7xf32>
    %35 = arith.mulf %33, %34 : vector<8x7xf32>
    %36 = vector.broadcast %1 : vector<8x1xf32> to vector<8x7xf32>
    %37 = arith.addf %35, %36 : vector<8x7xf32>
    %38 = arith.maximumf %22, %37 : vector<8x7xf32>
    %c0_37 = arith.constant 0 : index
    %c0_38 = arith.constant 0 : index
    %c4 = arith.constant 4 : index
    %c0_39 = arith.constant 0 : index
    %39 = vector.load %arg2[%c0_37, %c0_38, %c4, %c0_39] : memref<1x1x64x16xbf16, #tpu.memory_space<vmem>>, vector<1x1x12x7xbf16>
    %40 = vector.shape_cast %39 : vector<1x1x12x7xbf16> to vector<12x7xbf16>
    %cst_40 = arith.constant dense<0.000000e+00> : vector<8x7xf32>
    %41 = tpu.matmul %3, %40, %cst_40 {dimension_numbers = #tpu.dot_dimension_numbers<[1], [0], [0], [1], [0, 0, 1, 1], [], []>} : vector<8x12xbf16>, vector<12x7xbf16>, vector<8x7xf32> -> vector<8x7xf32>
    %c0_41 = arith.constant 0 : index
    %c0_42 = arith.constant 0 : index
    %c4_43 = arith.constant 4 : index
    %c8_44 = arith.constant 8 : index
    %42 = vector.load %arg2[%c0_41, %c0_42, %c4_43, %c8_44] : memref<1x1x64x16xbf16, #tpu.memory_space<vmem>>, vector<1x1x12x7xbf16>
    %43 = vector.shape_cast %42 : vector<1x1x12x7xbf16> to vector<12x7xbf16>
    %cst_45 = arith.constant dense<0.000000e+00> : vector<8x7xf32>
    %44 = tpu.matmul %5, %43, %cst_45 {dimension_numbers = #tpu.dot_dimension_numbers<[1], [0], [0], [1], [0, 0, 1, 1], [], []>} : vector<8x12xbf16>, vector<12x7xbf16>, vector<8x7xf32> -> vector<8x7xf32>
    %45 = arith.addf %41, %44 : vector<8x7xf32>
    %c0_46 = arith.constant 0 : index
    %c0_47 = arith.constant 0 : index
    %c4_48 = arith.constant 4 : index
    %c1_49 = arith.constant 1 : index
    %46 = vector.load %arg2[%c0_46, %c0_47, %c4_48, %c1_49] : memref<1x1x64x16xbf16, #tpu.memory_space<vmem>>, vector<1x1x12x7xbf16>
    %47 = vector.shape_cast %46 : vector<1x1x12x7xbf16> to vector<12x7xbf16>
    %cst_50 = arith.constant dense<0.000000e+00> : vector<8x7xf32>
    %48 = tpu.matmul %7, %47, %cst_50 {dimension_numbers = #tpu.dot_dimension_numbers<[1], [0], [0], [1], [0, 0, 1, 1], [], []>} : vector<8x12xbf16>, vector<12x7xbf16>, vector<8x7xf32> -> vector<8x7xf32>
    %49 = arith.addf %45, %48 : vector<8x7xf32>
    %50 = vector.broadcast %0 : vector<8x1xf32> to vector<8x7xf32>
    %51 = arith.mulf %49, %50 : vector<8x7xf32>
    %52 = vector.broadcast %1 : vector<8x1xf32> to vector<8x7xf32>
    %53 = arith.addf %51, %52 : vector<8x7xf32>
    %54 = arith.maximumf %38, %53 : vector<8x7xf32>
    %c0_51 = arith.constant 0 : index
    %c0_52 = arith.constant 0 : index
    %c4_53 = arith.constant 4 : index
    %c8_54 = arith.constant 8 : index
    %55 = vector.load %arg2[%c0_51, %c0_52, %c4_53, %c8_54] : memref<1x1x64x16xbf16, #tpu.memory_space<vmem>>, vector<1x1x12x7xbf16>
    %56 = vector.shape_cast %55 : vector<1x1x12x7xbf16> to vector<12x7xbf16>
    %cst_55 = arith.constant dense<0.000000e+00> : vector<8x7xf32>
    %57 = tpu.matmul %3, %56, %cst_55 {dimension_numbers = #tpu.dot_dimension_numbers<[1], [0], [0], [1], [0, 0, 1, 1], [], []>} : vector<8x12xbf16>, vector<12x7xbf16>, vector<8x7xf32> -> vector<8x7xf32>
    %c0_56 = arith.constant 0 : index
    %c0_57 = arith.constant 0 : index
    %c4_58 = arith.constant 4 : index
    %c1_59 = arith.constant 1 : index
    %58 = vector.load %arg2[%c0_56, %c0_57, %c4_58, %c1_59] : memref<1x1x64x16xbf16, #tpu.memory_space<vmem>>, vector<1x1x12x7xbf16>
    %59 = vector.shape_cast %58 : vector<1x1x12x7xbf16> to vector<12x7xbf16>
    %cst_60 = arith.constant dense<0.000000e+00> : vector<8x7xf32>
    %60 = tpu.matmul %5, %59, %cst_60 {dimension_numbers = #tpu.dot_dimension_numbers<[1], [0], [0], [1], [0, 0, 1, 1], [], []>} : vector<8x12xbf16>, vector<12x7xbf16>, vector<8x7xf32> -> vector<8x7xf32>
    %61 = arith.addf %57, %60 : vector<8x7xf32>
    %c0_61 = arith.constant 0 : index
    %c0_62 = arith.constant 0 : index
    %c4_63 = arith.constant 4 : index
    %c9_64 = arith.constant 9 : index
    %62 = vector.load %arg2[%c0_61, %c0_62, %c4_63, %c9_64] : memref<1x1x64x16xbf16, #tpu.memory_space<vmem>>, vector<1x1x12x7xbf16>
    %63 = vector.shape_cast %62 : vector<1x1x12x7xbf16> to vector<12x7xbf16>
    %cst_65 = arith.constant dense<0.000000e+00> : vector<8x7xf32>
    %64 = tpu.matmul %7, %63, %cst_65 {dimension_numbers = #tpu.dot_dimension_numbers<[1], [0], [0], [1], [0, 0, 1, 1], [], []>} : vector<8x12xbf16>, vector<12x7xbf16>, vector<8x7xf32> -> vector<8x7xf32>
    %65 = arith.addf %61, %64 : vector<8x7xf32>
    %66 = vector.broadcast %0 : vector<8x1xf32> to vector<8x7xf32>
    %67 = arith.mulf %65, %66 : vector<8x7xf32>
    %68 = vector.broadcast %1 : vector<8x1xf32> to vector<8x7xf32>
    %69 = arith.addf %67, %68 : vector<8x7xf32>
    %70 = arith.maximumf %54, %69 : vector<8x7xf32>
    %c0_66 = arith.constant 0 : index
    %c0_67 = arith.constant 0 : index
    %c0_68 = arith.constant 0 : index
    %c0_69 = arith.constant 0 : index
    %71 = vector.load %arg6[%c0_66, %c0_67, %c0_68, %c0_69] : memref<1x8x7x7xf32, #tpu.memory_space<vmem>>, vector<1x8x1x7xf32>
    %72 = vector.shape_cast %71 : vector<1x8x1x7xf32> to vector<8x7xf32>
    %73 = vector.shape_cast %70 : vector<8x7xf32> to vector<1x8x1x7xf32>
    tpu.vector_store %arg6[%c0_66, %c0_67, %c0_68, %c0_69], %73 {strides = array<i32>} : memref<1x8x7x7xf32, #tpu.memory_space<vmem>>, vector<1x8x1x7xf32>,
    %c0_70 = arith.constant 0 : index
    %c0_71 = arith.constant 0 : index
    %c8_72 = arith.constant 8 : index
    %c0_73 = arith.constant 0 : index
    %74 = vector.load %arg2[%c0_70, %c0_71, %c8_72, %c0_73] : memref<1x1x64x16xbf16, #tpu.memory_space<vmem>>, vector<1x1x12x7xbf16>
    %75 = vector.shape_cast %74 : vector<1x1x12x7xbf16> to vector<12x7xbf16>
    %cst_74 = arith.constant dense<0.000000e+00> : vector<8x7xf32>
    %76 = tpu.matmul %3, %75, %cst_74 {dimension_numbers = #tpu.dot_dimension_numbers<[1], [0], [0], [1], [0, 0, 1, 1], [], []>} : vector<8x12xbf16>, vector<12x7xbf16>, vector<8x7xf32> -> vector<8x7xf32>
    %c0_75 = arith.constant 0 : index
    %c0_76 = arith.constant 0 : index
    %c8_77 = arith.constant 8 : index
    %c8_78 = arith.constant 8 : index
    %77 = vector.load %arg2[%c0_75, %c0_76, %c8_77, %c8_78] : memref<1x1x64x16xbf16, #tpu.memory_space<vmem>>, vector<1x1x12x7xbf16>
    %78 = vector.shape_cast %77 : vector<1x1x12x7xbf16> to vector<12x7xbf16>
    %cst_79 = arith.constant dense<0.000000e+00> : vector<8x7xf32>
    %79 = tpu.matmul %5, %78, %cst_79 {dimension_numbers = #tpu.dot_dimension_numbers<[1], [0], [0], [1], [0, 0, 1, 1], [], []>} : vector<8x12xbf16>, vector<12x7xbf16>, vector<8x7xf32> -> vector<8x7xf32>
    %80 = arith.addf %76, %79 : vector<8x7xf32>
    %c0_80 = arith.constant 0 : index
    %c0_81 = arith.constant 0 : index
    %c8_82 = arith.constant 8 : index
    %c1_83 = arith.constant 1 : index
    %81 = vector.load %arg2[%c0_80, %c0_81, %c8_82, %c1_83] : memref<1x1x64x16xbf16, #tpu.memory_space<vmem>>, vector<1x1x12x7xbf16>
    %82 = vector.shape_cast %81 : vector<1x1x12x7xbf16> to vector<12x7xbf16>
    %cst_84 = arith.constant dense<0.000000e+00> : vector<8x7xf32>
    %83 = tpu.matmul %7, %82, %cst_84 {dimension_numbers = #tpu.dot_dimension_numbers<[1], [0], [0], [1], [0, 0, 1, 1], [], []>} : vector<8x12xbf16>, vector<12x7xbf16>, vector<8x7xf32> -> vector<8x7xf32>
    %84 = arith.addf %80, %83 : vector<8x7xf32>
    %85 = vector.broadcast %0 : vector<8x1xf32> to vector<8x7xf32>
    %86 = arith.mulf %84, %85 : vector<8x7xf32>
    %87 = vector.broadcast %1 : vector<8x1xf32> to vector<8x7xf32>
    %88 = arith.addf %86, %87 : vector<8x7xf32>
    %c0_85 = arith.constant 0 : index
    %c0_86 = arith.constant 0 : index
    %c8_87 = arith.constant 8 : index
    %c8_88 = arith.constant 8 : index
    %89 = vector.load %arg2[%c0_85, %c0_86, %c8_87, %c8_88] : memref<1x1x64x16xbf16, #tpu.memory_space<vmem>>, vector<1x1x12x7xbf16>
    %90 = vector.shape_cast %89 : vector<1x1x12x7xbf16> to vector<12x7xbf16>
    %cst_89 = arith.constant dense<0.000000e+00> : vector<8x7xf32>
    %91 = tpu.matmul %3, %90, %cst_89 {dimension_numbers = #tpu.dot_dimension_numbers<[1], [0], [0], [1], [0, 0, 1, 1], [], []>} : vector<8x12xbf16>, vector<12x7xbf16>, vector<8x7xf32> -> vector<8x7xf32>
    %c0_90 = arith.constant 0 : index
    %c0_91 = arith.constant 0 : index
    %c8_92 = arith.constant 8 : index
    %c1_93 = arith.constant 1 : index
    %92 = vector.load %arg2[%c0_90, %c0_91, %c8_92, %c1_93] : memref<1x1x64x16xbf16, #tpu.memory_space<vmem>>, vector<1x1x12x7xbf16>
    %93 = vector.shape_cast %92 : vector<1x1x12x7xbf16> to vector<12x7xbf16>
    %cst_94 = arith.constant dense<0.000000e+00> : vector<8x7xf32>
    %94 = tpu.matmul %5, %93, %cst_94 {dimension_numbers = #tpu.dot_dimension_numbers<[1], [0], [0], [1], [0, 0, 1, 1], [], []>} : vector<8x12xbf16>, vector<12x7xbf16>, vector<8x7xf32> -> vector<8x7xf32>
    %95 = arith.addf %91, %94 : vector<8x7xf32>
    %c0_95 = arith.constant 0 : index
    %c0_96 = arith.constant 0 : index
    %c8_97 = arith.constant 8 : index
    %c9_98 = arith.constant 9 : index
    %96 = vector.load %arg2[%c0_95, %c0_96, %c8_97, %c9_98] : memref<1x1x64x16xbf16, #tpu.memory_space<vmem>>, vector<1x1x12x7xbf16>
    %97 = vector.shape_cast %96 : vector<1x1x12x7xbf16> to vector<12x7xbf16>
    %cst_99 = arith.constant dense<0.000000e+00> : vector<8x7xf32>
    %98 = tpu.matmul %7, %97, %cst_99 {dimension_numbers = #tpu.dot_dimension_numbers<[1], [0], [0], [1], [0, 0, 1, 1], [], []>} : vector<8x12xbf16>, vector<12x7xbf16>, vector<8x7xf32> -> vector<8x7xf32>
    %99 = arith.addf %95, %98 : vector<8x7xf32>
    %100 = vector.broadcast %0 : vector<8x1xf32> to vector<8x7xf32>
    %101 = arith.mulf %99, %100 : vector<8x7xf32>
    %102 = vector.broadcast %1 : vector<8x1xf32> to vector<8x7xf32>
    %103 = arith.addf %101, %102 : vector<8x7xf32>
    %104 = arith.maximumf %88, %103 : vector<8x7xf32>
    %c0_100 = arith.constant 0 : index
    %c0_101 = arith.constant 0 : index
    %c12 = arith.constant 12 : index
    %c0_102 = arith.constant 0 : index
    %105 = vector.load %arg2[%c0_100, %c0_101, %c12, %c0_102] : memref<1x1x64x16xbf16, #tpu.memory_space<vmem>>, vector<1x1x12x7xbf16>
    %106 = vector.shape_cast %105 : vector<1x1x12x7xbf16> to vector<12x7xbf16>
    %cst_103 = arith.constant dense<0.000000e+00> : vector<8x7xf32>
    %107 = tpu.matmul %3, %106, %cst_103 {dimension_numbers = #tpu.dot_dimension_numbers<[1], [0], [0], [1], [0, 0, 1, 1], [], []>} : vector<8x12xbf16>, vector<12x7xbf16>, vector<8x7xf32> -> vector<8x7xf32>
    %c0_104 = arith.constant 0 : index
    %c0_105 = arith.constant 0 : index
    %c12_106 = arith.constant 12 : index
    %c8_107 = arith.constant 8 : index
    %108 = vector.load %arg2[%c0_104, %c0_105, %c12_106, %c8_107] : memref<1x1x64x16xbf16, #tpu.memory_space<vmem>>, vector<1x1x12x7xbf16>
    %109 = vector.shape_cast %108 : vector<1x1x12x7xbf16> to vector<12x7xbf16>
    %cst_108 = arith.constant dense<0.000000e+00> : vector<8x7xf32>
    %110 = tpu.matmul %5, %109, %cst_108 {dimension_numbers = #tpu.dot_dimension_numbers<[1], [0], [0], [1], [0, 0, 1, 1], [], []>} : vector<8x12xbf16>, vector<12x7xbf16>, vector<8x7xf32> -> vector<8x7xf32>
    %111 = arith.addf %107, %110 : vector<8x7xf32>
    %c0_109 = arith.constant 0 : index
    %c0_110 = arith.constant 0 : index
    %c12_111 = arith.constant 12 : index
    %c1_112 = arith.constant 1 : index
    %112 = vector.load %arg2[%c0_109, %c0_110, %c12_111, %c1_112] : memref<1x1x64x16xbf16, #tpu.memory_space<vmem>>, vector<1x1x12x7xbf16>
    %113 = vector.shape_cast %112 : vector<1x1x12x7xbf16> to vector<12x7xbf16>
    %cst_113 = arith.constant dense<0.000000e+00> : vector<8x7xf32>
    %114 = tpu.matmul %7, %113, %cst_113 {dimension_numbers = #tpu.dot_dimension_numbers<[1], [0], [0], [1], [0, 0, 1, 1], [], []>} : vector<8x12xbf16>, vector<12x7xbf16>, vector<8x7xf32> -> vector<8x7xf32>
    %115 = arith.addf %111, %114 : vector<8x7xf32>
    %116 = vector.broadcast %0 : vector<8x1xf32> to vector<8x7xf32>
    %117 = arith.mulf %115, %116 : vector<8x7xf32>
    %118 = vector.broadcast %1 : vector<8x1xf32> to vector<8x7xf32>
    %119 = arith.addf %117, %118 : vector<8x7xf32>
    %120 = arith.maximumf %104, %119 : vector<8x7xf32>
    %c0_114 = arith.constant 0 : index
    %c0_115 = arith.constant 0 : index
    %c12_116 = arith.constant 12 : index
    %c8_117 = arith.constant 8 : index
    %121 = vector.load %arg2[%c0_114, %c0_115, %c12_116, %c8_117] : memref<1x1x64x16xbf16, #tpu.memory_space<vmem>>, vector<1x1x12x7xbf16>
    %122 = vector.shape_cast %121 : vector<1x1x12x7xbf16> to vector<12x7xbf16>
    %cst_118 = arith.constant dense<0.000000e+00> : vector<8x7xf32>
    %123 = tpu.matmul %3, %122, %cst_118 {dimension_numbers = #tpu.dot_dimension_numbers<[1], [0], [0], [1], [0, 0, 1, 1], [], []>} : vector<8x12xbf16>, vector<12x7xbf16>, vector<8x7xf32> -> vector<8x7xf32>
    %c0_119 = arith.constant 0 : index
    %c0_120 = arith.constant 0 : index
    %c12_121 = arith.constant 12 : index
    %c1_122 = arith.constant 1 : index
    %124 = vector.load %arg2[%c0_119, %c0_120, %c12_121, %c1_122] : memref<1x1x64x16xbf16, #tpu.memory_space<vmem>>, vector<1x1x12x7xbf16>
    %125 = vector.shape_cast %124 : vector<1x1x12x7xbf16> to vector<12x7xbf16>
    %cst_123 = arith.constant dense<0.000000e+00> : vector<8x7xf32>
    %126 = tpu.matmul %5, %125, %cst_123 {dimension_numbers = #tpu.dot_dimension_numbers<[1], [0], [0], [1], [0, 0, 1, 1], [], []>} : vector<8x12xbf16>, vector<12x7xbf16>, vector<8x7xf32> -> vector<8x7xf32>
    %127 = arith.addf %123, %126 : vector<8x7xf32>
    %c0_124 = arith.constant 0 : index
    %c0_125 = arith.constant 0 : index
    %c12_126 = arith.constant 12 : index
    %c9_127 = arith.constant 9 : index
    %128 = vector.load %arg2[%c0_124, %c0_125, %c12_126, %c9_127] : memref<1x1x64x16xbf16, #tpu.memory_space<vmem>>, vector<1x1x12x7xbf16>
    %129 = vector.shape_cast %128 : vector<1x1x12x7xbf16> to vector<12x7xbf16>
    %cst_128 = arith.constant dense<0.000000e+00> : vector<8x7xf32>
    %130 = tpu.matmul %7, %129, %cst_128 {dimension_numbers = #tpu.dot_dimension_numbers<[1], [0], [0], [1], [0, 0, 1, 1], [], []>} : vector<8x12xbf16>, vector<12x7xbf16>, vector<8x7xf32> -> vector<8x7xf32>
    %131 = arith.addf %127, %130 : vector<8x7xf32>
    %132 = vector.broadcast %0 : vector<8x1xf32> to vector<8x7xf32>
    %133 = arith.mulf %131, %132 : vector<8x7xf32>
    %134 = vector.broadcast %1 : vector<8x1xf32> to vector<8x7xf32>
    %135 = arith.addf %133, %134 : vector<8x7xf32>
    %136 = arith.maximumf %120, %135 : vector<8x7xf32>
    %c0_129 = arith.constant 0 : index
    %c0_130 = arith.constant 0 : index
    %c1_131 = arith.constant 1 : index
    %c0_132 = arith.constant 0 : index
    %137 = vector.load %arg6[%c0_129, %c0_130, %c1_131, %c0_132] : memref<1x8x7x7xf32, #tpu.memory_space<vmem>>, vector<1x8x1x7xf32>
    %138 = vector.shape_cast %137 : vector<1x8x1x7xf32> to vector<8x7xf32>
    %139 = vector.shape_cast %136 : vector<8x7xf32> to vector<1x8x1x7xf32>
    tpu.vector_store %arg6[%c0_129, %c0_130, %c1_131, %c0_132], %139 {strides = array<i32>} : memref<1x8x7x7xf32, #tpu.memory_space<vmem>>, vector<1x8x1x7xf32>,
    %c0_133 = arith.constant 0 : index
    %c0_134 = arith.constant 0 : index
    %c16 = arith.constant 16 : index
    %c0_135 = arith.constant 0 : index
    %140 = vector.load %arg2[%c0_133, %c0_134, %c16, %c0_135] : memref<1x1x64x16xbf16, #tpu.memory_space<vmem>>, vector<1x1x12x7xbf16>
    %141 = vector.shape_cast %140 : vector<1x1x12x7xbf16> to vector<12x7xbf16>
    %cst_136 = arith.constant dense<0.000000e+00> : vector<8x7xf32>
    %142 = tpu.matmul %3, %141, %cst_136 {dimension_numbers = #tpu.dot_dimension_numbers<[1], [0], [0], [1], [0, 0, 1, 1], [], []>} : vector<8x12xbf16>, vector<12x7xbf16>, vector<8x7xf32> -> vector<8x7xf32>
    %c0_137 = arith.constant 0 : index
    %c0_138 = arith.constant 0 : index
    %c16_139 = arith.constant 16 : index
    %c8_140 = arith.constant 8 : index
    %143 = vector.load %arg2[%c0_137, %c0_138, %c16_139, %c8_140] : memref<1x1x64x16xbf16, #tpu.memory_space<vmem>>, vector<1x1x12x7xbf16>
    %144 = vector.shape_cast %143 : vector<1x1x12x7xbf16> to vector<12x7xbf16>
    %cst_141 = arith.constant dense<0.000000e+00> : vector<8x7xf32>
    %145 = tpu.matmul %5, %144, %cst_141 {dimension_numbers = #tpu.dot_dimension_numbers<[1], [0], [0], [1], [0, 0, 1, 1], [], []>} : vector<8x12xbf16>, vector<12x7xbf16>, vector<8x7xf32> -> vector<8x7xf32>
    %146 = arith.addf %142, %145 : vector<8x7xf32>
    %c0_142 = arith.constant 0 : index
    %c0_143 = arith.constant 0 : index
    %c16_144 = arith.constant 16 : index
    %c1_145 = arith.constant 1 : index
    %147 = vector.load %arg2[%c0_142, %c0_143, %c16_144, %c1_145] : memref<1x1x64x16xbf16, #tpu.memory_space<vmem>>, vector<1x1x12x7xbf16>
    %148 = vector.shape_cast %147 : vector<1x1x12x7xbf16> to vector<12x7xbf16>
    %cst_146 = arith.constant dense<0.000000e+00> : vector<8x7xf32>
    %149 = tpu.matmul %7, %148, %cst_146 {dimension_numbers = #tpu.dot_dimension_numbers<[1], [0], [0], [1], [0, 0, 1, 1], [], []>} : vector<8x12xbf16>, vector<12x7xbf16>, vector<8x7xf32> -> vector<8x7xf32>
    %150 = arith.addf %146, %149 : vector<8x7xf32>
    %151 = vector.broadcast %0 : vector<8x1xf32> to vector<8x7xf32>
    %152 = arith.mulf %150, %151 : vector<8x7xf32>
    %153 = vector.broadcast %1 : vector<8x1xf32> to vector<8x7xf32>
    %154 = arith.addf %152, %153 : vector<8x7xf32>
    %c0_147 = arith.constant 0 : index
    %c0_148 = arith.constant 0 : index
    %c16_149 = arith.constant 16 : index
    %c8_150 = arith.constant 8 : index
    %155 = vector.load %arg2[%c0_147, %c0_148, %c16_149, %c8_150] : memref<1x1x64x16xbf16, #tpu.memory_space<vmem>>, vector<1x1x12x7xbf16>
    %156 = vector.shape_cast %155 : vector<1x1x12x7xbf16> to vector<12x7xbf16>
    %cst_151 = arith.constant dense<0.000000e+00> : vector<8x7xf32>
    %157 = tpu.matmul %3, %156, %cst_151 {dimension_numbers = #tpu.dot_dimension_numbers<[1], [0], [0], [1], [0, 0, 1, 1], [], []>} : vector<8x12xbf16>, vector<12x7xbf16>, vector<8x7xf32> -> vector<8x7xf32>
    %c0_152 = arith.constant 0 : index
    %c0_153 = arith.constant 0 : index
    %c16_154 = arith.constant 16 : index
    %c1_155 = arith.constant 1 : index
    %158 = vector.load %arg2[%c0_152, %c0_153, %c16_154, %c1_155] : memref<1x1x64x16xbf16, #tpu.memory_space<vmem>>, vector<1x1x12x7xbf16>
    %159 = vector.shape_cast %158 : vector<1x1x12x7xbf16> to vector<12x7xbf16>
    %cst_156 = arith.constant dense<0.000000e+00> : vector<8x7xf32>
    %160 = tpu.matmul %5, %159, %cst_156 {dimension_numbers = #tpu.dot_dimension_numbers<[1], [0], [0], [1], [0, 0, 1, 1], [], []>} : vector<8x12xbf16>, vector<12x7xbf16>, vector<8x7xf32> -> vector<8x7xf32>
    %161 = arith.addf %157, %160 : vector<8x7xf32>
    %c0_157 = arith.constant 0 : index
    %c0_158 = arith.constant 0 : index
    %c16_159 = arith.constant 16 : index
    %c9_160 = arith.constant 9 : index
    %162 = vector.load %arg2[%c0_157, %c0_158, %c16_159, %c9_160] : memref<1x1x64x16xbf16, #tpu.memory_space<vmem>>, vector<1x1x12x7xbf16>
    %163 = vector.shape_cast %162 : vector<1x1x12x7xbf16> to vector<12x7xbf16>
    %cst_161 = arith.constant dense<0.000000e+00> : vector<8x7xf32>
    %164 = tpu.matmul %7, %163, %cst_161 {dimension_numbers = #tpu.dot_dimension_numbers<[1], [0], [0], [1], [0, 0, 1, 1], [], []>} : vector<8x12xbf16>, vector<12x7xbf16>, vector<8x7xf32> -> vector<8x7xf32>
    %165 = arith.addf %161, %164 : vector<8x7xf32>
    %166 = vector.broadcast %0 : vector<8x1xf32> to vector<8x7xf32>
    %167 = arith.mulf %165, %166 : vector<8x7xf32>
    %168 = vector.broadcast %1 : vector<8x1xf32> to vector<8x7xf32>
    %169 = arith.addf %167, %168 : vector<8x7xf32>
    %170 = arith.maximumf %154, %169 : vector<8x7xf32>
    %c0_162 = arith.constant 0 : index
    %c0_163 = arith.constant 0 : index
    %c20 = arith.constant 20 : index
    %c0_164 = arith.constant 0 : index
    %171 = vector.load %arg2[%c0_162, %c0_163, %c20, %c0_164] : memref<1x1x64x16xbf16, #tpu.memory_space<vmem>>, vector<1x1x12x7xbf16>
    %172 = vector.shape_cast %171 : vector<1x1x12x7xbf16> to vector<12x7xbf16>
    %cst_165 = arith.constant dense<0.000000e+00> : vector<8x7xf32>
    %173 = tpu.matmul %3, %172, %cst_165 {dimension_numbers = #tpu.dot_dimension_numbers<[1], [0], [0], [1], [0, 0, 1, 1], [], []>} : vector<8x12xbf16>, vector<12x7xbf16>, vector<8x7xf32> -> vector<8x7xf32>
    %c0_166 = arith.constant 0 : index
    %c0_167 = arith.constant 0 : index
    %c20_168 = arith.constant 20 : index
    %c8_169 = arith.constant 8 : index
    %174 = vector.load %arg2[%c0_166, %c0_167, %c20_168, %c8_169] : memref<1x1x64x16xbf16, #tpu.memory_space<vmem>>, vector<1x1x12x7xbf16>
    %175 = vector.shape_cast %174 : vector<1x1x12x7xbf16> to vector<12x7xbf16>
    %cst_170 = arith.constant dense<0.000000e+00> : vector<8x7xf32>
    %176 = tpu.matmul %5, %175, %cst_170 {dimension_numbers = #tpu.dot_dimension_numbers<[1], [0], [0], [1], [0, 0, 1, 1], [], []>} : vector<8x12xbf16>, vector<12x7xbf16>, vector<8x7xf32> -> vector<8x7xf32>
    %177 = arith.addf %173, %176 : vector<8x7xf32>
    %c0_171 = arith.constant 0 : index
    %c0_172 = arith.constant 0 : index
    %c20_173 = arith.constant 20 : index
    %c1_174 = arith.constant 1 : index
    %178 = vector.load %arg2[%c0_171, %c0_172, %c20_173, %c1_174] : memref<1x1x64x16xbf16, #tpu.memory_space<vmem>>, vector<1x1x12x7xbf16>
    %179 = vector.shape_cast %178 : vector<1x1x12x7xbf16> to vector<12x7xbf16>
    %cst_175 = arith.constant dense<0.000000e+00> : vector<8x7xf32>
    %180 = tpu.matmul %7, %179, %cst_175 {dimension_numbers = #tpu.dot_dimension_numbers<[1], [0], [0], [1], [0, 0, 1, 1], [], []>} : vector<8x12xbf16>, vector<12x7xbf16>, vector<8x7xf32> -> vector<8x7xf32>
    %181 = arith.addf %177, %180 : vector<8x7xf32>
    %182 = vector.broadcast %0 : vector<8x1xf32> to vector<8x7xf32>
    %183 = arith.mulf %181, %182 : vector<8x7xf32>
    %184 = vector.broadcast %1 : vector<8x1xf32> to vector<8x7xf32>
    %185 = arith.addf %183, %184 : vector<8x7xf32>
    %186 = arith.maximumf %170, %185 : vector<8x7xf32>
    %c0_176 = arith.constant 0 : index
    %c0_177 = arith.constant 0 : index
    %c20_178 = arith.constant 20 : index
    %c8_179 = arith.constant 8 : index
    %187 = vector.load %arg2[%c0_176, %c0_177, %c20_178, %c8_179] : memref<1x1x64x16xbf16, #tpu.memory_space<vmem>>, vector<1x1x12x7xbf16>
    %188 = vector.shape_cast %187 : vector<1x1x12x7xbf16> to vector<12x7xbf16>
    %cst_180 = arith.constant dense<0.000000e+00> : vector<8x7xf32>
    %189 = tpu.matmul %3, %188, %cst_180 {dimension_numbers = #tpu.dot_dimension_numbers<[1], [0], [0], [1], [0, 0, 1, 1], [], []>} : vector<8x12xbf16>, vector<12x7xbf16>, vector<8x7xf32> -> vector<8x7xf32>
    %c0_181 = arith.constant 0 : index
    %c0_182 = arith.constant 0 : index
    %c20_183 = arith.constant 20 : index
    %c1_184 = arith.constant 1 : index
    %190 = vector.load %arg2[%c0_181, %c0_182, %c20_183, %c1_184] : memref<1x1x64x16xbf16, #tpu.memory_space<vmem>>, vector<1x1x12x7xbf16>
    %191 = vector.shape_cast %190 : vector<1x1x12x7xbf16> to vector<12x7xbf16>
    %cst_185 = arith.constant dense<0.000000e+00> : vector<8x7xf32>
    %192 = tpu.matmul %5, %191, %cst_185 {dimension_numbers = #tpu.dot_dimension_numbers<[1], [0], [0], [1], [0, 0, 1, 1], [], []>} : vector<8x12xbf16>, vector<12x7xbf16>, vector<8x7xf32> -> vector<8x7xf32>
    %193 = arith.addf %189, %192 : vector<8x7xf32>
    %c0_186 = arith.constant 0 : index
    %c0_187 = arith.constant 0 : index
    %c20_188 = arith.constant 20 : index
    %c9_189 = arith.constant 9 : index
    %194 = vector.load %arg2[%c0_186, %c0_187, %c20_188, %c9_189] : memref<1x1x64x16xbf16, #tpu.memory_space<vmem>>, vector<1x1x12x7xbf16>
    %195 = vector.shape_cast %194 : vector<1x1x12x7xbf16> to vector<12x7xbf16>
    %cst_190 = arith.constant dense<0.000000e+00> : vector<8x7xf32>
    %196 = tpu.matmul %7, %195, %cst_190 {dimension_numbers = #tpu.dot_dimension_numbers<[1], [0], [0], [1], [0, 0, 1, 1], [], []>} : vector<8x12xbf16>, vector<12x7xbf16>, vector<8x7xf32> -> vector<8x7xf32>
    %197 = arith.addf %193, %196 : vector<8x7xf32>
    %198 = vector.broadcast %0 : vector<8x1xf32> to vector<8x7xf32>
    %199 = arith.mulf %197, %198 : vector<8x7xf32>
    %200 = vector.broadcast %1 : vector<8x1xf32> to vector<8x7xf32>
    %201 = arith.addf %199, %200 : vector<8x7xf32>
    %202 = arith.maximumf %186, %201 : vector<8x7xf32>
    %c0_191 = arith.constant 0 : index
    %c0_192 = arith.constant 0 : index
    %c2_193 = arith.constant 2 : index
    %c0_194 = arith.constant 0 : index
    %203 = vector.load %arg6[%c0_191, %c0_192, %c2_193, %c0_194] : memref<1x8x7x7xf32, #tpu.memory_space<vmem>>, vector<1x8x1x7xf32>
    %204 = vector.shape_cast %203 : vector<1x8x1x7xf32> to vector<8x7xf32>
    %205 = vector.shape_cast %202 : vector<8x7xf32> to vector<1x8x1x7xf32>
    tpu.vector_store %arg6[%c0_191, %c0_192, %c2_193, %c0_194], %205 {strides = array<i32>} : memref<1x8x7x7xf32, #tpu.memory_space<vmem>>, vector<1x8x1x7xf32>,
    %c0_195 = arith.constant 0 : index
    %c0_196 = arith.constant 0 : index
    %c24 = arith.constant 24 : index
    %c0_197 = arith.constant 0 : index
    %206 = vector.load %arg2[%c0_195, %c0_196, %c24, %c0_197] : memref<1x1x64x16xbf16, #tpu.memory_space<vmem>>, vector<1x1x12x7xbf16>
    %207 = vector.shape_cast %206 : vector<1x1x12x7xbf16> to vector<12x7xbf16>
    %cst_198 = arith.constant dense<0.000000e+00> : vector<8x7xf32>
    %208 = tpu.matmul %3, %207, %cst_198 {dimension_numbers = #tpu.dot_dimension_numbers<[1], [0], [0], [1], [0, 0, 1, 1], [], []>} : vector<8x12xbf16>, vector<12x7xbf16>, vector<8x7xf32> -> vector<8x7xf32>
    %c0_199 = arith.constant 0 : index
    %c0_200 = arith.constant 0 : index
    %c24_201 = arith.constant 24 : index
    %c8_202 = arith.constant 8 : index
    %209 = vector.load %arg2[%c0_199, %c0_200, %c24_201, %c8_202] : memref<1x1x64x16xbf16, #tpu.memory_space<vmem>>, vector<1x1x12x7xbf16>
    %210 = vector.shape_cast %209 : vector<1x1x12x7xbf16> to vector<12x7xbf16>
    %cst_203 = arith.constant dense<0.000000e+00> : vector<8x7xf32>
    %211 = tpu.matmul %5, %210, %cst_203 {dimension_numbers = #tpu.dot_dimension_numbers<[1], [0], [0], [1], [0, 0, 1, 1], [], []>} : vector<8x12xbf16>, vector<12x7xbf16>, vector<8x7xf32> -> vector<8x7xf32>
    %212 = arith.addf %208, %211 : vector<8x7xf32>
    %c0_204 = arith.constant 0 : index
    %c0_205 = arith.constant 0 : index
    %c24_206 = arith.constant 24 : index
    %c1_207 = arith.constant 1 : index
    %213 = vector.load %arg2[%c0_204, %c0_205, %c24_206, %c1_207] : memref<1x1x64x16xbf16, #tpu.memory_space<vmem>>, vector<1x1x12x7xbf16>
    %214 = vector.shape_cast %213 : vector<1x1x12x7xbf16> to vector<12x7xbf16>
    %cst_208 = arith.constant dense<0.000000e+00> : vector<8x7xf32>
    %215 = tpu.matmul %7, %214, %cst_208 {dimension_numbers = #tpu.dot_dimension_numbers<[1], [0], [0], [1], [0, 0, 1, 1], [], []>} : vector<8x12xbf16>, vector<12x7xbf16>, vector<8x7xf32> -> vector<8x7xf32>
    %216 = arith.addf %212, %215 : vector<8x7xf32>
    %217 = vector.broadcast %0 : vector<8x1xf32> to vector<8x7xf32>
    %218 = arith.mulf %216, %217 : vector<8x7xf32>
    %219 = vector.broadcast %1 : vector<8x1xf32> to vector<8x7xf32>
    %220 = arith.addf %218, %219 : vector<8x7xf32>
    %c0_209 = arith.constant 0 : index
    %c0_210 = arith.constant 0 : index
    %c24_211 = arith.constant 24 : index
    %c8_212 = arith.constant 8 : index
    %221 = vector.load %arg2[%c0_209, %c0_210, %c24_211, %c8_212] : memref<1x1x64x16xbf16, #tpu.memory_space<vmem>>, vector<1x1x12x7xbf16>
    %222 = vector.shape_cast %221 : vector<1x1x12x7xbf16> to vector<12x7xbf16>
    %cst_213 = arith.constant dense<0.000000e+00> : vector<8x7xf32>
    %223 = tpu.matmul %3, %222, %cst_213 {dimension_numbers = #tpu.dot_dimension_numbers<[1], [0], [0], [1], [0, 0, 1, 1], [], []>} : vector<8x12xbf16>, vector<12x7xbf16>, vector<8x7xf32> -> vector<8x7xf32>
    %c0_214 = arith.constant 0 : index
    %c0_215 = arith.constant 0 : index
    %c24_216 = arith.constant 24 : index
    %c1_217 = arith.constant 1 : index
    %224 = vector.load %arg2[%c0_214, %c0_215, %c24_216, %c1_217] : memref<1x1x64x16xbf16, #tpu.memory_space<vmem>>, vector<1x1x12x7xbf16>
    %225 = vector.shape_cast %224 : vector<1x1x12x7xbf16> to vector<12x7xbf16>
    %cst_218 = arith.constant dense<0.000000e+00> : vector<8x7xf32>
    %226 = tpu.matmul %5, %225, %cst_218 {dimension_numbers = #tpu.dot_dimension_numbers<[1], [0], [0], [1], [0, 0, 1, 1], [], []>} : vector<8x12xbf16>, vector<12x7xbf16>, vector<8x7xf32> -> vector<8x7xf32>
    %227 = arith.addf %223, %226 : vector<8x7xf32>
    %c0_219 = arith.constant 0 : index
    %c0_220 = arith.constant 0 : index
    %c24_221 = arith.constant 24 : index
    %c9_222 = arith.constant 9 : index
    %228 = vector.load %arg2[%c0_219, %c0_220, %c24_221, %c9_222] : memref<1x1x64x16xbf16, #tpu.memory_space<vmem>>, vector<1x1x12x7xbf16>
    %229 = vector.shape_cast %228 : vector<1x1x12x7xbf16> to vector<12x7xbf16>
    %cst_223 = arith.constant dense<0.000000e+00> : vector<8x7xf32>
    %230 = tpu.matmul %7, %229, %cst_223 {dimension_numbers = #tpu.dot_dimension_numbers<[1], [0], [0], [1], [0, 0, 1, 1], [], []>} : vector<8x12xbf16>, vector<12x7xbf16>, vector<8x7xf32> -> vector<8x7xf32>
    %231 = arith.addf %227, %230 : vector<8x7xf32>
    %232 = vector.broadcast %0 : vector<8x1xf32> to vector<8x7xf32>
    %233 = arith.mulf %231, %232 : vector<8x7xf32>
    %234 = vector.broadcast %1 : vector<8x1xf32> to vector<8x7xf32>
    %235 = arith.addf %233, %234 : vector<8x7xf32>
    %236 = arith.maximumf %220, %235 : vector<8x7xf32>
    %c0_224 = arith.constant 0 : index
    %c0_225 = arith.constant 0 : index
    %c28 = arith.constant 28 : index
    %c0_226 = arith.constant 0 : index
    %237 = vector.load %arg2[%c0_224, %c0_225, %c28, %c0_226] : memref<1x1x64x16xbf16, #tpu.memory_space<vmem>>, vector<1x1x12x7xbf16>
    %238 = vector.shape_cast %237 : vector<1x1x12x7xbf16> to vector<12x7xbf16>
    %cst_227 = arith.constant dense<0.000000e+00> : vector<8x7xf32>
    %239 = tpu.matmul %3, %238, %cst_227 {dimension_numbers = #tpu.dot_dimension_numbers<[1], [0], [0], [1], [0, 0, 1, 1], [], []>} : vector<8x12xbf16>, vector<12x7xbf16>, vector<8x7xf32> -> vector<8x7xf32>
    %c0_228 = arith.constant 0 : index
    %c0_229 = arith.constant 0 : index
    %c28_230 = arith.constant 28 : index
    %c8_231 = arith.constant 8 : index
    %240 = vector.load %arg2[%c0_228, %c0_229, %c28_230, %c8_231] : memref<1x1x64x16xbf16, #tpu.memory_space<vmem>>, vector<1x1x12x7xbf16>
    %241 = vector.shape_cast %240 : vector<1x1x12x7xbf16> to vector<12x7xbf16>
    %cst_232 = arith.constant dense<0.000000e+00> : vector<8x7xf32>
    %242 = tpu.matmul %5, %241, %cst_232 {dimension_numbers = #tpu.dot_dimension_numbers<[1], [0], [0], [1], [0, 0, 1, 1], [], []>} : vector<8x12xbf16>, vector<12x7xbf16>, vector<8x7xf32> -> vector<8x7xf32>
    %243 = arith.addf %239, %242 : vector<8x7xf32>
    %c0_233 = arith.constant 0 : index
    %c0_234 = arith.constant 0 : index
    %c28_235 = arith.constant 28 : index
    %c1_236 = arith.constant 1 : index
    %244 = vector.load %arg2[%c0_233, %c0_234, %c28_235, %c1_236] : memref<1x1x64x16xbf16, #tpu.memory_space<vmem>>, vector<1x1x12x7xbf16>
    %245 = vector.shape_cast %244 : vector<1x1x12x7xbf16> to vector<12x7xbf16>
    %cst_237 = arith.constant dense<0.000000e+00> : vector<8x7xf32>
    %246 = tpu.matmul %7, %245, %cst_237 {dimension_numbers = #tpu.dot_dimension_numbers<[1], [0], [0], [1], [0, 0, 1, 1], [], []>} : vector<8x12xbf16>, vector<12x7xbf16>, vector<8x7xf32> -> vector<8x7xf32>
    %247 = arith.addf %243, %246 : vector<8x7xf32>
    %248 = vector.broadcast %0 : vector<8x1xf32> to vector<8x7xf32>
    %249 = arith.mulf %247, %248 : vector<8x7xf32>
    %250 = vector.broadcast %1 : vector<8x1xf32> to vector<8x7xf32>
    %251 = arith.addf %249, %250 : vector<8x7xf32>
    %252 = arith.maximumf %236, %251 : vector<8x7xf32>
    %c0_238 = arith.constant 0 : index
    %c0_239 = arith.constant 0 : index
    %c28_240 = arith.constant 28 : index
    %c8_241 = arith.constant 8 : index
    %253 = vector.load %arg2[%c0_238, %c0_239, %c28_240, %c8_241] : memref<1x1x64x16xbf16, #tpu.memory_space<vmem>>, vector<1x1x12x7xbf16>
    %254 = vector.shape_cast %253 : vector<1x1x12x7xbf16> to vector<12x7xbf16>
    %cst_242 = arith.constant dense<0.000000e+00> : vector<8x7xf32>
    %255 = tpu.matmul %3, %254, %cst_242 {dimension_numbers = #tpu.dot_dimension_numbers<[1], [0], [0], [1], [0, 0, 1, 1], [], []>} : vector<8x12xbf16>, vector<12x7xbf16>, vector<8x7xf32> -> vector<8x7xf32>
    %c0_243 = arith.constant 0 : index
    %c0_244 = arith.constant 0 : index
    %c28_245 = arith.constant 28 : index
    %c1_246 = arith.constant 1 : index
    %256 = vector.load %arg2[%c0_243, %c0_244, %c28_245, %c1_246] : memref<1x1x64x16xbf16, #tpu.memory_space<vmem>>, vector<1x1x12x7xbf16>
    %257 = vector.shape_cast %256 : vector<1x1x12x7xbf16> to vector<12x7xbf16>
    %cst_247 = arith.constant dense<0.000000e+00> : vector<8x7xf32>
    %258 = tpu.matmul %5, %257, %cst_247 {dimension_numbers = #tpu.dot_dimension_numbers<[1], [0], [0], [1], [0, 0, 1, 1], [], []>} : vector<8x12xbf16>, vector<12x7xbf16>, vector<8x7xf32> -> vector<8x7xf32>
    %259 = arith.addf %255, %258 : vector<8x7xf32>
    %c0_248 = arith.constant 0 : index
    %c0_249 = arith.constant 0 : index
    %c28_250 = arith.constant 28 : index
    %c9_251 = arith.constant 9 : index
    %260 = vector.load %arg2[%c0_248, %c0_249, %c28_250, %c9_251] : memref<1x1x64x16xbf16, #tpu.memory_space<vmem>>, vector<1x1x12x7xbf16>
    %261 = vector.shape_cast %260 : vector<1x1x12x7xbf16> to vector<12x7xbf16>
    %cst_252 = arith.constant dense<0.000000e+00> : vector<8x7xf32>
    %262 = tpu.matmul %7, %261, %cst_252 {dimension_numbers = #tpu.dot_dimension_numbers<[1], [0], [0], [1], [0, 0, 1, 1], [], []>} : vector<8x12xbf16>, vector<12x7xbf16>, vector<8x7xf32> -> vector<8x7xf32>
    %263 = arith.addf %259, %262 : vector<8x7xf32>
    %264 = vector.broadcast %0 : vector<8x1xf32> to vector<8x7xf32>
    %265 = arith.mulf %263, %264 : vector<8x7xf32>
    %266 = vector.broadcast %1 : vector<8x1xf32> to vector<8x7xf32>
    %267 = arith.addf %265, %266 : vector<8x7xf32>
    %268 = arith.maximumf %252, %267 : vector<8x7xf32>
    %c0_253 = arith.constant 0 : index
    %c0_254 = arith.constant 0 : index
    %c3 = arith.constant 3 : index
    %c0_255 = arith.constant 0 : index
    %269 = vector.load %arg6[%c0_253, %c0_254, %c3, %c0_255] : memref<1x8x7x7xf32, #tpu.memory_space<vmem>>, vector<1x8x1x7xf32>
    %270 = vector.shape_cast %269 : vector<1x8x1x7xf32> to vector<8x7xf32>
    %271 = vector.shape_cast %268 : vector<8x7xf32> to vector<1x8x1x7xf32>
    tpu.vector_store %arg6[%c0_253, %c0_254, %c3, %c0_255], %271 {strides = array<i32>} : memref<1x8x7x7xf32, #tpu.memory_space<vmem>>, vector<1x8x1x7xf32>,
    %c0_256 = arith.constant 0 : index
    %c0_257 = arith.constant 0 : index
    %c32 = arith.constant 32 : index
    %c0_258 = arith.constant 0 : index
    %272 = vector.load %arg2[%c0_256, %c0_257, %c32, %c0_258] : memref<1x1x64x16xbf16, #tpu.memory_space<vmem>>, vector<1x1x12x7xbf16>
    %273 = vector.shape_cast %272 : vector<1x1x12x7xbf16> to vector<12x7xbf16>
    %cst_259 = arith.constant dense<0.000000e+00> : vector<8x7xf32>
    %274 = tpu.matmul %3, %273, %cst_259 {dimension_numbers = #tpu.dot_dimension_numbers<[1], [0], [0], [1], [0, 0, 1, 1], [], []>} : vector<8x12xbf16>, vector<12x7xbf16>, vector<8x7xf32> -> vector<8x7xf32>
    %c0_260 = arith.constant 0 : index
    %c0_261 = arith.constant 0 : index
    %c32_262 = arith.constant 32 : index
    %c8_263 = arith.constant 8 : index
    %275 = vector.load %arg2[%c0_260, %c0_261, %c32_262, %c8_263] : memref<1x1x64x16xbf16, #tpu.memory_space<vmem>>, vector<1x1x12x7xbf16>
    %276 = vector.shape_cast %275 : vector<1x1x12x7xbf16> to vector<12x7xbf16>
    %cst_264 = arith.constant dense<0.000000e+00> : vector<8x7xf32>
    %277 = tpu.matmul %5, %276, %cst_264 {dimension_numbers = #tpu.dot_dimension_numbers<[1], [0], [0], [1], [0, 0, 1, 1], [], []>} : vector<8x12xbf16>, vector<12x7xbf16>, vector<8x7xf32> -> vector<8x7xf32>
    %278 = arith.addf %274, %277 : vector<8x7xf32>
    %c0_265 = arith.constant 0 : index
    %c0_266 = arith.constant 0 : index
    %c32_267 = arith.constant 32 : index
    %c1_268 = arith.constant 1 : index
    %279 = vector.load %arg2[%c0_265, %c0_266, %c32_267, %c1_268] : memref<1x1x64x16xbf16, #tpu.memory_space<vmem>>, vector<1x1x12x7xbf16>
    %280 = vector.shape_cast %279 : vector<1x1x12x7xbf16> to vector<12x7xbf16>
    %cst_269 = arith.constant dense<0.000000e+00> : vector<8x7xf32>
    %281 = tpu.matmul %7, %280, %cst_269 {dimension_numbers = #tpu.dot_dimension_numbers<[1], [0], [0], [1], [0, 0, 1, 1], [], []>} : vector<8x12xbf16>, vector<12x7xbf16>, vector<8x7xf32> -> vector<8x7xf32>
    %282 = arith.addf %278, %281 : vector<8x7xf32>
    %283 = vector.broadcast %0 : vector<8x1xf32> to vector<8x7xf32>
    %284 = arith.mulf %282, %283 : vector<8x7xf32>
    %285 = vector.broadcast %1 : vector<8x1xf32> to vector<8x7xf32>
    %286 = arith.addf %284, %285 : vector<8x7xf32>
    %c0_270 = arith.constant 0 : index
    %c0_271 = arith.constant 0 : index
    %c32_272 = arith.constant 32 : index
    %c8_273 = arith.constant 8 : index
    %287 = vector.load %arg2[%c0_270, %c0_271, %c32_272, %c8_273] : memref<1x1x64x16xbf16, #tpu.memory_space<vmem>>, vector<1x1x12x7xbf16>
    %288 = vector.shape_cast %287 : vector<1x1x12x7xbf16> to vector<12x7xbf16>
    %cst_274 = arith.constant dense<0.000000e+00> : vector<8x7xf32>
    %289 = tpu.matmul %3, %288, %cst_274 {dimension_numbers = #tpu.dot_dimension_numbers<[1], [0], [0], [1], [0, 0, 1, 1], [], []>} : vector<8x12xbf16>, vector<12x7xbf16>, vector<8x7xf32> -> vector<8x7xf32>
    %c0_275 = arith.constant 0 : index
    %c0_276 = arith.constant 0 : index
    %c32_277 = arith.constant 32 : index
    %c1_278 = arith.constant 1 : index
    %290 = vector.load %arg2[%c0_275, %c0_276, %c32_277, %c1_278] : memref<1x1x64x16xbf16, #tpu.memory_space<vmem>>, vector<1x1x12x7xbf16>
    %291 = vector.shape_cast %290 : vector<1x1x12x7xbf16> to vector<12x7xbf16>
    %cst_279 = arith.constant dense<0.000000e+00> : vector<8x7xf32>
    %292 = tpu.matmul %5, %291, %cst_279 {dimension_numbers = #tpu.dot_dimension_numbers<[1], [0], [0], [1], [0, 0, 1, 1], [], []>} : vector<8x12xbf16>, vector<12x7xbf16>, vector<8x7xf32> -> vector<8x7xf32>
    %293 = arith.addf %289, %292 : vector<8x7xf32>
    %c0_280 = arith.constant 0 : index
    %c0_281 = arith.constant 0 : index
    %c32_282 = arith.constant 32 : index
    %c9_283 = arith.constant 9 : index
    %294 = vector.load %arg2[%c0_280, %c0_281, %c32_282, %c9_283] : memref<1x1x64x16xbf16, #tpu.memory_space<vmem>>, vector<1x1x12x7xbf16>
    %295 = vector.shape_cast %294 : vector<1x1x12x7xbf16> to vector<12x7xbf16>
    %cst_284 = arith.constant dense<0.000000e+00> : vector<8x7xf32>
    %296 = tpu.matmul %7, %295, %cst_284 {dimension_numbers = #tpu.dot_dimension_numbers<[1], [0], [0], [1], [0, 0, 1, 1], [], []>} : vector<8x12xbf16>, vector<12x7xbf16>, vector<8x7xf32> -> vector<8x7xf32>
    %297 = arith.addf %293, %296 : vector<8x7xf32>
    %298 = vector.broadcast %0 : vector<8x1xf32> to vector<8x7xf32>
    %299 = arith.mulf %297, %298 : vector<8x7xf32>
    %300 = vector.broadcast %1 : vector<8x1xf32> to vector<8x7xf32>
    %301 = arith.addf %299, %300 : vector<8x7xf32>
    %302 = arith.maximumf %286, %301 : vector<8x7xf32>
    %c0_285 = arith.constant 0 : index
    %c0_286 = arith.constant 0 : index
    %c36 = arith.constant 36 : index
    %c0_287 = arith.constant 0 : index
    %303 = vector.load %arg2[%c0_285, %c0_286, %c36, %c0_287] : memref<1x1x64x16xbf16, #tpu.memory_space<vmem>>, vector<1x1x12x7xbf16>
    %304 = vector.shape_cast %303 : vector<1x1x12x7xbf16> to vector<12x7xbf16>
    %cst_288 = arith.constant dense<0.000000e+00> : vector<8x7xf32>
    %305 = tpu.matmul %3, %304, %cst_288 {dimension_numbers = #tpu.dot_dimension_numbers<[1], [0], [0], [1], [0, 0, 1, 1], [], []>} : vector<8x12xbf16>, vector<12x7xbf16>, vector<8x7xf32> -> vector<8x7xf32>
    %c0_289 = arith.constant 0 : index
    %c0_290 = arith.constant 0 : index
    %c36_291 = arith.constant 36 : index
    %c8_292 = arith.constant 8 : index
    %306 = vector.load %arg2[%c0_289, %c0_290, %c36_291, %c8_292] : memref<1x1x64x16xbf16, #tpu.memory_space<vmem>>, vector<1x1x12x7xbf16>
    %307 = vector.shape_cast %306 : vector<1x1x12x7xbf16> to vector<12x7xbf16>
    %cst_293 = arith.constant dense<0.000000e+00> : vector<8x7xf32>
    %308 = tpu.matmul %5, %307, %cst_293 {dimension_numbers = #tpu.dot_dimension_numbers<[1], [0], [0], [1], [0, 0, 1, 1], [], []>} : vector<8x12xbf16>, vector<12x7xbf16>, vector<8x7xf32> -> vector<8x7xf32>
    %309 = arith.addf %305, %308 : vector<8x7xf32>
    %c0_294 = arith.constant 0 : index
    %c0_295 = arith.constant 0 : index
    %c36_296 = arith.constant 36 : index
    %c1_297 = arith.constant 1 : index
    %310 = vector.load %arg2[%c0_294, %c0_295, %c36_296, %c1_297] : memref<1x1x64x16xbf16, #tpu.memory_space<vmem>>, vector<1x1x12x7xbf16>
    %311 = vector.shape_cast %310 : vector<1x1x12x7xbf16> to vector<12x7xbf16>
    %cst_298 = arith.constant dense<0.000000e+00> : vector<8x7xf32>
    %312 = tpu.matmul %7, %311, %cst_298 {dimension_numbers = #tpu.dot_dimension_numbers<[1], [0], [0], [1], [0, 0, 1, 1], [], []>} : vector<8x12xbf16>, vector<12x7xbf16>, vector<8x7xf32> -> vector<8x7xf32>
    %313 = arith.addf %309, %312 : vector<8x7xf32>
    %314 = vector.broadcast %0 : vector<8x1xf32> to vector<8x7xf32>
    %315 = arith.mulf %313, %314 : vector<8x7xf32>
    %316 = vector.broadcast %1 : vector<8x1xf32> to vector<8x7xf32>
    %317 = arith.addf %315, %316 : vector<8x7xf32>
    %318 = arith.maximumf %302, %317 : vector<8x7xf32>
    %c0_299 = arith.constant 0 : index
    %c0_300 = arith.constant 0 : index
    %c36_301 = arith.constant 36 : index
    %c8_302 = arith.constant 8 : index
    %319 = vector.load %arg2[%c0_299, %c0_300, %c36_301, %c8_302] : memref<1x1x64x16xbf16, #tpu.memory_space<vmem>>, vector<1x1x12x7xbf16>
    %320 = vector.shape_cast %319 : vector<1x1x12x7xbf16> to vector<12x7xbf16>
    %cst_303 = arith.constant dense<0.000000e+00> : vector<8x7xf32>
    %321 = tpu.matmul %3, %320, %cst_303 {dimension_numbers = #tpu.dot_dimension_numbers<[1], [0], [0], [1], [0, 0, 1, 1], [], []>} : vector<8x12xbf16>, vector<12x7xbf16>, vector<8x7xf32> -> vector<8x7xf32>
    %c0_304 = arith.constant 0 : index
    %c0_305 = arith.constant 0 : index
    %c36_306 = arith.constant 36 : index
    %c1_307 = arith.constant 1 : index
    %322 = vector.load %arg2[%c0_304, %c0_305, %c36_306, %c1_307] : memref<1x1x64x16xbf16, #tpu.memory_space<vmem>>, vector<1x1x12x7xbf16>
    %323 = vector.shape_cast %322 : vector<1x1x12x7xbf16> to vector<12x7xbf16>
    %cst_308 = arith.constant dense<0.000000e+00> : vector<8x7xf32>
    %324 = tpu.matmul %5, %323, %cst_308 {dimension_numbers = #tpu.dot_dimension_numbers<[1], [0], [0], [1], [0, 0, 1, 1], [], []>} : vector<8x12xbf16>, vector<12x7xbf16>, vector<8x7xf32> -> vector<8x7xf32>
    %325 = arith.addf %321, %324 : vector<8x7xf32>
    %c0_309 = arith.constant 0 : index
    %c0_310 = arith.constant 0 : index
    %c36_311 = arith.constant 36 : index
    %c9_312 = arith.constant 9 : index
    %326 = vector.load %arg2[%c0_309, %c0_310, %c36_311, %c9_312] : memref<1x1x64x16xbf16, #tpu.memory_space<vmem>>, vector<1x1x12x7xbf16>
    %327 = vector.shape_cast %326 : vector<1x1x12x7xbf16> to vector<12x7xbf16>
    %cst_313 = arith.constant dense<0.000000e+00> : vector<8x7xf32>
    %328 = tpu.matmul %7, %327, %cst_313 {dimension_numbers = #tpu.dot_dimension_numbers<[1], [0], [0], [1], [0, 0, 1, 1], [], []>} : vector<8x12xbf16>, vector<12x7xbf16>, vector<8x7xf32> -> vector<8x7xf32>
    %329 = arith.addf %325, %328 : vector<8x7xf32>
    %330 = vector.broadcast %0 : vector<8x1xf32> to vector<8x7xf32>
    %331 = arith.mulf %329, %330 : vector<8x7xf32>
    %332 = vector.broadcast %1 : vector<8x1xf32> to vector<8x7xf32>
    %333 = arith.addf %331, %332 : vector<8x7xf32>
    %334 = arith.maximumf %318, %333 : vector<8x7xf32>
    %c0_314 = arith.constant 0 : index
    %c0_315 = arith.constant 0 : index
    %c4_316 = arith.constant 4 : index
    %c0_317 = arith.constant 0 : index
    %335 = vector.load %arg6[%c0_314, %c0_315, %c4_316, %c0_317] : memref<1x8x7x7xf32, #tpu.memory_space<vmem>>, vector<1x8x1x7xf32>
    %336 = vector.shape_cast %335 : vector<1x8x1x7xf32> to vector<8x7xf32>
    %337 = vector.shape_cast %334 : vector<8x7xf32> to vector<1x8x1x7xf32>
    tpu.vector_store %arg6[%c0_314, %c0_315, %c4_316, %c0_317], %337 {strides = array<i32>} : memref<1x8x7x7xf32, #tpu.memory_space<vmem>>, vector<1x8x1x7xf32>,
    %c0_318 = arith.constant 0 : index
    %c0_319 = arith.constant 0 : index
    %c40 = arith.constant 40 : index
    %c0_320 = arith.constant 0 : index
    %338 = vector.load %arg2[%c0_318, %c0_319, %c40, %c0_320] : memref<1x1x64x16xbf16, #tpu.memory_space<vmem>>, vector<1x1x12x7xbf16>
    %339 = vector.shape_cast %338 : vector<1x1x12x7xbf16> to vector<12x7xbf16>
    %cst_321 = arith.constant dense<0.000000e+00> : vector<8x7xf32>
    %340 = tpu.matmul %3, %339, %cst_321 {dimension_numbers = #tpu.dot_dimension_numbers<[1], [0], [0], [1], [0, 0, 1, 1], [], []>} : vector<8x12xbf16>, vector<12x7xbf16>, vector<8x7xf32> -> vector<8x7xf32>
    %c0_322 = arith.constant 0 : index
    %c0_323 = arith.constant 0 : index
    %c40_324 = arith.constant 40 : index
    %c8_325 = arith.constant 8 : index
    %341 = vector.load %arg2[%c0_322, %c0_323, %c40_324, %c8_325] : memref<1x1x64x16xbf16, #tpu.memory_space<vmem>>, vector<1x1x12x7xbf16>
    %342 = vector.shape_cast %341 : vector<1x1x12x7xbf16> to vector<12x7xbf16>
    %cst_326 = arith.constant dense<0.000000e+00> : vector<8x7xf32>
    %343 = tpu.matmul %5, %342, %cst_326 {dimension_numbers = #tpu.dot_dimension_numbers<[1], [0], [0], [1], [0, 0, 1, 1], [], []>} : vector<8x12xbf16>, vector<12x7xbf16>, vector<8x7xf32> -> vector<8x7xf32>
    %344 = arith.addf %340, %343 : vector<8x7xf32>
    %c0_327 = arith.constant 0 : index
    %c0_328 = arith.constant 0 : index
    %c40_329 = arith.constant 40 : index
    %c1_330 = arith.constant 1 : index
    %345 = vector.load %arg2[%c0_327, %c0_328, %c40_329, %c1_330] : memref<1x1x64x16xbf16, #tpu.memory_space<vmem>>, vector<1x1x12x7xbf16>
    %346 = vector.shape_cast %345 : vector<1x1x12x7xbf16> to vector<12x7xbf16>
    %cst_331 = arith.constant dense<0.000000e+00> : vector<8x7xf32>
    %347 = tpu.matmul %7, %346, %cst_331 {dimension_numbers = #tpu.dot_dimension_numbers<[1], [0], [0], [1], [0, 0, 1, 1], [], []>} : vector<8x12xbf16>, vector<12x7xbf16>, vector<8x7xf32> -> vector<8x7xf32>
    %348 = arith.addf %344, %347 : vector<8x7xf32>
    %349 = vector.broadcast %0 : vector<8x1xf32> to vector<8x7xf32>
    %350 = arith.mulf %348, %349 : vector<8x7xf32>
    %351 = vector.broadcast %1 : vector<8x1xf32> to vector<8x7xf32>
    %352 = arith.addf %350, %351 : vector<8x7xf32>
    %c0_332 = arith.constant 0 : index
    %c0_333 = arith.constant 0 : index
    %c40_334 = arith.constant 40 : index
    %c8_335 = arith.constant 8 : index
    %353 = vector.load %arg2[%c0_332, %c0_333, %c40_334, %c8_335] : memref<1x1x64x16xbf16, #tpu.memory_space<vmem>>, vector<1x1x12x7xbf16>
    %354 = vector.shape_cast %353 : vector<1x1x12x7xbf16> to vector<12x7xbf16>
    %cst_336 = arith.constant dense<0.000000e+00> : vector<8x7xf32>
    %355 = tpu.matmul %3, %354, %cst_336 {dimension_numbers = #tpu.dot_dimension_numbers<[1], [0], [0], [1], [0, 0, 1, 1], [], []>} : vector<8x12xbf16>, vector<12x7xbf16>, vector<8x7xf32> -> vector<8x7xf32>
    %c0_337 = arith.constant 0 : index
    %c0_338 = arith.constant 0 : index
    %c40_339 = arith.constant 40 : index
    %c1_340 = arith.constant 1 : index
    %356 = vector.load %arg2[%c0_337, %c0_338, %c40_339, %c1_340] : memref<1x1x64x16xbf16, #tpu.memory_space<vmem>>, vector<1x1x12x7xbf16>
    %357 = vector.shape_cast %356 : vector<1x1x12x7xbf16> to vector<12x7xbf16>
    %cst_341 = arith.constant dense<0.000000e+00> : vector<8x7xf32>
    %358 = tpu.matmul %5, %357, %cst_341 {dimension_numbers = #tpu.dot_dimension_numbers<[1], [0], [0], [1], [0, 0, 1, 1], [], []>} : vector<8x12xbf16>, vector<12x7xbf16>, vector<8x7xf32> -> vector<8x7xf32>
    %359 = arith.addf %355, %358 : vector<8x7xf32>
    %c0_342 = arith.constant 0 : index
    %c0_343 = arith.constant 0 : index
    %c40_344 = arith.constant 40 : index
    %c9_345 = arith.constant 9 : index
    %360 = vector.load %arg2[%c0_342, %c0_343, %c40_344, %c9_345] : memref<1x1x64x16xbf16, #tpu.memory_space<vmem>>, vector<1x1x12x7xbf16>
    %361 = vector.shape_cast %360 : vector<1x1x12x7xbf16> to vector<12x7xbf16>
    %cst_346 = arith.constant dense<0.000000e+00> : vector<8x7xf32>
    %362 = tpu.matmul %7, %361, %cst_346 {dimension_numbers = #tpu.dot_dimension_numbers<[1], [0], [0], [1], [0, 0, 1, 1], [], []>} : vector<8x12xbf16>, vector<12x7xbf16>, vector<8x7xf32> -> vector<8x7xf32>
    %363 = arith.addf %359, %362 : vector<8x7xf32>
    %364 = vector.broadcast %0 : vector<8x1xf32> to vector<8x7xf32>
    %365 = arith.mulf %363, %364 : vector<8x7xf32>
    %366 = vector.broadcast %1 : vector<8x1xf32> to vector<8x7xf32>
    %367 = arith.addf %365, %366 : vector<8x7xf32>
    %368 = arith.maximumf %352, %367 : vector<8x7xf32>
    %c0_347 = arith.constant 0 : index
    %c0_348 = arith.constant 0 : index
    %c44 = arith.constant 44 : index
    %c0_349 = arith.constant 0 : index
    %369 = vector.load %arg2[%c0_347, %c0_348, %c44, %c0_349] : memref<1x1x64x16xbf16, #tpu.memory_space<vmem>>, vector<1x1x12x7xbf16>
    %370 = vector.shape_cast %369 : vector<1x1x12x7xbf16> to vector<12x7xbf16>
    %cst_350 = arith.constant dense<0.000000e+00> : vector<8x7xf32>
    %371 = tpu.matmul %3, %370, %cst_350 {dimension_numbers = #tpu.dot_dimension_numbers<[1], [0], [0], [1], [0, 0, 1, 1], [], []>} : vector<8x12xbf16>, vector<12x7xbf16>, vector<8x7xf32> -> vector<8x7xf32>
    %c0_351 = arith.constant 0 : index
    %c0_352 = arith.constant 0 : index
    %c44_353 = arith.constant 44 : index
    %c8_354 = arith.constant 8 : index
    %372 = vector.load %arg2[%c0_351, %c0_352, %c44_353, %c8_354] : memref<1x1x64x16xbf16, #tpu.memory_space<vmem>>, vector<1x1x12x7xbf16>
    %373 = vector.shape_cast %372 : vector<1x1x12x7xbf16> to vector<12x7xbf16>
    %cst_355 = arith.constant dense<0.000000e+00> : vector<8x7xf32>
    %374 = tpu.matmul %5, %373, %cst_355 {dimension_numbers = #tpu.dot_dimension_numbers<[1], [0], [0], [1], [0, 0, 1, 1], [], []>} : vector<8x12xbf16>, vector<12x7xbf16>, vector<8x7xf32> -> vector<8x7xf32>
    %375 = arith.addf %371, %374 : vector<8x7xf32>
    %c0_356 = arith.constant 0 : index
    %c0_357 = arith.constant 0 : index
    %c44_358 = arith.constant 44 : index
    %c1_359 = arith.constant 1 : index
    %376 = vector.load %arg2[%c0_356, %c0_357, %c44_358, %c1_359] : memref<1x1x64x16xbf16, #tpu.memory_space<vmem>>, vector<1x1x12x7xbf16>
    %377 = vector.shape_cast %376 : vector<1x1x12x7xbf16> to vector<12x7xbf16>
    %cst_360 = arith.constant dense<0.000000e+00> : vector<8x7xf32>
    %378 = tpu.matmul %7, %377, %cst_360 {dimension_numbers = #tpu.dot_dimension_numbers<[1], [0], [0], [1], [0, 0, 1, 1], [], []>} : vector<8x12xbf16>, vector<12x7xbf16>, vector<8x7xf32> -> vector<8x7xf32>
    %379 = arith.addf %375, %378 : vector<8x7xf32>
    %380 = vector.broadcast %0 : vector<8x1xf32> to vector<8x7xf32>
    %381 = arith.mulf %379, %380 : vector<8x7xf32>
    %382 = vector.broadcast %1 : vector<8x1xf32> to vector<8x7xf32>
    %383 = arith.addf %381, %382 : vector<8x7xf32>
    %384 = arith.maximumf %368, %383 : vector<8x7xf32>
    %c0_361 = arith.constant 0 : index
    %c0_362 = arith.constant 0 : index
    %c44_363 = arith.constant 44 : index
    %c8_364 = arith.constant 8 : index
    %385 = vector.load %arg2[%c0_361, %c0_362, %c44_363, %c8_364] : memref<1x1x64x16xbf16, #tpu.memory_space<vmem>>, vector<1x1x12x7xbf16>
    %386 = vector.shape_cast %385 : vector<1x1x12x7xbf16> to vector<12x7xbf16>
    %cst_365 = arith.constant dense<0.000000e+00> : vector<8x7xf32>
    %387 = tpu.matmul %3, %386, %cst_365 {dimension_numbers = #tpu.dot_dimension_numbers<[1], [0], [0], [1], [0, 0, 1, 1], [], []>} : vector<8x12xbf16>, vector<12x7xbf16>, vector<8x7xf32> -> vector<8x7xf32>
    %c0_366 = arith.constant 0 : index
    %c0_367 = arith.constant 0 : index
    %c44_368 = arith.constant 44 : index
    %c1_369 = arith.constant 1 : index
    %388 = vector.load %arg2[%c0_366, %c0_367, %c44_368, %c1_369] : memref<1x1x64x16xbf16, #tpu.memory_space<vmem>>, vector<1x1x12x7xbf16>
    %389 = vector.shape_cast %388 : vector<1x1x12x7xbf16> to vector<12x7xbf16>
    %cst_370 = arith.constant dense<0.000000e+00> : vector<8x7xf32>
    %390 = tpu.matmul %5, %389, %cst_370 {dimension_numbers = #tpu.dot_dimension_numbers<[1], [0], [0], [1], [0, 0, 1, 1], [], []>} : vector<8x12xbf16>, vector<12x7xbf16>, vector<8x7xf32> -> vector<8x7xf32>
    %391 = arith.addf %387, %390 : vector<8x7xf32>
    %c0_371 = arith.constant 0 : index
    %c0_372 = arith.constant 0 : index
    %c44_373 = arith.constant 44 : index
    %c9_374 = arith.constant 9 : index
    %392 = vector.load %arg2[%c0_371, %c0_372, %c44_373, %c9_374] : memref<1x1x64x16xbf16, #tpu.memory_space<vmem>>, vector<1x1x12x7xbf16>
    %393 = vector.shape_cast %392 : vector<1x1x12x7xbf16> to vector<12x7xbf16>
    %cst_375 = arith.constant dense<0.000000e+00> : vector<8x7xf32>
    %394 = tpu.matmul %7, %393, %cst_375 {dimension_numbers = #tpu.dot_dimension_numbers<[1], [0], [0], [1], [0, 0, 1, 1], [], []>} : vector<8x12xbf16>, vector<12x7xbf16>, vector<8x7xf32> -> vector<8x7xf32>
    %395 = arith.addf %391, %394 : vector<8x7xf32>
    %396 = vector.broadcast %0 : vector<8x1xf32> to vector<8x7xf32>
    %397 = arith.mulf %395, %396 : vector<8x7xf32>
    %398 = vector.broadcast %1 : vector<8x1xf32> to vector<8x7xf32>
    %399 = arith.addf %397, %398 : vector<8x7xf32>
    %400 = arith.maximumf %384, %399 : vector<8x7xf32>
    %c0_376 = arith.constant 0 : index
    %c0_377 = arith.constant 0 : index
    %c5 = arith.constant 5 : index
    %c0_378 = arith.constant 0 : index
    %401 = vector.load %arg6[%c0_376, %c0_377, %c5, %c0_378] : memref<1x8x7x7xf32, #tpu.memory_space<vmem>>, vector<1x8x1x7xf32>
    %402 = vector.shape_cast %401 : vector<1x8x1x7xf32> to vector<8x7xf32>
    %403 = vector.shape_cast %400 : vector<8x7xf32> to vector<1x8x1x7xf32>
    tpu.vector_store %arg6[%c0_376, %c0_377, %c5, %c0_378], %403 {strides = array<i32>} : memref<1x8x7x7xf32, #tpu.memory_space<vmem>>, vector<1x8x1x7xf32>,
    %c0_379 = arith.constant 0 : index
    %c0_380 = arith.constant 0 : index
    %c48 = arith.constant 48 : index
    %c0_381 = arith.constant 0 : index
    %404 = vector.load %arg2[%c0_379, %c0_380, %c48, %c0_381] : memref<1x1x64x16xbf16, #tpu.memory_space<vmem>>, vector<1x1x12x7xbf16>
    %405 = vector.shape_cast %404 : vector<1x1x12x7xbf16> to vector<12x7xbf16>
    %cst_382 = arith.constant dense<0.000000e+00> : vector<8x7xf32>
    %406 = tpu.matmul %3, %405, %cst_382 {dimension_numbers = #tpu.dot_dimension_numbers<[1], [0], [0], [1], [0, 0, 1, 1], [], []>} : vector<8x12xbf16>, vector<12x7xbf16>, vector<8x7xf32> -> vector<8x7xf32>
    %c0_383 = arith.constant 0 : index
    %c0_384 = arith.constant 0 : index
    %c48_385 = arith.constant 48 : index
    %c8_386 = arith.constant 8 : index
    %407 = vector.load %arg2[%c0_383, %c0_384, %c48_385, %c8_386] : memref<1x1x64x16xbf16, #tpu.memory_space<vmem>>, vector<1x1x12x7xbf16>
    %408 = vector.shape_cast %407 : vector<1x1x12x7xbf16> to vector<12x7xbf16>
    %cst_387 = arith.constant dense<0.000000e+00> : vector<8x7xf32>
    %409 = tpu.matmul %5, %408, %cst_387 {dimension_numbers = #tpu.dot_dimension_numbers<[1], [0], [0], [1], [0, 0, 1, 1], [], []>} : vector<8x12xbf16>, vector<12x7xbf16>, vector<8x7xf32> -> vector<8x7xf32>
    %410 = arith.addf %406, %409 : vector<8x7xf32>
    %c0_388 = arith.constant 0 : index
    %c0_389 = arith.constant 0 : index
    %c48_390 = arith.constant 48 : index
    %c1_391 = arith.constant 1 : index
    %411 = vector.load %arg2[%c0_388, %c0_389, %c48_390, %c1_391] : memref<1x1x64x16xbf16, #tpu.memory_space<vmem>>, vector<1x1x12x7xbf16>
    %412 = vector.shape_cast %411 : vector<1x1x12x7xbf16> to vector<12x7xbf16>
    %cst_392 = arith.constant dense<0.000000e+00> : vector<8x7xf32>
    %413 = tpu.matmul %7, %412, %cst_392 {dimension_numbers = #tpu.dot_dimension_numbers<[1], [0], [0], [1], [0, 0, 1, 1], [], []>} : vector<8x12xbf16>, vector<12x7xbf16>, vector<8x7xf32> -> vector<8x7xf32>
    %414 = arith.addf %410, %413 : vector<8x7xf32>
    %415 = vector.broadcast %0 : vector<8x1xf32> to vector<8x7xf32>
    %416 = arith.mulf %414, %415 : vector<8x7xf32>
    %417 = vector.broadcast %1 : vector<8x1xf32> to vector<8x7xf32>
    %418 = arith.addf %416, %417 : vector<8x7xf32>
    %c0_393 = arith.constant 0 : index
    %c0_394 = arith.constant 0 : index
    %c48_395 = arith.constant 48 : index
    %c8_396 = arith.constant 8 : index
    %419 = vector.load %arg2[%c0_393, %c0_394, %c48_395, %c8_396] : memref<1x1x64x16xbf16, #tpu.memory_space<vmem>>, vector<1x1x12x7xbf16>
    %420 = vector.shape_cast %419 : vector<1x1x12x7xbf16> to vector<12x7xbf16>
    %cst_397 = arith.constant dense<0.000000e+00> : vector<8x7xf32>
    %421 = tpu.matmul %3, %420, %cst_397 {dimension_numbers = #tpu.dot_dimension_numbers<[1], [0], [0], [1], [0, 0, 1, 1], [], []>} : vector<8x12xbf16>, vector<12x7xbf16>, vector<8x7xf32> -> vector<8x7xf32>
    %c0_398 = arith.constant 0 : index
    %c0_399 = arith.constant 0 : index
    %c48_400 = arith.constant 48 : index
    %c1_401 = arith.constant 1 : index
    %422 = vector.load %arg2[%c0_398, %c0_399, %c48_400, %c1_401] : memref<1x1x64x16xbf16, #tpu.memory_space<vmem>>, vector<1x1x12x7xbf16>
    %423 = vector.shape_cast %422 : vector<1x1x12x7xbf16> to vector<12x7xbf16>
    %cst_402 = arith.constant dense<0.000000e+00> : vector<8x7xf32>
    %424 = tpu.matmul %5, %423, %cst_402 {dimension_numbers = #tpu.dot_dimension_numbers<[1], [0], [0], [1], [0, 0, 1, 1], [], []>} : vector<8x12xbf16>, vector<12x7xbf16>, vector<8x7xf32> -> vector<8x7xf32>
    %425 = arith.addf %421, %424 : vector<8x7xf32>
    %c0_403 = arith.constant 0 : index
    %c0_404 = arith.constant 0 : index
    %c48_405 = arith.constant 48 : index
    %c9_406 = arith.constant 9 : index
    %426 = vector.load %arg2[%c0_403, %c0_404, %c48_405, %c9_406] : memref<1x1x64x16xbf16, #tpu.memory_space<vmem>>, vector<1x1x12x7xbf16>
    %427 = vector.shape_cast %426 : vector<1x1x12x7xbf16> to vector<12x7xbf16>
    %cst_407 = arith.constant dense<0.000000e+00> : vector<8x7xf32>
    %428 = tpu.matmul %7, %427, %cst_407 {dimension_numbers = #tpu.dot_dimension_numbers<[1], [0], [0], [1], [0, 0, 1, 1], [], []>} : vector<8x12xbf16>, vector<12x7xbf16>, vector<8x7xf32> -> vector<8x7xf32>
    %429 = arith.addf %425, %428 : vector<8x7xf32>
    %430 = vector.broadcast %0 : vector<8x1xf32> to vector<8x7xf32>
    %431 = arith.mulf %429, %430 : vector<8x7xf32>
    %432 = vector.broadcast %1 : vector<8x1xf32> to vector<8x7xf32>
    %433 = arith.addf %431, %432 : vector<8x7xf32>
    %434 = arith.maximumf %418, %433 : vector<8x7xf32>
    %c0_408 = arith.constant 0 : index
    %c0_409 = arith.constant 0 : index
    %c52 = arith.constant 52 : index
    %c0_410 = arith.constant 0 : index
    %435 = vector.load %arg2[%c0_408, %c0_409, %c52, %c0_410] : memref<1x1x64x16xbf16, #tpu.memory_space<vmem>>, vector<1x1x12x7xbf16>
    %436 = vector.shape_cast %435 : vector<1x1x12x7xbf16> to vector<12x7xbf16>
    %cst_411 = arith.constant dense<0.000000e+00> : vector<8x7xf32>
    %437 = tpu.matmul %3, %436, %cst_411 {dimension_numbers = #tpu.dot_dimension_numbers<[1], [0], [0], [1], [0, 0, 1, 1], [], []>} : vector<8x12xbf16>, vector<12x7xbf16>, vector<8x7xf32> -> vector<8x7xf32>
    %c0_412 = arith.constant 0 : index
    %c0_413 = arith.constant 0 : index
    %c52_414 = arith.constant 52 : index
    %c8_415 = arith.constant 8 : index
    %438 = vector.load %arg2[%c0_412, %c0_413, %c52_414, %c8_415] : memref<1x1x64x16xbf16, #tpu.memory_space<vmem>>, vector<1x1x12x7xbf16>
    %439 = vector.shape_cast %438 : vector<1x1x12x7xbf16> to vector<12x7xbf16>
    %cst_416 = arith.constant dense<0.000000e+00> : vector<8x7xf32>
    %440 = tpu.matmul %5, %439, %cst_416 {dimension_numbers = #tpu.dot_dimension_numbers<[1], [0], [0], [1], [0, 0, 1, 1], [], []>} : vector<8x12xbf16>, vector<12x7xbf16>, vector<8x7xf32> -> vector<8x7xf32>
    %441 = arith.addf %437, %440 : vector<8x7xf32>
    %c0_417 = arith.constant 0 : index
    %c0_418 = arith.constant 0 : index
    %c52_419 = arith.constant 52 : index
    %c1_420 = arith.constant 1 : index
    %442 = vector.load %arg2[%c0_417, %c0_418, %c52_419, %c1_420] : memref<1x1x64x16xbf16, #tpu.memory_space<vmem>>, vector<1x1x12x7xbf16>
    %443 = vector.shape_cast %442 : vector<1x1x12x7xbf16> to vector<12x7xbf16>
    %cst_421 = arith.constant dense<0.000000e+00> : vector<8x7xf32>
    %444 = tpu.matmul %7, %443, %cst_421 {dimension_numbers = #tpu.dot_dimension_numbers<[1], [0], [0], [1], [0, 0, 1, 1], [], []>} : vector<8x12xbf16>, vector<12x7xbf16>, vector<8x7xf32> -> vector<8x7xf32>
    %445 = arith.addf %441, %444 : vector<8x7xf32>
    %446 = vector.broadcast %0 : vector<8x1xf32> to vector<8x7xf32>
    %447 = arith.mulf %445, %446 : vector<8x7xf32>
    %448 = vector.broadcast %1 : vector<8x1xf32> to vector<8x7xf32>
    %449 = arith.addf %447, %448 : vector<8x7xf32>
    %450 = arith.maximumf %434, %449 : vector<8x7xf32>
    %c0_422 = arith.constant 0 : index
    %c0_423 = arith.constant 0 : index
    %c52_424 = arith.constant 52 : index
    %c8_425 = arith.constant 8 : index
    %451 = vector.load %arg2[%c0_422, %c0_423, %c52_424, %c8_425] : memref<1x1x64x16xbf16, #tpu.memory_space<vmem>>, vector<1x1x12x7xbf16>
    %452 = vector.shape_cast %451 : vector<1x1x12x7xbf16> to vector<12x7xbf16>
    %cst_426 = arith.constant dense<0.000000e+00> : vector<8x7xf32>
    %453 = tpu.matmul %3, %452, %cst_426 {dimension_numbers = #tpu.dot_dimension_numbers<[1], [0], [0], [1], [0, 0, 1, 1], [], []>} : vector<8x12xbf16>, vector<12x7xbf16>, vector<8x7xf32> -> vector<8x7xf32>
    %c0_427 = arith.constant 0 : index
    %c0_428 = arith.constant 0 : index
    %c52_429 = arith.constant 52 : index
    %c1_430 = arith.constant 1 : index
    %454 = vector.load %arg2[%c0_427, %c0_428, %c52_429, %c1_430] : memref<1x1x64x16xbf16, #tpu.memory_space<vmem>>, vector<1x1x12x7xbf16>
    %455 = vector.shape_cast %454 : vector<1x1x12x7xbf16> to vector<12x7xbf16>
    %cst_431 = arith.constant dense<0.000000e+00> : vector<8x7xf32>
    %456 = tpu.matmul %5, %455, %cst_431 {dimension_numbers = #tpu.dot_dimension_numbers<[1], [0], [0], [1], [0, 0, 1, 1], [], []>} : vector<8x12xbf16>, vector<12x7xbf16>, vector<8x7xf32> -> vector<8x7xf32>
    %457 = arith.addf %453, %456 : vector<8x7xf32>
    %c0_432 = arith.constant 0 : index
    %c0_433 = arith.constant 0 : index
    %c52_434 = arith.constant 52 : index
    %c9_435 = arith.constant 9 : index
    %458 = vector.load %arg2[%c0_432, %c0_433, %c52_434, %c9_435] : memref<1x1x64x16xbf16, #tpu.memory_space<vmem>>, vector<1x1x12x7xbf16>
    %459 = vector.shape_cast %458 : vector<1x1x12x7xbf16> to vector<12x7xbf16>
    %cst_436 = arith.constant dense<0.000000e+00> : vector<8x7xf32>
    %460 = tpu.matmul %7, %459, %cst_436 {dimension_numbers = #tpu.dot_dimension_numbers<[1], [0], [0], [1], [0, 0, 1, 1], [], []>} : vector<8x12xbf16>, vector<12x7xbf16>, vector<8x7xf32> -> vector<8x7xf32>
    %461 = arith.addf %457, %460 : vector<8x7xf32>
    %462 = vector.broadcast %0 : vector<8x1xf32> to vector<8x7xf32>
    %463 = arith.mulf %461, %462 : vector<8x7xf32>
    %464 = vector.broadcast %1 : vector<8x1xf32> to vector<8x7xf32>
    %465 = arith.addf %463, %464 : vector<8x7xf32>
    %466 = arith.maximumf %450, %465 : vector<8x7xf32>
    %c0_437 = arith.constant 0 : index
    %c0_438 = arith.constant 0 : index
    %c6 = arith.constant 6 : index
    %c0_439 = arith.constant 0 : index
    %467 = vector.load %arg6[%c0_437, %c0_438, %c6, %c0_439] : memref<1x8x7x7xf32, #tpu.memory_space<vmem>>, vector<1x8x1x7xf32>
    %468 = vector.shape_cast %467 : vector<1x8x1x7xf32> to vector<8x7xf32>
    %469 = vector.shape_cast %466 : vector<8x7xf32> to vector<1x8x1x7xf32>
    tpu.vector_store %arg6[%c0_437, %c0_438, %c6, %c0_439], %469 {strides = array<i32>} : memref<1x8x7x7xf32, #tpu.memory_space<vmem>>, vector<1x8x1x7xf32>,
    return
  }
  func.func @transform_0(%arg0: i32, %arg1: i32) -> (i32, i32, i32, i32) {
    %c0_i32 = arith.constant 0 : i32
    %c0_i32_0 = arith.constant 0 : i32
    %c0_i32_1 = arith.constant 0 : i32
    return %arg0, %arg1, %c0_i32, %c0_i32_0 : i32, i32, i32, i32
  }
  func.func @transform_1(%arg0: i32, %arg1: i32) -> (i32, i32, i32) {
    %c0_i32 = arith.constant 0 : i32
    %c0_i32_0 = arith.constant 0 : i32
    %c0_i32_1 = arith.constant 0 : i32
    %c0_i32_2 = arith.constant 0 : i32
    return %c0_i32, %c0_i32_0, %c0_i32_1 : i32, i32, i32
  }
  func.func @transform_2(%arg0: i32, %arg1: i32) -> (i32, i32) {
    %c0_i32 = arith.constant 0 : i32
    %c0_i32_0 = arith.constant 0 : i32
    %c0_i32_1 = arith.constant 0 : i32
    return %c0_i32, %c0_i32_0 : i32, i32
  }
  func.func @transform_3(%arg0: i32, %arg1: i32) -> (i32, i32) {
    %c0_i32 = arith.constant 0 : i32
    %c0_i32_0 = arith.constant 0 : i32
    %c0_i32_1 = arith.constant 0 : i32
    return %c0_i32, %c0_i32_0 : i32, i32
  }
  func.func @transform_4(%arg0: i32, %arg1: i32) -> (i32, i32, i32, i32) {
    %c0_i32 = arith.constant 0 : i32
    %c0_i32_0 = arith.constant 0 : i32
    %c0_i32_1 = arith.constant 0 : i32
    return %arg0, %c0_i32, %arg1, %c0_i32_0 : i32, i32, i32, i32
  }
}

</mosaic_0001>

<llo_original>
// kernel: tpu_custom_call.1
$region0: #{tpu_custom_call.1}
  #allocation0 [shape = 'u32[]', space=smem, size = 0x4, offset = 0x4, fixed_abs, tag = 'smem constant byte address 0x4 - core index']
  #allocation1 [shape = 'u32[144,128]{1,0:T(1,128)}', space=vmem, size = 0x12000, scoped, tag = 'internal scratch']
  %s0 = inlined_call_operand.vmem [shape: bf16[2,1,64,16], index: 0, kind: input, shape index: {}]
  %s1 = inlined_call_operand.vmem [shape: bf16[3,8,12], index: 1, kind: input, shape index: {}]
  %s2 = inlined_call_operand.vmem [shape: f32[8,1], index: 2, kind: input, shape index: {}]
  %s3 = inlined_call_operand.vmem [shape: f32[8,1], index: 3, kind: input, shape index: {}]
  %s4 = inlined_call_operand.vmem [shape: f32[2,8,7,7], index: 4, kind: output, shape index: {}]
  %s5 = sld [smem:[#allocation0]]
  $region49: #{tpu_custom_call.1} parent=0
    _
  %s7 = ssub.s32 1, %s5
  %s8 = scalar_select 0, %s7, %s5
  loop: start=0, step=1, limit=4
  $region2: #{tpu_custom_call.1} parent=0 // loop_pre_header
    _
  $region3: #{tpu_custom_call.1} parent=0 // loop_header
    %s10 = sphi 0, %s14
    %p11 = scmp.ge.s32.totalorder %s10, 4
    %s17 = sphi 0, %s29
    %s18 = sphi 0, %s25
    %s19 = sphi 0, %s17
    %s20 = sphi 0, %s18
    %s21 = sphi 0, %s19
    %s22 = sphi 0, %s20
    %s34 = sphi 0, %s36
    %s37 = sphi 0, %s34
    %s38 = sphi 0, %s37
    %s54 = sphi 0, %s38
    %s58 = sphi 0, %s58
    %s60 = sphi 0, %s58
    %s61 = sphi 0, %s60
    %s75 = sphi 0, %s61
    %s79 = sphi 0, %s79
    %s81 = sphi 0, %s79
    %s82 = sphi 0, %s81
    %s96 = sphi 0, %s82
    %s100 = sphi 0, %s100
    %s102 = sphi 0, %s100
    %s103 = sphi 0, %s102
    %s117 = sphi 0, %s103
    %s125 = sphi 0, %s127
    %s128 = sphi 0, %s125
    %s129 = sphi 0, %s128
    %s145 = sphi 0, %s129
  $region4: #{tpu_custom_call.1} parent=0 // loop_header_branch
    %13 = sbr.rel (%p11) target = $region8
  $region5: #{tpu_custom_call.1} parent=0 // loop_body
    %s15 = ssub.s32 %s10, 1
    %s16 = ssub.s32 %s10, 2
    %s23 = sadd.s32 1, %s18
    %p24 = scmp.ge.s32.totalorder %s23, 1
    %s25 = scalar_select %p24, 0, %s23
    %s26 = sadd.s32 1, %s17
    %s27 = scalar_select %p24, %s26, %s17
    %p28 = scmp.ge.s32.totalorder %s27, 2
    %s29 = scalar_select %p28, 0, %s27
    %s30 = ssub.s32 %s17, %s29
    %s31 = ssub.s32 %s18, %s25
    %s32 = sor.u32 %s30, %s31
    %p33 = scmp.eq.s32.totalorder %s32, 0
    %s35 = sadd.s32 %s34, 1
    %s36 = scalar_select %p33, %s34, %s35
    %p39 = pneg %p33
    %p40 = scmp.eq.s32.totalorder %s10, 1
    %p41 = por %p39, %p40
    %p42 = scmp.ne.s32.totalorder %s34, %s37
    %p43 = scmp.eq.s32.totalorder %s10, 0
    %p44 = por %p42, %p43
    %p45 = scmp.ne.s32.totalorder %s34, %s37
    %p46 = scmp.eq.s32.totalorder %s15, 1
    %p47 = por %p45, %p46
    %p48 = scmp.ne.s32.totalorder %s37, %s38
    %p49 = scmp.eq.s32.totalorder %s15, 0
    %p50 = por %p48, %p49
    %p51 = scmp.ne.s32.totalorder %s37, %s38
    %p52 = scmp.eq.s32.totalorder %s16, 1
    %p53 = por %p51, %p52
    %p55 = scmp.ne.s32.totalorder %s38, %s54
    %p56 = scmp.eq.s32.totalorder %s16, 0
    %p57 = por %p55, %p56
    %s59 = sadd.s32 %s58, 1
    %p62 = scmp.eq.s32.totalorder %s10, 1
    %p63 = scmp.ne.s32.totalorder %s58, %s60
    %p64 = scmp.eq.s32.totalorder %s10, 0
    %p65 = por %p63, %p64
    %p66 = scmp.ne.s32.totalorder %s58, %s60
    %p67 = scmp.eq.s32.totalorder %s15, 1
    %p68 = por %p66, %p67
    %p69 = scmp.ne.s32.totalorder %s60, %s61
    %p70 = scmp.eq.s32.totalorder %s15, 0
    %p71 = por %p69, %p70
    %p72 = scmp.ne.s32.totalorder %s60, %s61
    %p73 = scmp.eq.s32.totalorder %s16, 1
    %p74 = por %p72, %p73
    %p76 = scmp.ne.s32.totalorder %s61, %s75
    %p77 = scmp.eq.s32.totalorder %s16, 0
    %p78 = por %p76, %p77
    %s80 = sadd.s32 %s79, 1
    %p83 = scmp.eq.s32.totalorder %s10, 1
    %p84 = scmp.ne.s32.totalorder %s79, %s81
    %p85 = scmp.eq.s32.totalorder %s10, 0
    %p86 = por %p84, %p85
    %p87 = scmp.ne.s32.totalorder %s79, %s81
    %p88 = scmp.eq.s32.totalorder %s15, 1
    %p89 = por %p87, %p88
    %p90 = scmp.ne.s32.totalorder %s81, %s82
    %p91 = scmp.eq.s32.totalorder %s15, 0
    %p92 = por %p90, %p91
    %p93 = scmp.ne.s32.totalorder %s81, %s82
    %p94 = scmp.eq.s32.totalorder %s16, 1
    %p95 = por %p93, %p94
    %p97 = scmp.ne.s32.totalorder %s82, %s96
    %p98 = scmp.eq.s32.totalorder %s16, 0
    %p99 = por %p97, %p98
    %s101 = sadd.s32 %s100, 1
    %p104 = scmp.eq.s32.totalorder %s10, 1
    %p105 = scmp.ne.s32.totalorder %s100, %s102
    %p106 = scmp.eq.s32.totalorder %s10, 0
    %p107 = por %p105, %p106
    %p108 = scmp.ne.s32.totalorder %s100, %s102
    %p109 = scmp.eq.s32.totalorder %s15, 1
    %p110 = por %p108, %p109
    %p111 = scmp.ne.s32.totalorder %s102, %s103
    %p112 = scmp.eq.s32.totalorder %s15, 0
    %p113 = por %p111, %p112
    %p114 = scmp.ne.s32.totalorder %s102, %s103
    %p115 = scmp.eq.s32.totalorder %s16, 1
    %p116 = por %p114, %p115
    %p118 = scmp.ne.s32.totalorder %s103, %s117
    %p119 = scmp.eq.s32.totalorder %s16, 0
    %p120 = por %p118, %p119
    %s121 = ssub.s32 %s17, %s29
    %s122 = ssub.s32 %s18, %s25
    %s123 = sor.u32 %s121, %s122
    %p124 = scmp.eq.s32.totalorder %s123, 0
    %s126 = sadd.s32 %s125, 1
    %s127 = scalar_select %p124, %s125, %s126
    %p130 = pneg %p124
    %p131 = scmp.eq.s32.totalorder %s10, 1
    %p132 = por %p130, %p131
    %p133 = scmp.ne.s32.totalorder %s125, %s128
    %p134 = scmp.eq.s32.totalorder %s10, 0
    %p135 = por %p133, %p134
    %p136 = scmp.ne.s32.totalorder %s125, %s128
    %p137 = scmp.eq.s32.totalorder %s15, 1
    %p138 = por %p136, %p137
    %p139 = scmp.ne.s32.totalorder %s128, %s129
    %p140 = scmp.eq.s32.totalorder %s15, 0
    %p141 = por %p139, %p140
    %p142 = scmp.ne.s32.totalorder %s128, %s129
    %p143 = scmp.eq.s32.totalorder %s16, 1
    %p144 = por %p142, %p143
    %p146 = scmp.ne.s32.totalorder %s129, %s145
    %p147 = scmp.eq.s32.totalorder %s16, 0
    %p148 = por %p146, %p147
    %p149 = scmp.le.s32.totalorder 1, %s10
    %p150 = scmp.lt.s32.totalorder %s10, 3
    %p151 = pnand %p149, %p150
    %p152 = pneg %p151
    // Predicated region
    $region9: #{tpu_custom_call.1} parent=5 // pred_check
      _
    $region10: #{tpu_custom_call.1} parent=5 // pred_check_branch
      %154 = sbr.rel (%p151) target = $region12
    $region11: #{tpu_custom_call.1} parent=5 // pred_region
      %s155 = ssub.s32 %s10, 1
      // Predicated region
      $region13: #{tpu_custom_call.1} parent=11 // pred_check
        %p156 = pneg %p71
      $region14: #{tpu_custom_call.1} parent=11 // pred_check_branch
        %158 = sbr.rel (%p156) target = $region16
      $region15: #{tpu_custom_call.1} parent=11 // pred_region
        _
      $region16: #{tpu_custom_call.1} parent=11 // pred_fallthru
        _
      // Predicated region
      $region17: #{tpu_custom_call.1} parent=11 // pred_check
        %p159 = pneg %p92
      $region18: #{tpu_custom_call.1} parent=11 // pred_check_branch
        %161 = sbr.rel (%p159) target = $region20
      $region19: #{tpu_custom_call.1} parent=11 // pred_region
        _
      $region20: #{tpu_custom_call.1} parent=11 // pred_fallthru
        _
      // Predicated region
      $region21: #{tpu_custom_call.1} parent=11 // pred_check
        %p162 = pneg %p113
      $region22: #{tpu_custom_call.1} parent=11 // pred_check_branch
        %164 = sbr.rel (%p162) target = $region24
      $region23: #{tpu_custom_call.1} parent=11 // pred_region
        _
      $region24: #{tpu_custom_call.1} parent=11 // pred_fallthru
        _
    $region12: #{tpu_custom_call.1} parent=5 // pred_fallthru
      _
    %p165 = scmp.lt.s32.totalorder %s10, 2
    // Predicated region
    $region25: #{tpu_custom_call.1} parent=5 // pred_check
      %p166 = pneg %p165
    $region26: #{tpu_custom_call.1} parent=5 // pred_check_branch
      %168 = sbr.rel (%p166) target = $region28
    $region27: #{tpu_custom_call.1} parent=5 // pred_region
      // Predicated region
      $region29: #{tpu_custom_call.1} parent=27 // pred_check
        %p169 = pneg %p44
      $region30: #{tpu_custom_call.1} parent=27 // pred_check_branch
        %171 = sbr.rel (%p169) target = $region32
      $region31: #{tpu_custom_call.1} parent=27 // pred_region
        %p172 = scmp.lt.s32.totalorder %s17, 1
        %s173 = scalar_select %p172, %s17, 1
        %p174 = scmp.lt.s32.totalorder %s18, 0
        %s175 = scalar_select %p174, %s18, 0
        %s176 = smul.addr %s175, 8
        %s177 = smul.addr %s173, 8
        %s178 = sadd.s32 %s176, %s177
        %s179 = smul.addr %s178, 4
        %s180 = scalar_lea.vmem %s0, %s179
      $region32: #{tpu_custom_call.1} parent=27 // pred_fallthru
        _
    $region28: #{tpu_custom_call.1} parent=5 // pred_fallthru
      _
    %p181 = scmp.le.s32.totalorder 1, %s10
    %p182 = scmp.lt.s32.totalorder %s10, 3
    %p183 = pnand %p181, %p182
    %p184 = pneg %p183
    // Predicated region
    $region33: #{tpu_custom_call.1} parent=5 // pred_check
      _
    $region34: #{tpu_custom_call.1} parent=5 // pred_check_branch
      %186 = sbr.rel (%p183) target = $region36
    $region35: #{tpu_custom_call.1} parent=5 // pred_region
      %s187 = ssub.s32 %s10, 1
      %p188 = scmp.lt.s32.totalorder %s19, 1
      %s189 = scalar_select %p188, %s19, 1
      %p190 = scmp.lt.s32.totalorder %s20, 0
      %s191 = scalar_select %p190, %s20, 0
      %s192 = smul.addr %s191, 8
      %s193 = smul.addr %s189, 8
      %s194 = sadd.s32 %s192, %s193
      %s195 = smul.addr %s194, 4
      %s196 = scalar_lea.vmem %s0, %s195
      %p197 = pneg %p50
      %p198 = pneg %p47
      %p199 = pneg %p71
      %p200 = pneg %p68
      %p201 = pneg %p92
      %p202 = pneg %p89
      %p203 = pneg %p113
      %p204 = pneg %p110
      %p205 = pneg %p141
      %p206 = pneg %p138
      %p207 = scmp.lt.s32.totalorder %s19, 1
      %s208 = scalar_select %p207, %s19, 1
      %p209 = scmp.lt.s32.totalorder %s20, 0
      %s210 = scalar_select %p209, %s20, 0
      %s211 = smul.addr %s208, 8
      %s212 = sadd.s32 %s210, %s211
      %s213 = smul.addr %s212, 8
      %s214 = scalar_lea.vmem %s4, %s213
      %p215 = scmp.lt.s32.totalorder %s19, 1
      %s216 = scalar_select %p215, %s19, 1
      %p217 = scmp.lt.s32.totalorder %s20, 0
      %s218 = scalar_select %p217, %s20, 0
      %s219 = smul.addr %s218, 8
      %s220 = smul.addr %s216, 8
      %s221 = sadd.s32 %s219, %s220
      %s222 = smul.addr %s221, 4
      %s223 = scalar_lea.vmem %s0, %s222
      %p224 = scmp.lt.s32.totalorder %s19, 1
      %s225 = scalar_select %p224, %s19, 1
      %p226 = scmp.lt.s32.totalorder %s20, 0
      %s227 = scalar_select %p226, %s20, 0
      %s228 = smul.addr %s225, 8
      %s229 = sadd.s32 %s227, %s228
      %s230 = smul.addr %s229, 8
      %s231 = scalar_lea.vmem %s4, %s230
      %v233 = vld [vmem:[%s2] sm:$0xff]
      %v234 = vld [vmem:[%s3] sm:$0xff]
      %v235 = vld [vmem:[%s1] sm:$0xf]
      %s236 = scalar_lea.vmem %s1, 4
      %v237 = vld [vmem:[%s236] sm:$0xf]
      %s238 = scalar_lea.vmem %s1, 8
      %v239 = vld [vmem:[%s238] sm:$0xf]
      %v240 = vld [vmem:[%s223] sm:$0xf]
      %v241 = vld [vmem:[%s223 + $0x4] sm:$0x3]
      %v244 = vunpack.c.l.b16 %v240
      %v245 = vunpack.c.l.b16 %v241
      %v246 = vpack.c.b16 %v245, %v244
      %247 = vrot.lane.b32.xlu0 %v246, 120
      %v248 = vpop.permute.xlu0 %247
      %vm249 = vcmask 97280
      %v251 = vsel %vm249, %v237, 0
      %vm253 = vcmask 1045504
      %v255 = vsel %vm253, %v248, 0
      %257 = vmatprep.subr.bf16.mxu0 0
      %258 = vmatpush1.bf16.msra.mxu0 %v255
      %259 = vmatprep.subr.bf16.mxu0 0
      %260 = vmatpush1.bf16.msra.mxu0 0
      %261 = vmatprep.subr.bf16.mxu0 0
      %262 = vmatpush1.bf16.msra.mxu0 0
      %263 = vmatprep.subr.bf16.mxu0 0
      %264 = vmatpush1.bf16.msra.mxu0 0
      %265 = vmatprep.subr.bf16.mxu0 0
      %266 = vmatpush1.bf16.msra.mxu0 0
      %267 = vmatprep.subr.bf16.mxu0 0
      %268 = vmatpush1.bf16.msra.mxu0 0
      %269 = vmatprep.subr.bf16.mxu0 0
      %270 = vmatpush1.bf16.msra.mxu0 0
      %271 = vmatprep.subr.bf16.mxu0 0
      %272 = vmatpush1.bf16.msra.mxu0 0
      %273 = vmatprep.subr.bf16.mxu0 0
      %274 = vmatpush1.bf16.msra.mxu0 0
      %275 = vmatprep.subr.bf16.mxu0 0
      %276 = vmatpush1.bf16.msra.mxu0 0
      %277 = vmatprep.subr.bf16.mxu0 0
      %278 = vmatpush1.bf16.msra.mxu0 0
      %279 = vmatprep.subr.bf16.mxu0 0
      %280 = vmatpush1.bf16.msra.mxu0 0
      %281 = vmatprep.subr.bf16.mxu0 0
      %282 = vmatpush1.bf16.msra.mxu0 0
      %283 = vmatprep.subr.bf16.mxu0 0
      %284 = vmatpush1.bf16.msra.mxu0 0
      %285 = vmatprep.subr.bf16.mxu0 0
      %286 = vmatpush1.bf16.msra.mxu0 0
      %287 = vmatprep.subr.bf16.mxu0 0
      %288 = vmatpush1.bf16.msra.mxu0 0
      %289 = vmatprep.mubr.bf16.mxu0 0
      %290 = vmatmul.mubr.bf16.gmra.mrb[0].mxu0 %v251
      %v291 = vpop.f32.mrb[0].mxu0
      %v292 = vadd.f32 0.0, %v291
      %v293 = vpop.f32.mrb[0].mxu0
      %v294 = vpop.f32.mrb[0].mxu0
      %v295 = vpop.f32.mrb[0].mxu0
      %296 = vdwg.mxu0
      %v298 = vsel %vm249, %v235, 0
      %v301 = vsel %vm253, %v246, 0
      %303 = vmatprep.subr.bf16.mxu0 0
      %304 = vmatpush1.bf16.msra.mxu0 %v301
      %305 = vmatprep.subr.bf16.mxu0 0
      %306 = vmatpush1.bf16.msra.mxu0 0
      %307 = vmatprep.subr.bf16.mxu0 0
      %308 = vmatpush1.bf16.msra.mxu0 0
      %309 = vmatprep.subr.bf16.mxu0 0
      %310 = vmatpush1.bf16.msra.mxu0 0
      %311 = vmatprep.subr.bf16.mxu0 0
      %312 = vmatpush1.bf16.msra.mxu0 0
      %313 = vmatprep.subr.bf16.mxu0 0
      %314 = vmatpush1.bf16.msra.mxu0 0
      %315 = vmatprep.subr.bf16.mxu0 0
      %316 = vmatpush1.bf16.msra.mxu0 0
      %317 = vmatprep.subr.bf16.mxu0 0
      %318 = vmatpush1.bf16.msra.mxu0 0
      %319 = vmatprep.subr.bf16.mxu0 0
      %320 = vmatpush1.bf16.msra.mxu0 0
      %321 = vmatprep.subr.bf16.mxu0 0
      %322 = vmatpush1.bf16.msra.mxu0 0
      %323 = vmatprep.subr.bf16.mxu0 0
      %324 = vmatpush1.bf16.msra.mxu0 0
      %325 = vmatprep.subr.bf16.mxu0 0
      %326 = vmatpush1.bf16.msra.mxu0 0
      %327 = vmatprep.subr.bf16.mxu0 0
      %328 = vmatpush1.bf16.msra.mxu0 0
      %329 = vmatprep.subr.bf16.mxu0 0
      %330 = vmatpush1.bf16.msra.mxu0 0
      %331 = vmatprep.subr.bf16.mxu0 0
      %332 = vmatpush1.bf16.msra.mxu0 0
      %333 = vmatprep.subr.bf16.mxu0 0
      %334 = vmatpush1.bf16.msra.mxu0 0
      %335 = vmatprep.mubr.bf16.mxu0 0
      %336 = vmatmul.mubr.bf16.gmra.mrb[0].mxu0 %v298
      %v337 = vpop.f32.mrb[0].mxu0
      %v338 = vadd.f32 %v292, %v337
      %v339 = vpop.f32.mrb[0].mxu0
      %v340 = vpop.f32.mrb[0].mxu0
      %v341 = vpop.f32.mrb[0].mxu0
      %342 = vdwg.mxu0
      %343 = vrot.lane.b32.xlu0 %v246, 127
      %v344 = vpop.permute.xlu0 %343
      %v346 = vsel %vm249, %v239, 0
      %v349 = vsel %vm253, %v344, 0
      %351 = vmatprep.subr.bf16.mxu0 0
      %352 = vmatpush1.bf16.msra.mxu0 %v349
      %353 = vmatprep.subr.bf16.mxu0 0
      %354 = vmatpush1.bf16.msra.mxu0 0
      %355 = vmatprep.subr.bf16.mxu0 0
      %356 = vmatpush1.bf16.msra.mxu0 0
      %357 = vmatprep.subr.bf16.mxu0 0
      %358 = vmatpush1.bf16.msra.mxu0 0
      %359 = vmatprep.subr.bf16.mxu0 0
      %360 = vmatpush1.bf16.msra.mxu0 0
      %361 = vmatprep.subr.bf16.mxu0 0
      %362 = vmatpush1.bf16.msra.mxu0 0
      %363 = vmatprep.subr.bf16.mxu0 0
      %364 = vmatpush1.bf16.msra.mxu0 0
      %365 = vmatprep.subr.bf16.mxu0 0
      %366 = vmatpush1.bf16.msra.mxu0 0
      %367 = vmatprep.subr.bf16.mxu0 0
      %368 = vmatpush1.bf16.msra.mxu0 0
      %369 = vmatprep.subr.bf16.mxu0 0
      %370 = vmatpush1.bf16.msra.mxu0 0
      %371 = vmatprep.subr.bf16.mxu0 0
      %372 = vmatpush1.bf16.msra.mxu0 0
      %373 = vmatprep.subr.bf16.mxu0 0
      %374 = vmatpush1.bf16.msra.mxu0 0
      %375 = vmatprep.subr.bf16.mxu0 0
      %376 = vmatpush1.bf16.msra.mxu0 0
      %377 = vmatprep.subr.bf16.mxu0 0
      %378 = vmatpush1.bf16.msra.mxu0 0
      %379 = vmatprep.subr.bf16.mxu0 0
      %380 = vmatpush1.bf16.msra.mxu0 0
      %381 = vmatprep.subr.bf16.mxu0 0
      %382 = vmatpush1.bf16.msra.mxu0 0
      %383 = vmatprep.mubr.bf16.mxu0 0
      %384 = vmatmul.mubr.bf16.gmra.mrb[0].mxu0 %v346
      %v385 = vpop.f32.mrb[0].mxu0
      %v386 = vadd.f32 0.0, %v385
      %v387 = vpop.f32.mrb[0].mxu0
      %v388 = vpop.f32.mrb[0].mxu0
      %v389 = vpop.f32.mrb[0].mxu0
      %390 = vdwg.mxu0
      %v391 = vadd.f32 %v338, %v386
      %393 = vset.pattern.permute.xlu0 0
      %394 = vperm.xlu0 %393, %v233
      %v395 = vpop.permute.xlu0 %394
      %v397 = vmul.f32 %v391, %v395
      %399 = vset.pattern.permute.xlu0 0
      %400 = vperm.xlu0 %399, %v234
      %v401 = vpop.permute.xlu0 %400
      %v403 = vadd.f32 %v397, %v401
      %404 = vmatprep.subr.bf16.mxu0 0
      %405 = vmatpush1.bf16.msra.mxu0 %v349
      %406 = vmatprep.subr.bf16.mxu0 0
      %407 = vmatpush1.bf16.msra.mxu0 0
      %408 = vmatprep.subr.bf16.mxu0 0
      %409 = vmatpush1.bf16.msra.mxu0 0
      %410 = vmatprep.subr.bf16.mxu0 0
      %411 = vmatpush1.bf16.msra.mxu0 0
      %412 = vmatprep.subr.bf16.mxu0 0
      %413 = vmatpush1.bf16.msra.mxu0 0
      %414 = vmatprep.subr.bf16.mxu0 0
      %415 = vmatpush1.bf16.msra.mxu0 0
      %416 = vmatprep.subr.bf16.mxu0 0
      %417 = vmatpush1.bf16.msra.mxu0 0
      %418 = vmatprep.subr.bf16.mxu0 0
      %419 = vmatpush1.bf16.msra.mxu0 0
      %420 = vmatprep.subr.bf16.mxu0 0
      %421 = vmatpush1.bf16.msra.mxu0 0
      %422 = vmatprep.subr.bf16.mxu0 0
      %423 = vmatpush1.bf16.msra.mxu0 0
      %424 = vmatprep.subr.bf16.mxu0 0
      %425 = vmatpush1.bf16.msra.mxu0 0
      %426 = vmatprep.subr.bf16.mxu0 0
      %427 = vmatpush1.bf16.msra.mxu0 0
      %428 = vmatprep.subr.bf16.mxu0 0
      %429 = vmatpush1.bf16.msra.mxu0 0
      %430 = vmatprep.subr.bf16.mxu0 0
      %431 = vmatpush1.bf16.msra.mxu0 0
      %432 = vmatprep.subr.bf16.mxu0 0
      %433 = vmatpush1.bf16.msra.mxu0 0
      %434 = vmatprep.subr.bf16.mxu0 0
      %435 = vmatpush1.bf16.msra.mxu0 0
      %436 = vmatprep.mubr.bf16.mxu0 0
      %437 = vmatmul.mubr.bf16.gmra.mrb[0].mxu0 %v251
      %v438 = vpop.f32.mrb[0].mxu0
      %v439 = vadd.f32 0.0, %v438
      %v440 = vpop.f32.mrb[0].mxu0
      %v441 = vpop.f32.mrb[0].mxu0
      %v442 = vpop.f32.mrb[0].mxu0
      %443 = vdwg.mxu0
      %444 = vmatprep.subr.bf16.mxu0 0
      %445 = vmatpush1.bf16.msra.mxu0 %v255
      %446 = vmatprep.subr.bf16.mxu0 0
      %447 = vmatpush1.bf16.msra.mxu0 0
      %448 = vmatprep.subr.bf16.mxu0 0
      %449 = vmatpush1.bf16.msra.mxu0 0
      %450 = vmatprep.subr.bf16.mxu0 0
      %451 = vmatpush1.bf16.msra.mxu0 0
      %452 = vmatprep.subr.bf16.mxu0 0
      %453 = vmatpush1.bf16.msra.mxu0 0
      %454 = vmatprep.subr.bf16.mxu0 0
      %455 = vmatpush1.bf16.msra.mxu0 0
      %456 = vmatprep.subr.bf16.mxu0 0
      %457 = vmatpush1.bf16.msra.mxu0 0
      %458 = vmatprep.subr.bf16.mxu0 0
      %459 = vmatpush1.bf16.msra.mxu0 0
      %460 = vmatprep.subr.bf16.mxu0 0
      %461 = vmatpush1.bf16.msra.mxu0 0
      %462 = vmatprep.subr.bf16.mxu0 0
      %463 = vmatpush1.bf16.msra.mxu0 0
      %464 = vmatprep.subr.bf16.mxu0 0
      %465 = vmatpush1.bf16.msra.mxu0 0
      %466 = vmatprep.subr.bf16.mxu0 0
      %467 = vmatpush1.bf16.msra.mxu0 0
      %468 = vmatprep.subr.bf16.mxu0 0
      %469 = vmatpush1.bf16.msra.mxu0 0
      %470 = vmatprep.subr.bf16.mxu0 0
      %471 = vmatpush1.bf16.msra.mxu0 0
      %472 = vmatprep.subr.bf16.mxu0 0
      %473 = vmatpush1.bf16.msra.mxu0 0
      %474 = vmatprep.subr.bf16.mxu0 0
      %475 = vmatpush1.bf16.msra.mxu0 0
      %476 = vmatprep.mubr.bf16.mxu0 0
      %477 = vmatmul.mubr.bf16.gmra.mrb[0].mxu0 %v298
      %v478 = vpop.f32.mrb[0].mxu0
      %v479 = vadd.f32 %v439, %v478
      %v480 = vpop.f32.mrb[0].mxu0
      %v481 = vpop.f32.mrb[0].mxu0
      %v482 = vpop.f32.mrb[0].mxu0
      %483 = vdwg.mxu0
      %484 = vrot.lane.b32.xlu0 %v246, 119
      %v485 = vpop.permute.xlu0 %484
      %v487 = vsel %vm253, %v485, 0
      %489 = vmatprep.subr.bf16.mxu0 0
      %490 = vmatpush1.bf16.msra.mxu0 %v487
      %491 = vmatprep.subr.bf16.mxu0 0
      %492 = vmatpush1.bf16.msra.mxu0 0
      %493 = vmatprep.subr.bf16.mxu0 0
      %494 = vmatpush1.bf16.msra.mxu0 0
      %495 = vmatprep.subr.bf16.mxu0 0
      %496 = vmatpush1.bf16.msra.mxu0 0
      %497 = vmatprep.subr.bf16.mxu0 0
      %498 = vmatpush1.bf16.msra.mxu0 0
      %499 = vmatprep.subr.bf16.mxu0 0
      %500 = vmatpush1.bf16.msra.mxu0 0
      %501 = vmatprep.subr.bf16.mxu0 0
      %502 = vmatpush1.bf16.msra.mxu0 0
      %503 = vmatprep.subr.bf16.mxu0 0
      %504 = vmatpush1.bf16.msra.mxu0 0
      %505 = vmatprep.subr.bf16.mxu0 0
      %506 = vmatpush1.bf16.msra.mxu0 0
      %507 = vmatprep.subr.bf16.mxu0 0
      %508 = vmatpush1.bf16.msra.mxu0 0
      %509 = vmatprep.subr.bf16.mxu0 0
      %510 = vmatpush1.bf16.msra.mxu0 0
      %511 = vmatprep.subr.bf16.mxu0 0
      %512 = vmatpush1.bf16.msra.mxu0 0
      %513 = vmatprep.subr.bf16.mxu0 0
      %514 = vmatpush1.bf16.msra.mxu0 0
      %515 = vmatprep.subr.bf16.mxu0 0
      %516 = vmatpush1.bf16.msra.mxu0 0
      %517 = vmatprep.subr.bf16.mxu0 0
      %518 = vmatpush1.bf16.msra.mxu0 0
      %519 = vmatprep.subr.bf16.mxu0 0
      %520 = vmatpush1.bf16.msra.mxu0 0
      %521 = vmatprep.mubr.bf16.mxu0 0
      %522 = vmatmul.mubr.bf16.gmra.mrb[0].mxu0 %v346
      %v523 = vpop.f32.mrb[0].mxu0
      %v524 = vadd.f32 0.0, %v523
      %v525 = vpop.f32.mrb[0].mxu0
      %v526 = vpop.f32.mrb[0].mxu0
      %v527 = vpop.f32.mrb[0].mxu0
      %528 = vdwg.mxu0
      %v529 = vadd.f32 %v479, %v524
      %v530 = vmul.f32 %v529, %v395
      %v531 = vadd.f32 %v530, %v401
      %v532 = vmax.f32 %v403, %v531
      %v533 = vld [vmem:[%s223] sm:$0xc]
      %v534 = vld [vmem:[%s223 + $0x4] sm:$0xf]
      %v537 = vunpack.c.l.b16 %v533
      %v538 = vunpack.c.l.b16 %v534
      %v539 = vpack.c.b16 %v538, %v537
      %v540 = vrot.slane %v539, 2
      %541 = vrot.lane.b32.xlu0 %v540, 120
      %v542 = vpop.permute.xlu0 %541
      %v544 = vsel %vm253, %v542, 0
      %546 = vmatprep.subr.bf16.mxu0 0
      %547 = vmatpush1.bf16.msra.mxu0 %v544
      %548 = vmatprep.subr.bf16.mxu0 0
      %549 = vmatpush1.bf16.msra.mxu0 0
      %550 = vmatprep.subr.bf16.mxu0 0
      %551 = vmatpush1.bf16.msra.mxu0 0
      %552 = vmatprep.subr.bf16.mxu0 0
      %553 = vmatpush1.bf16.msra.mxu0 0
      %554 = vmatprep.subr.bf16.mxu0 0
      %555 = vmatpush1.bf16.msra.mxu0 0
      %556 = vmatprep.subr.bf16.mxu0 0
      %557 = vmatpush1.bf16.msra.mxu0 0
      %558 = vmatprep.subr.bf16.mxu0 0
      %559 = vmatpush1.bf16.msra.mxu0 0
      %560 = vmatprep.subr.bf16.mxu0 0
      %561 = vmatpush1.bf16.msra.mxu0 0
      %562 = vmatprep.subr.bf16.mxu0 0
      %563 = vmatpush1.bf16.msra.mxu0 0
      %564 = vmatprep.subr.bf16.mxu0 0
      %565 = vmatpush1.bf16.msra.mxu0 0
      %566 = vmatprep.subr.bf16.mxu0 0
      %567 = vmatpush1.bf16.msra.mxu0 0
      %568 = vmatprep.subr.bf16.mxu0 0
      %569 = vmatpush1.bf16.msra.mxu0 0
      %570 = vmatprep.subr.bf16.mxu0 0
      %571 = vmatpush1.bf16.msra.mxu0 0
      %572 = vmatprep.subr.bf16.mxu0 0
      %573 = vmatpush1.bf16.msra.mxu0 0
      %574 = vmatprep.subr.bf16.mxu0 0
      %575 = vmatpush1.bf16.msra.mxu0 0
      %576 = vmatprep.subr.bf16.mxu0 0
      %577 = vmatpush1.bf16.msra.mxu0 0
      %578 = vmatprep.mubr.bf16.mxu0 0
      %579 = vmatmul.mubr.bf16.gmra.mrb[0].mxu0 %v251
      %v580 = vpop.f32.mrb[0].mxu0
      %v581 = vadd.f32 0.0, %v580
      %v582 = vpop.f32.mrb[0].mxu0
      %v583 = vpop.f32.mrb[0].mxu0
      %v584 = vpop.f32.mrb[0].mxu0
      %585 = vdwg.mxu0
      %v587 = vsel %vm253, %v540, 0
      %589 = vmatprep.subr.bf16.mxu0 0
      %590 = vmatpush1.bf16.msra.mxu0 %v587
      %591 = vmatprep.subr.bf16.mxu0 0
      %592 = vmatpush1.bf16.msra.mxu0 0
      %593 = vmatprep.subr.bf16.mxu0 0
      %594 = vmatpush1.bf16.msra.mxu0 0
      %595 = vmatprep.subr.bf16.mxu0 0
      %596 = vmatpush1.bf16.msra.mxu0 0
      %597 = vmatprep.subr.bf16.mxu0 0
      %598 = vmatpush1.bf16.msra.mxu0 0
      %599 = vmatprep.subr.bf16.mxu0 0
      %600 = vmatpush1.bf16.msra.mxu0 0
      %601 = vmatprep.subr.bf16.mxu0 0
      %602 = vmatpush1.bf16.msra.mxu0 0
      %603 = vmatprep.subr.bf16.mxu0 0
      %604 = vmatpush1.bf16.msra.mxu0 0
      %605 = vmatprep.subr.bf16.mxu0 0
      %606 = vmatpush1.bf16.msra.mxu0 0
      %607 = vmatprep.subr.bf16.mxu0 0
      %608 = vmatpush1.bf16.msra.mxu0 0
      %609 = vmatprep.subr.bf16.mxu0 0
      %610 = vmatpush1.bf16.msra.mxu0 0
      %611 = vmatprep.subr.bf16.mxu0 0
      %612 = vmatpush1.bf16.msra.mxu0 0
      %613 = vmatprep.subr.bf16.mxu0 0
      %614 = vmatpush1.bf16.msra.mxu0 0
      %615 = vmatprep.subr.bf16.mxu0 0
      %616 = vmatpush1.bf16.msra.mxu0 0
      %617 = vmatprep.subr.bf16.mxu0 0
      %618 = vmatpush1.bf16.msra.mxu0 0
      %619 = vmatprep.subr.bf16.mxu0 0
      %620 = vmatpush1.bf16.msra.mxu0 0
      %621 = vmatprep.mubr.bf16.mxu0 0
      %622 = vmatmul.mubr.bf16.gmra.mrb[0].mxu0 %v298
      %v623 = vpop.f32.mrb[0].mxu0
      %v624 = vadd.f32 %v581, %v623
      %v625 = vpop.f32.mrb[0].mxu0
      %v626 = vpop.f32.mrb[0].mxu0
      %v627 = vpop.f32.mrb[0].mxu0
      %628 = vdwg.mxu0
      %629 = vrot.lane.b32.xlu0 %v540, 127
      %v630 = vpop.permute.xlu0 %629
      %v632 = vsel %vm253, %v630, 0
      %634 = vmatprep.subr.bf16.mxu0 0
      %635 = vmatpush1.bf16.msra.mxu0 %v632
      %636 = vmatprep.subr.bf16.mxu0 0
      %637 = vmatpush1.bf16.msra.mxu0 0
      %638 = vmatprep.subr.bf16.mxu0 0
      %639 = vmatpush1.bf16.msra.mxu0 0
      %640 = vmatprep.subr.bf16.mxu0 0
      %641 = vmatpush1.bf16.msra.mxu0 0
      %642 = vmatprep.subr.bf16.mxu0 0
      %643 = vmatpush1.bf16.msra.mxu0 0
      %644 = vmatprep.subr.bf16.mxu0 0
      %645 = vmatpush1.bf16.msra.mxu0 0
      %646 = vmatprep.subr.bf16.mxu0 0
      %647 = vmatpush1.bf16.msra.mxu0 0
      %648 = vmatprep.subr.bf16.mxu0 0
      %649 = vmatpush1.bf16.msra.mxu0 0
      %650 = vmatprep.subr.bf16.mxu0 0
      %651 = vmatpush1.bf16.msra.mxu0 0
      %652 = vmatprep.subr.bf16.mxu0 0
      %653 = vmatpush1.bf16.msra.mxu0 0
      %654 = vmatprep.subr.bf16.mxu0 0
      %655 = vmatpush1.bf16.msra.mxu0 0
      %656 = vmatprep.subr.bf16.mxu0 0
      %657 = vmatpush1.bf16.msra.mxu0 0
      %658 = vmatprep.subr.bf16.mxu0 0
      %659 = vmatpush1.bf16.msra.mxu0 0
      %660 = vmatprep.subr.bf16.mxu0 0
      %661 = vmatpush1.bf16.msra.mxu0 0
      %662 = vmatprep.subr.bf16.mxu0 0
      %663 = vmatpush1.bf16.msra.mxu0 0
      %664 = vmatprep.subr.bf16.mxu0 0
      %665 = vmatpush1.bf16.msra.mxu0 0
      %666 = vmatprep.mubr.bf16.mxu0 0
      %667 = vmatmul.mubr.bf16.gmra.mrb[0].mxu0 %v346
      %v668 = vpop.f32.mrb[0].mxu0
      %v669 = vadd.f32 0.0, %v668
      %v670 = vpop.f32.mrb[0].mxu0
      %v671 = vpop.f32.mrb[0].mxu0
      %v672 = vpop.f32.mrb[0].mxu0
      %673 = vdwg.mxu0
      %v674 = vadd.f32 %v624, %v669
      %v675 = vmul.f32 %v674, %v395
      %v676 = vadd.f32 %v675, %v401
      %v677 = vmax.f32 %v532, %v676
      %678 = vmatprep.subr.bf16.mxu0 0
      %679 = vmatpush1.bf16.msra.mxu0 %v632
      %680 = vmatprep.subr.bf16.mxu0 0
      %681 = vmatpush1.bf16.msra.mxu0 0
      %682 = vmatprep.subr.bf16.mxu0 0
      %683 = vmatpush1.bf16.msra.mxu0 0
      %684 = vmatprep.subr.bf16.mxu0 0
      %685 = vmatpush1.bf16.msra.mxu0 0
      %686 = vmatprep.subr.bf16.mxu0 0
      %687 = vmatpush1.bf16.msra.mxu0 0
      %688 = vmatprep.subr.bf16.mxu0 0
      %689 = vmatpush1.bf16.msra.mxu0 0
      %690 = vmatprep.subr.bf16.mxu0 0
      %691 = vmatpush1.bf16.msra.mxu0 0
      %692 = vmatprep.subr.bf16.mxu0 0
      %693 = vmatpush1.bf16.msra.mxu0 0
      %694 = vmatprep.subr.bf16.mxu0 0
      %695 = vmatpush1.bf16.msra.mxu0 0
      %696 = vmatprep.subr.bf16.mxu0 0
      %697 = vmatpush1.bf16.msra.mxu0 0
      %698 = vmatprep.subr.bf16.mxu0 0
      %699 = vmatpush1.bf16.msra.mxu0 0
      %700 = vmatprep.subr.bf16.mxu0 0
      %701 = vmatpush1.bf16.msra.mxu0 0
      %702 = vmatprep.subr.bf16.mxu0 0
      %703 = vmatpush1.bf16.msra.mxu0 0
      %704 = vmatprep.subr.bf16.mxu0 0
      %705 = vmatpush1.bf16.msra.mxu0 0
      %706 = vmatprep.subr.bf16.mxu0 0
      %707 = vmatpush1.bf16.msra.mxu0 0
      %708 = vmatprep.subr.bf16.mxu0 0
      %709 = vmatpush1.bf16.msra.mxu0 0
      %710 = vmatprep.mubr.bf16.mxu0 0
      %711 = vmatmul.mubr.bf16.gmra.mrb[0].mxu0 %v251
      %v712 = vpop.f32.mrb[0].mxu0
      %v713 = vadd.f32 0.0, %v712
      %v714 = vpop.f32.mrb[0].mxu0
      %v715 = vpop.f32.mrb[0].mxu0
      %v716 = vpop.f32.mrb[0].mxu0
      %717 = vdwg.mxu0
      %718 = vmatprep.subr.bf16.mxu0 0
      %719 = vmatpush1.bf16.msra.mxu0 %v544
      %720 = vmatprep.subr.bf16.mxu0 0
      %721 = vmatpush1.bf16.msra.mxu0 0
      %722 = vmatprep.subr.bf16.mxu0 0
      %723 = vmatpush1.bf16.msra.mxu0 0
      %724 = vmatprep.subr.bf16.mxu0 0
      %725 = vmatpush1.bf16.msra.mxu0 0
      %726 = vmatprep.subr.bf16.mxu0 0
      %727 = vmatpush1.bf16.msra.mxu0 0
      %728 = vmatprep.subr.bf16.mxu0 0
      %729 = vmatpush1.bf16.msra.mxu0 0
      %730 = vmatprep.subr.bf16.mxu0 0
      %731 = vmatpush1.bf16.msra.mxu0 0
      %732 = vmatprep.subr.bf16.mxu0 0
      %733 = vmatpush1.bf16.msra.mxu0 0
      %734 = vmatprep.subr.bf16.mxu0 0
      %735 = vmatpush1.bf16.msra.mxu0 0
      %736 = vmatprep.subr.bf16.mxu0 0
      %737 = vmatpush1.bf16.msra.mxu0 0
      %738 = vmatprep.subr.bf16.mxu0 0
      %739 = vmatpush1.bf16.msra.mxu0 0
      %740 = vmatprep.subr.bf16.mxu0 0
      %741 = vmatpush1.bf16.msra.mxu0 0
      %742 = vmatprep.subr.bf16.mxu0 0
      %743 = vmatpush1.bf16.msra.mxu0 0
      %744 = vmatprep.subr.bf16.mxu0 0
      %745 = vmatpush1.bf16.msra.mxu0 0
      %746 = vmatprep.subr.bf16.mxu0 0
      %747 = vmatpush1.bf16.msra.mxu0 0
      %748 = vmatprep.subr.bf16.mxu0 0
      %749 = vmatpush1.bf16.msra.mxu0 0
      %750 = vmatprep.mubr.bf16.mxu0 0
      %751 = vmatmul.mubr.bf16.gmra.mrb[0].mxu0 %v298
      %v752 = vpop.f32.mrb[0].mxu0
      %v753 = vadd.f32 %v713, %v752
      %v754 = vpop.f32.mrb[0].mxu0
      %v755 = vpop.f32.mrb[0].mxu0
      %v756 = vpop.f32.mrb[0].mxu0
      %757 = vdwg.mxu0
      %758 = vrot.lane.b32.xlu0 %v540, 119
      %v759 = vpop.permute.xlu0 %758
      %v761 = vsel %vm253, %v759, 0
      %763 = vmatprep.subr.bf16.mxu0 0
      %764 = vmatpush1.bf16.msra.mxu0 %v761
      %765 = vmatprep.subr.bf16.mxu0 0
      %766 = vmatpush1.bf16.msra.mxu0 0
      %767 = vmatprep.subr.bf16.mxu0 0
      %768 = vmatpush1.bf16.msra.mxu0 0
      %769 = vmatprep.subr.bf16.mxu0 0
      %770 = vmatpush1.bf16.msra.mxu0 0
      %771 = vmatprep.subr.bf16.mxu0 0
      %772 = vmatpush1.bf16.msra.mxu0 0
      %773 = vmatprep.subr.bf16.mxu0 0
      %774 = vmatpush1.bf16.msra.mxu0 0
      %775 = vmatprep.subr.bf16.mxu0 0
      %776 = vmatpush1.bf16.msra.mxu0 0
      %777 = vmatprep.subr.bf16.mxu0 0
      %778 = vmatpush1.bf16.msra.mxu0 0
      %779 = vmatprep.subr.bf16.mxu0 0
      %780 = vmatpush1.bf16.msra.mxu0 0
      %781 = vmatprep.subr.bf16.mxu0 0
      %782 = vmatpush1.bf16.msra.mxu0 0
      %783 = vmatprep.subr.bf16.mxu0 0
      %784 = vmatpush1.bf16.msra.mxu0 0
      %785 = vmatprep.subr.bf16.mxu0 0
      %786 = vmatpush1.bf16.msra.mxu0 0
      %787 = vmatprep.subr.bf16.mxu0 0
      %788 = vmatpush1.bf16.msra.mxu0 0
      %789 = vmatprep.subr.bf16.mxu0 0
      %790 = vmatpush1.bf16.msra.mxu0 0
      %791 = vmatprep.subr.bf16.mxu0 0
      %792 = vmatpush1.bf16.msra.mxu0 0
      %793 = vmatprep.subr.bf16.mxu0 0
      %794 = vmatpush1.bf16.msra.mxu0 0
      %795 = vmatprep.mubr.bf16.mxu0 0
      %796 = vmatmul.mubr.bf16.gmra.mrb[0].mxu0 %v346
      %v797 = vpop.f32.mrb[0].mxu0
      %v798 = vadd.f32 0.0, %v797
      %v799 = vpop.f32.mrb[0].mxu0
      %v800 = vpop.f32.mrb[0].mxu0
      %v801 = vpop.f32.mrb[0].mxu0
      %802 = vdwg.mxu0
      %v803 = vadd.f32 %v753, %v798
      %v804 = vmul.f32 %v803, %v395
      %v805 = vadd.f32 %v804, %v401
      %v806 = vmax.f32 %v677, %v805
      %v808 = vcombine.high %v806, %v806
      %v810 = vunpack.c.l.s4 1966171168
      %v811 = vunpack.c.0.s8 %v810
      %v812 = vlaneseq
      %v813 = vshrl.u32 %v812, 7
      %v814 = vsub.s32 %v811, %v813
      %v815 = vrot.slane %v806, %v814
      %v817 = vunpack.c.l.s4 1966171168
      %v818 = vunpack.c.0.s8 %v817
      %v819 = vlaneseq
      %v820 = vshrl.u32 %v819, 7
      %v821 = vsub.s32 %v818, %v820
      %v822 = vrot.slane %v808, %v821
      %v823 = vcombine.high %v815, %v815
      %v824 = vcombine.high %v822, %v822
      %v826 = vunpack.c.l.s4 1966171168
      %v827 = vunpack.c.0.s8 %v826
      %v828 = vlaneseq
      %v829 = vshrl.u32 %v828, 7
      %v830 = vsub.s32 %v827, %v829
      %v831 = vrot.slane %v815, %v830
      %v833 = vunpack.c.l.s4 1966171168
      %v834 = vunpack.c.0.s8 %v833
      %v835 = vlaneseq
      %v836 = vshrl.u32 %v835, 7
      %v837 = vsub.s32 %v834, %v836
      %v838 = vrot.slane %v822, %v837
      %v840 = vunpack.c.l.s4 1966171168
      %v841 = vunpack.c.0.s8 %v840
      %v842 = vlaneseq
      %v843 = vshrl.u32 %v842, 7
      %v844 = vsub.s32 %v841, %v843
      %v845 = vrot.slane %v823, %v844
      %v847 = vunpack.c.l.s4 1966171168
      %v848 = vunpack.c.0.s8 %v847
      %v849 = vlaneseq
      %v850 = vshrl.u32 %v849, 7
      %v851 = vsub.s32 %v848, %v850
      %v852 = vrot.slane %v824, %v851
      %v853 = vcombine.high %v831, %v831
      %v854 = vcombine.high %v838, %v838
      %v855 = vcombine.high %v845, %v845
      %v856 = vcombine.high %v852, %v852
      %vm865 = vcmask 49152
      %866 = vst.msk [vmem:[%s231] sm:$0x1] %vm865, %v831
      %867 = vst.msk [vmem:[%s231 + $0x8] sm:$0x1] %vm865, %v845
      %868 = vst.msk [vmem:[%s231 + $0x10] sm:$0x1] %vm865, %v853
      %869 = vst.msk [vmem:[%s231 + $0x18] sm:$0x1] %vm865, %v855
      %870 = vst.msk [vmem:[%s231 + $0x20] sm:$0x1] %vm865, %v838
      %871 = vst.msk [vmem:[%s231 + $0x28] sm:$0x1] %vm865, %v852
      %872 = vst.msk [vmem:[%s231 + $0x30] sm:$0x1] %vm865, %v854
      %873 = vst.msk [vmem:[%s231 + $0x38] sm:$0x1] %vm865, %v856
      %v874 = vld [vmem:[%s223 + $0x4] sm:$0xf]
      %v875 = vld [vmem:[%s223 + $0x8] sm:$0x3]
      %v878 = vunpack.c.l.b16 %v874
      %v879 = vunpack.c.l.b16 %v875
      %v880 = vpack.c.b16 %v879, %v878
      %881 = vrot.lane.b32.xlu0 %v880, 120
      %v882 = vpop.permute.xlu0 %881
      %v884 = vsel %vm253, %v882, 0
      %886 = vmatprep.subr.bf16.mxu0 0
      %887 = vmatpush1.bf16.msra.mxu0 %v884
      %888 = vmatprep.subr.bf16.mxu0 0
      %889 = vmatpush1.bf16.msra.mxu0 0
      %890 = vmatprep.subr.bf16.mxu0 0
      %891 = vmatpush1.bf16.msra.mxu0 0
      %892 = vmatprep.subr.bf16.mxu0 0
      %893 = vmatpush1.bf16.msra.mxu0 0
      %894 = vmatprep.subr.bf16.mxu0 0
      %895 = vmatpush1.bf16.msra.mxu0 0
      %896 = vmatprep.subr.bf16.mxu0 0
      %897 = vmatpush1.bf16.msra.mxu0 0
      %898 = vmatprep.subr.bf16.mxu0 0
      %899 = vmatpush1.bf16.msra.mxu0 0
      %900 = vmatprep.subr.bf16.mxu0 0
      %901 = vmatpush1.bf16.msra.mxu0 0
      %902 = vmatprep.subr.bf16.mxu0 0
      %903 = vmatpush1.bf16.msra.mxu0 0
      %904 = vmatprep.subr.bf16.mxu0 0
      %905 = vmatpush1.bf16.msra.mxu0 0
      %906 = vmatprep.subr.bf16.mxu0 0
      %907 = vmatpush1.bf16.msra.mxu0 0
      %908 = vmatprep.subr.bf16.mxu0 0
      %909 = vmatpush1.bf16.msra.mxu0 0
      %910 = vmatprep.subr.bf16.mxu0 0
      %911 = vmatpush1.bf16.msra.mxu0 0
      %912 = vmatprep.subr.bf16.mxu0 0
      %913 = vmatpush1.bf16.msra.mxu0 0
      %914 = vmatprep.subr.bf16.mxu0 0
      %915 = vmatpush1.bf16.msra.mxu0 0
      %916 = vmatprep.subr.bf16.mxu0 0
      %917 = vmatpush1.bf16.msra.mxu0 0
      %918 = vmatprep.mubr.bf16.mxu0 0
      %919 = vmatmul.mubr.bf16.gmra.mrb[0].mxu0 %v251
      %v920 = vpop.f32.mrb[0].mxu0
      %v921 = vadd.f32 0.0, %v920
      %v922 = vpop.f32.mrb[0].mxu0
      %v923 = vpop.f32.mrb[0].mxu0
      %v924 = vpop.f32.mrb[0].mxu0
      %925 = vdwg.mxu0
      %v927 = vsel %vm253, %v880, 0
      %929 = vmatprep.subr.bf16.mxu0 0
      %930 = vmatpush1.bf16.msra.mxu0 %v927
      %931 = vmatprep.subr.bf16.mxu0 0
      %932 = vmatpush1.bf16.msra.mxu0 0
      %933 = vmatprep.subr.bf16.mxu0 0
      %934 = vmatpush1.bf16.msra.mxu0 0
      %935 = vmatprep.subr.bf16.mxu0 0
      %936 = vmatpush1.bf16.msra.mxu0 0
      %937 = vmatprep.subr.bf16.mxu0 0
      %938 = vmatpush1.bf16.msra.mxu0 0
      %939 = vmatprep.subr.bf16.mxu0 0
      %940 = vmatpush1.bf16.msra.mxu0 0
      %941 = vmatprep.subr.bf16.mxu0 0
      %942 = vmatpush1.bf16.msra.mxu0 0
      %943 = vmatprep.subr.bf16.mxu0 0
      %944 = vmatpush1.bf16.msra.mxu0 0
      %945 = vmatprep.subr.bf16.mxu0 0
      %946 = vmatpush1.bf16.msra.mxu0 0
      %947 = vmatprep.subr.bf16.mxu0 0
      %948 = vmatpush1.bf16.msra.mxu0 0
      %949 = vmatprep.subr.bf16.mxu0 0
      %950 = vmatpush1.bf16.msra.mxu0 0
      %951 = vmatprep.subr.bf16.mxu0 0
      %952 = vmatpush1.bf16.msra.mxu0 0
      %953 = vmatprep.subr.bf16.mxu0 0
      %954 = vmatpush1.bf16.msra.mxu0 0
      %955 = vmatprep.subr.bf16.mxu0 0
      %956 = vmatpush1.bf16.msra.mxu0 0
      %957 = vmatprep.subr.bf16.mxu0 0
      %958 = vmatpush1.bf16.msra.mxu0 0
      %959 = vmatprep.subr.bf16.mxu0 0
      %960 = vmatpush1.bf16.msra.mxu0 0
      %961 = vmatprep.mubr.bf16.mxu0 0
      %962 = vmatmul.mubr.bf16.gmra.mrb[0].mxu0 %v298
      %v963 = vpop.f32.mrb[0].mxu0
      %v964 = vadd.f32 %v921, %v963
      %v965 = vpop.f32.mrb[0].mxu0
      %v966 = vpop.f32.mrb[0].mxu0
      %v967 = vpop.f32.mrb[0].mxu0
      %968 = vdwg.mxu0
      %969 = vrot.lane.b32.xlu0 %v880, 127
      %v970 = vpop.permute.xlu0 %969
      %v972 = vsel %vm253, %v970, 0
      %974 = vmatprep.subr.bf16.mxu0 0
      %975 = vmatpush1.bf16.msra.mxu0 %v972
      %976 = vmatprep.subr.bf16.mxu0 0
      %977 = vmatpush1.bf16.msra.mxu0 0
      %978 = vmatprep.subr.bf16.mxu0 0
      %979 = vmatpush1.bf16.msra.mxu0 0
      %980 = vmatprep.subr.bf16.mxu0 0
      %981 = vmatpush1.bf16.msra.mxu0 0
      %982 = vmatprep.subr.bf16.mxu0 0
      %983 = vmatpush1.bf16.msra.mxu0 0
      %984 = vmatprep.subr.bf16.mxu0 0
      %985 = vmatpush1.bf16.msra.mxu0 0
      %986 = vmatprep.subr.bf16.mxu0 0
      %987 = vmatpush1.bf16.msra.mxu0 0
      %988 = vmatprep.subr.bf16.mxu0 0
      %989 = vmatpush1.bf16.msra.mxu0 0
      %990 = vmatprep.subr.bf16.mxu0 0
      %991 = vmatpush1.bf16.msra.mxu0 0
      %992 = vmatprep.subr.bf16.mxu0 0
      %993 = vmatpush1.bf16.msra.mxu0 0
      %994 = vmatprep.subr.bf16.mxu0 0
      %995 = vmatpush1.bf16.msra.mxu0 0
      %996 = vmatprep.subr.bf16.mxu0 0
      %997 = vmatpush1.bf16.msra.mxu0 0
      %998 = vmatprep.subr.bf16.mxu0 0
      %999 = vmatpush1.bf16.msra.mxu0 0
      %1000 = vmatprep.subr.bf16.mxu0 0
      %1001 = vmatpush1.bf16.msra.mxu0 0
      %1002 = vmatprep.subr.bf16.mxu0 0
      %1003 = vmatpush1.bf16.msra.mxu0 0
      %1004 = vmatprep.subr.bf16.mxu0 0
      %1005 = vmatpush1.bf16.msra.mxu0 0
      %1006 = vmatprep.mubr.bf16.mxu0 0
      %1007 = vmatmul.mubr.bf16.gmra.mrb[0].mxu0 %v346
      %v1008 = vpop.f32.mrb[0].mxu0
      %v1009 = vadd.f32 0.0, %v1008
      %v1010 = vpop.f32.mrb[0].mxu0
      %v1011 = vpop.f32.mrb[0].mxu0
      %v1012 = vpop.f32.mrb[0].mxu0
      %1013 = vdwg.mxu0
      %v1014 = vadd.f32 %v964, %v1009
      %v1015 = vmul.f32 %v1014, %v395
      %v1016 = vadd.f32 %v1015, %v401
      %1017 = vmatprep.subr.bf16.mxu0 0
      %1018 = vmatpush1.bf16.msra.mxu0 %v972
      %1019 = vmatprep.subr.bf16.mxu0 0
      %1020 = vmatpush1.bf16.msra.mxu0 0
      %1021 = vmatprep.subr.bf16.mxu0 0
      %1022 = vmatpush1.bf16.msra.mxu0 0
      %1023 = vmatprep.subr.bf16.mxu0 0
      %1024 = vmatpush1.bf16.msra.mxu0 0
      %1025 = vmatprep.subr.bf16.mxu0 0
      %1026 = vmatpush1.bf16.msra.mxu0 0
      %1027 = vmatprep.subr.bf16.mxu0 0
      %1028 = vmatpush1.bf16.msra.mxu0 0
      %1029 = vmatprep.subr.bf16.mxu0 0
      %1030 = vmatpush1.bf16.msra.mxu0 0
      %1031 = vmatprep.subr.bf16.mxu0 0
      %1032 = vmatpush1.bf16.msra.mxu0 0
      %1033 = vmatprep.subr.bf16.mxu0 0
      %1034 = vmatpush1.bf16.msra.mxu0 0
      %1035 = vmatprep.subr.bf16.mxu0 0
      %1036 = vmatpush1.bf16.msra.mxu0 0
      %1037 = vmatprep.subr.bf16.mxu0 0
      %1038 = vmatpush1.bf16.msra.mxu0 0
      %1039 = vmatprep.subr.bf16.mxu0 0
      %1040 = vmatpush1.bf16.msra.mxu0 0
      %1041 = vmatprep.subr.bf16.mxu0 0
      %1042 = vmatpush1.bf16.msra.mxu0 0
      %1043 = vmatprep.subr.bf16.mxu0 0
      %1044 = vmatpush1.bf16.msra.mxu0 0
      %1045 = vmatprep.subr.bf16.mxu0 0
      %1046 = vmatpush1.bf16.msra.mxu0 0
      %1047 = vmatprep.subr.bf16.mxu0 0
      %1048 = vmatpush1.bf16.msra.mxu0 0
      %1049 = vmatprep.mubr.bf16.mxu0 0
      %1050 = vmatmul.mubr.bf16.gmra.mrb[0].mxu0 %v251
      %v1051 = vpop.f32.mrb[0].mxu0
      %v1052 = vadd.f32 0.0, %v1051
      %v1053 = vpop.f32.mrb[0].mxu0
      %v1054 = vpop.f32.mrb[0].mxu0
      %v1055 = vpop.f32.mrb[0].mxu0
      %1056 = vdwg.mxu0
      %1057 = vmatprep.subr.bf16.mxu0 0
      %1058 = vmatpush1.bf16.msra.mxu0 %v884
      %1059 = vmatprep.subr.bf16.mxu0 0
      %1060 = vmatpush1.bf16.msra.mxu0 0
      %1061 = vmatprep.subr.bf16.mxu0 0
      %1062 = vmatpush1.bf16.msra.mxu0 0
      %1063 = vmatprep.subr.bf16.mxu0 0
      %1064 = vmatpush1.bf16.msra.mxu0 0
      %1065 = vmatprep.subr.bf16.mxu0 0
      %1066 = vmatpush1.bf16.msra.mxu0 0
      %1067 = vmatprep.subr.bf16.mxu0 0
      %1068 = vmatpush1.bf16.msra.mxu0 0
      %1069 = vmatprep.subr.bf16.mxu0 0
      %1070 = vmatpush1.bf16.msra.mxu0 0
      %1071 = vmatprep.subr.bf16.mxu0 0
      %1072 = vmatpush1.bf16.msra.mxu0 0
      %1073 = vmatprep.subr.bf16.mxu0 0
      %1074 = vmatpush1.bf16.msra.mxu0 0
      %1075 = vmatprep.subr.bf16.mxu0 0
      %1076 = vmatpush1.bf16.msra.mxu0 0
      %1077 = vmatprep.subr.bf16.mxu0 0
      %1078 = vmatpush1.bf16.msra.mxu0 0
      %1079 = vmatprep.subr.bf16.mxu0 0
      %1080 = vmatpush1.bf16.msra.mxu0 0
      %1081 = vmatprep.subr.bf16.mxu0 0
      %1082 = vmatpush1.bf16.msra.mxu0 0
      %1083 = vmatprep.subr.bf16.mxu0 0
      %1084 = vmatpush1.bf16.msra.mxu0 0
      %1085 = vmatprep.subr.bf16.mxu0 0
      %1086 = vmatpush1.bf16.msra.mxu0 0
      %1087 = vmatprep.subr.bf16.mxu0 0
      %1088 = vmatpush1.bf16.msra.mxu0 0
      %1089 = vmatprep.mubr.bf16.mxu0 0
      %1090 = vmatmul.mubr.bf16.gmra.mrb[0].mxu0 %v298
      %v1091 = vpop.f32.mrb[0].mxu0
      %v1092 = vadd.f32 %v1052, %v1091
      %v1093 = vpop.f32.mrb[0].mxu0
      %v1094 = vpop.f32.mrb[0].mxu0
      %v1095 = vpop.f32.mrb[0].mxu0
      %1096 = vdwg.mxu0
      %1097 = vrot.lane.b32.xlu0 %v880, 119
      %v1098 = vpop.permute.xlu0 %1097
      %v1100 = vsel %vm253, %v1098, 0
      %1102 = vmatprep.subr.bf16.mxu0 0
      %1103 = vmatpush1.bf16.msra.mxu0 %v1100
      %1104 = vmatprep.subr.bf16.mxu0 0
      %1105 = vmatpush1.bf16.msra.mxu0 0
      %1106 = vmatprep.subr.bf16.mxu0 0
      %1107 = vmatpush1.bf16.msra.mxu0 0
      %1108 = vmatprep.subr.bf16.mxu0 0
      %1109 = vmatpush1.bf16.msra.mxu0 0
      %1110 = vmatprep.subr.bf16.mxu0 0
      %1111 = vmatpush1.bf16.msra.mxu0 0
      %1112 = vmatprep.subr.bf16.mxu0 0
      %1113 = vmatpush1.bf16.msra.mxu0 0
      %1114 = vmatprep.subr.bf16.mxu0 0
      %1115 = vmatpush1.bf16.msra.mxu0 0
      %1116 = vmatprep.subr.bf16.mxu0 0
      %1117 = vmatpush1.bf16.msra.mxu0 0
      %1118 = vmatprep.subr.bf16.mxu0 0
      %1119 = vmatpush1.bf16.msra.mxu0 0
      %1120 = vmatprep.subr.bf16.mxu0 0
      %1121 = vmatpush1.bf16.msra.mxu0 0
      %1122 = vmatprep.subr.bf16.mxu0 0
      %1123 = vmatpush1.bf16.msra.mxu0 0
      %1124 = vmatprep.subr.bf16.mxu0 0
      %1125 = vmatpush1.bf16.msra.mxu0 0
      %1126 = vmatprep.subr.bf16.mxu0 0
      %1127 = vmatpush1.bf16.msra.mxu0 0
      %1128 = vmatprep.subr.bf16.mxu0 0
      %1129 = vmatpush1.bf16.msra.mxu0 0
      %1130 = vmatprep.subr.bf16.mxu0 0
      %1131 = vmatpush1.bf16.msra.mxu0 0
      %1132 = vmatprep.subr.bf16.mxu0 0
      %1133 = vmatpush1.bf16.msra.mxu0 0
      %1134 = vmatprep.mubr.bf16.mxu0 0
      %1135 = vmatmul.mubr.bf16.gmra.mrb[0].mxu0 %v346
      %v1136 = vpop.f32.mrb[0].mxu0
      %v1137 = vadd.f32 0.0, %v1136
      %v1138 = vpop.f32.mrb[0].mxu0
      %v1139 = vpop.f32.mrb[0].mxu0
      %v1140 = vpop.f32.mrb[0].mxu0
      %1141 = vdwg.mxu0
      %v1142 = vadd.f32 %v1092, %v1137
      %v1143 = vmul.f32 %v1142, %v395
      %v1144 = vadd.f32 %v1143, %v401
      %v1145 = vmax.f32 %v1016, %v1144
      %v1146 = vld [vmem:[%s223 + $0x4] sm:$0xc]
      %v1147 = vld [vmem:[%s223 + $0x8] sm:$0xf]
      %v1150 = vunpack.c.l.b16 %v1146
      %v1151 = vunpack.c.l.b16 %v1147
      %v1152 = vpack.c.b16 %v1151, %v1150
      %v1153 = vrot.slane %v1152, 2
      %1154 = vrot.lane.b32.xlu0 %v1153, 120
      %v1155 = vpop.permute.xlu0 %1154
      %v1157 = vsel %vm253, %v1155, 0
      %1159 = vmatprep.subr.bf16.mxu0 0
      %1160 = vmatpush1.bf16.msra.mxu0 %v1157
      %1161 = vmatprep.subr.bf16.mxu0 0
      %1162 = vmatpush1.bf16.msra.mxu0 0
      %1163 = vmatprep.subr.bf16.mxu0 0
      %1164 = vmatpush1.bf16.msra.mxu0 0
      %1165 = vmatprep.subr.bf16.mxu0 0
      %1166 = vmatpush1.bf16.msra.mxu0 0
      %1167 = vmatprep.subr.bf16.mxu0 0
      %1168 = vmatpush1.bf16.msra.mxu0 0
      %1169 = vmatprep.subr.bf16.mxu0 0
      %1170 = vmatpush1.bf16.msra.mxu0 0
      %1171 = vmatprep.subr.bf16.mxu0 0
      %1172 = vmatpush1.bf16.msra.mxu0 0
      %1173 = vmatprep.subr.bf16.mxu0 0
      %1174 = vmatpush1.bf16.msra.mxu0 0
      %1175 = vmatprep.subr.bf16.mxu0 0
      %1176 = vmatpush1.bf16.msra.mxu0 0
      %1177 = vmatprep.subr.bf16.mxu0 0
      %1178 = vmatpush1.bf16.msra.mxu0 0
      %1179 = vmatprep.subr.bf16.mxu0 0
      %1180 = vmatpush1.bf16.msra.mxu0 0
      %1181 = vmatprep.subr.bf16.mxu0 0
      %1182 = vmatpush1.bf16.msra.mxu0 0
      %1183 = vmatprep.subr.bf16.mxu0 0
      %1184 = vmatpush1.bf16.msra.mxu0 0
      %1185 = vmatprep.subr.bf16.mxu0 0
      %1186 = vmatpush1.bf16.msra.mxu0 0
      %1187 = vmatprep.subr.bf16.mxu0 0
      %1188 = vmatpush1.bf16.msra.mxu0 0
      %1189 = vmatprep.subr.bf16.mxu0 0
      %1190 = vmatpush1.bf16.msra.mxu0 0
      %1191 = vmatprep.mubr.bf16.mxu0 0
      %1192 = vmatmul.mubr.bf16.gmra.mrb[0].mxu0 %v251
      %v1193 = vpop.f32.mrb[0].mxu0
      %v1194 = vadd.f32 0.0, %v1193
      %v1195 = vpop.f32.mrb[0].mxu0
      %v1196 = vpop.f32.mrb[0].mxu0
      %v1197 = vpop.f32.mrb[0].mxu0
      %1198 = vdwg.mxu0
      %v1200 = vsel %vm253, %v1153, 0
      %1202 = vmatprep.subr.bf16.mxu0 0
      %1203 = vmatpush1.bf16.msra.mxu0 %v1200
      %1204 = vmatprep.subr.bf16.mxu0 0
      %1205 = vmatpush1.bf16.msra.mxu0 0
      %1206 = vmatprep.subr.bf16.mxu0 0
      %1207 = vmatpush1.bf16.msra.mxu0 0
      %1208 = vmatprep.subr.bf16.mxu0 0
      %1209 = vmatpush1.bf16.msra.mxu0 0
      %1210 = vmatprep.subr.bf16.mxu0 0
      %1211 = vmatpush1.bf16.msra.mxu0 0
      %1212 = vmatprep.subr.bf16.mxu0 0
      %1213 = vmatpush1.bf16.msra.mxu0 0
      %1214 = vmatprep.subr.bf16.mxu0 0
      %1215 = vmatpush1.bf16.msra.mxu0 0
      %1216 = vmatprep.subr.bf16.mxu0 0
      %1217 = vmatpush1.bf16.msra.mxu0 0
      %1218 = vmatprep.subr.bf16.mxu0 0
      %1219 = vmatpush1.bf16.msra.mxu0 0
      %1220 = vmatprep.subr.bf16.mxu0 0
      %1221 = vmatpush1.bf16.msra.mxu0 0
      %1222 = vmatprep.subr.bf16.mxu0 0
      %1223 = vmatpush1.bf16.msra.mxu0 0
      %1224 = vmatprep.subr.bf16.mxu0 0
      %1225 = vmatpush1.bf16.msra.mxu0 0
      %1226 = vmatprep.subr.bf16.mxu0 0
      %1227 = vmatpush1.bf16.msra.mxu0 0
      %1228 = vmatprep.subr.bf16.mxu0 0
      %1229 = vmatpush1.bf16.msra.mxu0 0
      %1230 = vmatprep.subr.bf16.mxu0 0
      %1231 = vmatpush1.bf16.msra.mxu0 0
      %1232 = vmatprep.subr.bf16.mxu0 0
      %1233 = vmatpush1.bf16.msra.mxu0 0
      %1234 = vmatprep.mubr.bf16.mxu0 0
      %1235 = vmatmul.mubr.bf16.gmra.mrb[0].mxu0 %v298
      %v1236 = vpop.f32.mrb[0].mxu0
      %v1237 = vadd.f32 %v1194, %v1236
      %v1238 = vpop.f32.mrb[0].mxu0
      %v1239 = vpop.f32.mrb[0].mxu0
      %v1240 = vpop.f32.mrb[0].mxu0
      %1241 = vdwg.mxu0
      %1242 = vrot.lane.b32.xlu0 %v1153, 127
      %v1243 = vpop.permute.xlu0 %1242
      %v1245 = vsel %vm253, %v1243, 0
      %1247 = vmatprep.subr.bf16.mxu0 0
      %1248 = vmatpush1.bf16.msra.mxu0 %v1245
      %1249 = vmatprep.subr.bf16.mxu0 0
      %1250 = vmatpush1.bf16.msra.mxu0 0
      %1251 = vmatprep.subr.bf16.mxu0 0
      %1252 = vmatpush1.bf16.msra.mxu0 0
      %1253 = vmatprep.subr.bf16.mxu0 0
      %1254 = vmatpush1.bf16.msra.mxu0 0
      %1255 = vmatprep.subr.bf16.mxu0 0
      %1256 = vmatpush1.bf16.msra.mxu0 0
      %1257 = vmatprep.subr.bf16.mxu0 0
      %1258 = vmatpush1.bf16.msra.mxu0 0
      %1259 = vmatprep.subr.bf16.mxu0 0
      %1260 = vmatpush1.bf16.msra.mxu0 0
      %1261 = vmatprep.subr.bf16.mxu0 0
      %1262 = vmatpush1.bf16.msra.mxu0 0
      %1263 = vmatprep.subr.bf16.mxu0 0
      %1264 = vmatpush1.bf16.msra.mxu0 0
      %1265 = vmatprep.subr.bf16.mxu0 0
      %1266 = vmatpush1.bf16.msra.mxu0 0
      %1267 = vmatprep.subr.bf16.mxu0 0
      %1268 = vmatpush1.bf16.msra.mxu0 0
      %1269 = vmatprep.subr.bf16.mxu0 0
      %1270 = vmatpush1.bf16.msra.mxu0 0
      %1271 = vmatprep.subr.bf16.mxu0 0
      %1272 = vmatpush1.bf16.msra.mxu0 0
      %1273 = vmatprep.subr.bf16.mxu0 0
      %1274 = vmatpush1.bf16.msra.mxu0 0
      %1275 = vmatprep.subr.bf16.mxu0 0
      %1276 = vmatpush1.bf16.msra.mxu0 0
      %1277 = vmatprep.subr.bf16.mxu0 0
      %1278 = vmatpush1.bf16.msra.mxu0 0
      %1279 = vmatprep.mubr.bf16.mxu0 0
      %1280 = vmatmul.mubr.bf16.gmra.mrb[0].mxu0 %v346
      %v1281 = vpop.f32.mrb[0].mxu0
      %v1282 = vadd.f32 0.0, %v1281
      %v1283 = vpop.f32.mrb[0].mxu0
      %v1284 = vpop.f32.mrb[0].mxu0
      %v1285 = vpop.f32.mrb[0].mxu0
      %1286 = vdwg.mxu0
      %v1287 = vadd.f32 %v1237, %v1282
      %v1288 = vmul.f32 %v1287, %v395
      %v1289 = vadd.f32 %v1288, %v401
      %v1290 = vmax.f32 %v1145, %v1289
      %1291 = vmatprep.subr.bf16.mxu0 0
      %1292 = vmatpush1.bf16.msra.mxu0 %v1245
      %1293 = vmatprep.subr.bf16.mxu0 0
      %1294 = vmatpush1.bf16.msra.mxu0 0
      %1295 = vmatprep.subr.bf16.mxu0 0
      %1296 = vmatpush1.bf16.msra.mxu0 0
      %1297 = vmatprep.subr.bf16.mxu0 0
      %1298 = vmatpush1.bf16.msra.mxu0 0
      %1299 = vmatprep.subr.bf16.mxu0 0
      %1300 = vmatpush1.bf16.msra.mxu0 0
      %1301 = vmatprep.subr.bf16.mxu0 0
      %1302 = vmatpush1.bf16.msra.mxu0 0
      %1303 = vmatprep.subr.bf16.mxu0 0
      %1304 = vmatpush1.bf16.msra.mxu0 0
      %1305 = vmatprep.subr.bf16.mxu0 0
      %1306 = vmatpush1.bf16.msra.mxu0 0
      %1307 = vmatprep.subr.bf16.mxu0 0
      %1308 = vmatpush1.bf16.msra.mxu0 0
      %1309 = vmatprep.subr.bf16.mxu0 0
      %1310 = vmatpush1.bf16.msra.mxu0 0
      %1311 = vmatprep.subr.bf16.mxu0 0
      %1312 = vmatpush1.bf16.msra.mxu0 0
      %1313 = vmatprep.subr.bf16.mxu0 0
      %1314 = vmatpush1.bf16.msra.mxu0 0
      %1315 = vmatprep.subr.bf16.mxu0 0
      %1316 = vmatpush1.bf16.msra.mxu0 0
      %1317 = vmatprep.subr.bf16.mxu0 0
      %1318 = vmatpush1.bf16.msra.mxu0 0
      %1319 = vmatprep.subr.bf16.mxu0 0
      %1320 = vmatpush1.bf16.msra.mxu0 0
      %1321 = vmatprep.subr.bf16.mxu0 0
      %1322 = vmatpush1.bf16.msra.mxu0 0
      %1323 = vmatprep.mubr.bf16.mxu0 0
      %1324 = vmatmul.mubr.bf16.gmra.mrb[0].mxu0 %v251
      %v1325 = vpop.f32.mrb[0].mxu0
      %v1326 = vadd.f32 0.0, %v1325
      %v1327 = vpop.f32.mrb[0].mxu0
      %v1328 = vpop.f32.mrb[0].mxu0
      %v1329 = vpop.f32.mrb[0].mxu0
      %1330 = vdwg.mxu0
      %1331 = vmatprep.subr.bf16.mxu0 0
      %1332 = vmatpush1.bf16.msra.mxu0 %v1157
      %1333 = vmatprep.subr.bf16.mxu0 0
      %1334 = vmatpush1.bf16.msra.mxu0 0
      %1335 = vmatprep.subr.bf16.mxu0 0
      %1336 = vmatpush1.bf16.msra.mxu0 0
      %1337 = vmatprep.subr.bf16.mxu0 0
      %1338 = vmatpush1.bf16.msra.mxu0 0
      %1339 = vmatprep.subr.bf16.mxu0 0
      %1340 = vmatpush1.bf16.msra.mxu0 0
      %1341 = vmatprep.subr.bf16.mxu0 0
      %1342 = vmatpush1.bf16.msra.mxu0 0
      %1343 = vmatprep.subr.bf16.mxu0 0
      %1344 = vmatpush1.bf16.msra.mxu0 0
      %1345 = vmatprep.subr.bf16.mxu0 0
      %1346 = vmatpush1.bf16.msra.mxu0 0
      %1347 = vmatprep.subr.bf16.mxu0 0
      %1348 = vmatpush1.bf16.msra.mxu0 0
      %1349 = vmatprep.subr.bf16.mxu0 0
      %1350 = vmatpush1.bf16.msra.mxu0 0
      %1351 = vmatprep.subr.bf16.mxu0 0
      %1352 = vmatpush1.bf16.msra.mxu0 0
      %1353 = vmatprep.subr.bf16.mxu0 0
      %1354 = vmatpush1.bf16.msra.mxu0 0
      %1355 = vmatprep.subr.bf16.mxu0 0
      %1356 = vmatpush1.bf16.msra.mxu0 0
      %1357 = vmatprep.subr.bf16.mxu0 0
      %1358 = vmatpush1.bf16.msra.mxu0 0
      %1359 = vmatprep.subr.bf16.mxu0 0
      %1360 = vmatpush1.bf16.msra.mxu0 0
      %1361 = vmatprep.subr.bf16.mxu0 0
      %1362 = vmatpush1.bf16.msra.mxu0 0
      %1363 = vmatprep.mubr.bf16.mxu0 0
      %1364 = vmatmul.mubr.bf16.gmra.mrb[0].mxu0 %v298
      %v1365 = vpop.f32.mrb[0].mxu0
      %v1366 = vadd.f32 %v1326, %v1365
      %v1367 = vpop.f32.mrb[0].mxu0
      %v1368 = vpop.f32.mrb[0].mxu0
      %v1369 = vpop.f32.mrb[0].mxu0
      %1370 = vdwg.mxu0
      %1371 = vrot.lane.b32.xlu0 %v1153, 119
      %v1372 = vpop.permute.xlu0 %1371
      %v1374 = vsel %vm253, %v1372, 0
      %1376 = vmatprep.subr.bf16.mxu0 0
      %1377 = vmatpush1.bf16.msra.mxu0 %v1374
      %1378 = vmatprep.subr.bf16.mxu0 0
      %1379 = vmatpush1.bf16.msra.mxu0 0
      %1380 = vmatprep.subr.bf16.mxu0 0
      %1381 = vmatpush1.bf16.msra.mxu0 0
      %1382 = vmatprep.subr.bf16.mxu0 0
      %1383 = vmatpush1.bf16.msra.mxu0 0
      %1384 = vmatprep.subr.bf16.mxu0 0
      %1385 = vmatpush1.bf16.msra.mxu0 0
      %1386 = vmatprep.subr.bf16.mxu0 0
      %1387 = vmatpush1.bf16.msra.mxu0 0
      %1388 = vmatprep.subr.bf16.mxu0 0
      %1389 = vmatpush1.bf16.msra.mxu0 0
      %1390 = vmatprep.subr.bf16.mxu0 0
      %1391 = vmatpush1.bf16.msra.mxu0 0
      %1392 = vmatprep.subr.bf16.mxu0 0
      %1393 = vmatpush1.bf16.msra.mxu0 0
      %1394 = vmatprep.subr.bf16.mxu0 0
      %1395 = vmatpush1.bf16.msra.mxu0 0
      %1396 = vmatprep.subr.bf16.mxu0 0
      %1397 = vmatpush1.bf16.msra.mxu0 0
      %1398 = vmatprep.subr.bf16.mxu0 0
      %1399 = vmatpush1.bf16.msra.mxu0 0
      %1400 = vmatprep.subr.bf16.mxu0 0
      %1401 = vmatpush1.bf16.msra.mxu0 0
      %1402 = vmatprep.subr.bf16.mxu0 0
      %1403 = vmatpush1.bf16.msra.mxu0 0
      %1404 = vmatprep.subr.bf16.mxu0 0
      %1405 = vmatpush1.bf16.msra.mxu0 0
      %1406 = vmatprep.subr.bf16.mxu0 0
      %1407 = vmatpush1.bf16.msra.mxu0 0
      %1408 = vmatprep.mubr.bf16.mxu0 0
      %1409 = vmatmul.mubr.bf16.gmra.mrb[0].mxu0 %v346
      %v1410 = vpop.f32.mrb[0].mxu0
      %v1411 = vadd.f32 0.0, %v1410
      %v1412 = vpop.f32.mrb[0].mxu0
      %v1413 = vpop.f32.mrb[0].mxu0
      %v1414 = vpop.f32.mrb[0].mxu0
      %1415 = vdwg.mxu0
      %v1416 = vadd.f32 %v1366, %v1411
      %v1417 = vmul.f32 %v1416, %v395
      %v1418 = vadd.f32 %v1417, %v401
      %v1419 = vmax.f32 %v1290, %v1418
      %v1421 = vcombine.high %v1419, %v1419
      %v1423 = vunpack.c.l.s4 1966171168
      %v1424 = vunpack.c.0.s8 %v1423
      %v1425 = vlaneseq
      %v1426 = vshrl.u32 %v1425, 7
      %v1427 = vsub.s32 %v1424, %v1426
      %v1428 = vrot.slane %v1419, %v1427
      %v1430 = vunpack.c.l.s4 1966171168
      %v1431 = vunpack.c.0.s8 %v1430
      %v1432 = vlaneseq
      %v1433 = vshrl.u32 %v1432, 7
      %v1434 = vsub.s32 %v1431, %v1433
      %v1435 = vrot.slane %v1421, %v1434
      %v1436 = vcombine.high %v1428, %v1428
      %v1437 = vcombine.high %v1435, %v1435
      %v1439 = vunpack.c.l.s4 1966171168
      %v1440 = vunpack.c.0.s8 %v1439
      %v1441 = vlaneseq
      %v1442 = vshrl.u32 %v1441, 7
      %v1443 = vsub.s32 %v1440, %v1442
      %v1444 = vrot.slane %v1428, %v1443
      %v1446 = vunpack.c.l.s4 1966171168
      %v1447 = vunpack.c.0.s8 %v1446
      %v1448 = vlaneseq
      %v1449 = vshrl.u32 %v1448, 7
      %v1450 = vsub.s32 %v1447, %v1449
      %v1451 = vrot.slane %v1435, %v1450
      %v1453 = vunpack.c.l.s4 1966171168
      %v1454 = vunpack.c.0.s8 %v1453
      %v1455 = vlaneseq
      %v1456 = vshrl.u32 %v1455, 7
      %v1457 = vsub.s32 %v1454, %v1456
      %v1458 = vrot.slane %v1436, %v1457
      %v1460 = vunpack.c.l.s4 1966171168
      %v1461 = vunpack.c.0.s8 %v1460
      %v1462 = vlaneseq
      %v1463 = vshrl.u32 %v1462, 7
      %v1464 = vsub.s32 %v1461, %v1463
      %v1465 = vrot.slane %v1437, %v1464
      %v1466 = vcombine.high %v1444, %v1444
      %v1467 = vcombine.high %v1451, %v1451
      %v1468 = vcombine.high %v1458, %v1458
      %v1469 = vcombine.high %v1465, %v1465
      %1478 = vst.msk [vmem:[%s231 + $0x1] sm:$0x1] %vm865, %v1444
      %1479 = vst.msk [vmem:[%s231 + $0x9] sm:$0x1] %vm865, %v1458
      %1480 = vst.msk [vmem:[%s231 + $0x11] sm:$0x1] %vm865, %v1466
      %1481 = vst.msk [vmem:[%s231 + $0x19] sm:$0x1] %vm865, %v1468
      %1482 = vst.msk [vmem:[%s231 + $0x21] sm:$0x1] %vm865, %v1451
      %1483 = vst.msk [vmem:[%s231 + $0x29] sm:$0x1] %vm865, %v1465
      %1484 = vst.msk [vmem:[%s231 + $0x31] sm:$0x1] %vm865, %v1467
      %1485 = vst.msk [vmem:[%s231 + $0x39] sm:$0x1] %vm865, %v1469
      %v1486 = vld [vmem:[%s223 + $0x8] sm:$0xf]
      %v1487 = vld [vmem:[%s223 + $0xc] sm:$0x3]
      %v1490 = vunpack.c.l.b16 %v1486
      %v1491 = vunpack.c.l.b16 %v1487
      %v1492 = vpack.c.b16 %v1491, %v1490
      %1493 = vrot.lane.b32.xlu0 %v1492, 120
      %v1494 = vpop.permute.xlu0 %1493
      %v1496 = vsel %vm253, %v1494, 0
      %1498 = vmatprep.subr.bf16.mxu0 0
      %1499 = vmatpush1.bf16.msra.mxu0 %v1496
      %1500 = vmatprep.subr.bf16.mxu0 0
      %1501 = vmatpush1.bf16.msra.mxu0 0
      %1502 = vmatprep.subr.bf16.mxu0 0
      %1503 = vmatpush1.bf16.msra.mxu0 0
      %1504 = vmatprep.subr.bf16.mxu0 0
      %1505 = vmatpush1.bf16.msra.mxu0 0
      %1506 = vmatprep.subr.bf16.mxu0 0
      %1507 = vmatpush1.bf16.msra.mxu0 0
      %1508 = vmatprep.subr.bf16.mxu0 0
      %1509 = vmatpush1.bf16.msra.mxu0 0
      %1510 = vmatprep.subr.bf16.mxu0 0
      %1511 = vmatpush1.bf16.msra.mxu0 0
      %1512 = vmatprep.subr.bf16.mxu0 0
      %1513 = vmatpush1.bf16.msra.mxu0 0
      %1514 = vmatprep.subr.bf16.mxu0 0
      %1515 = vmatpush1.bf16.msra.mxu0 0
      %1516 = vmatprep.subr.bf16.mxu0 0
      %1517 = vmatpush1.bf16.msra.mxu0 0
      %1518 = vmatprep.subr.bf16.mxu0 0
      %1519 = vmatpush1.bf16.msra.mxu0 0
      %1520 = vmatprep.subr.bf16.mxu0 0
      %1521 = vmatpush1.bf16.msra.mxu0 0
      %1522 = vmatprep.subr.bf16.mxu0 0
      %1523 = vmatpush1.bf16.msra.mxu0 0
      %1524 = vmatprep.subr.bf16.mxu0 0
      %1525 = vmatpush1.bf16.msra.mxu0 0
      %1526 = vmatprep.subr.bf16.mxu0 0
      %1527 = vmatpush1.bf16.msra.mxu0 0
      %1528 = vmatprep.subr.bf16.mxu0 0
      %1529 = vmatpush1.bf16.msra.mxu0 0
      %1530 = vmatprep.mubr.bf16.mxu0 0
      %1531 = vmatmul.mubr.bf16.gmra.mrb[0].mxu0 %v251
      %v1532 = vpop.f32.mrb[0].mxu0
      %v1533 = vadd.f32 0.0, %v1532
      %v1534 = vpop.f32.mrb[0].mxu0
      %v1535 = vpop.f32.mrb[0].mxu0
      %v1536 = vpop.f32.mrb[0].mxu0
      %1537 = vdwg.mxu0
      %v1539 = vsel %vm253, %v1492, 0
      %1541 = vmatprep.subr.bf16.mxu0 0
      %1542 = vmatpush1.bf16.msra.mxu0 %v1539
      %1543 = vmatprep.subr.bf16.mxu0 0
      %1544 = vmatpush1.bf16.msra.mxu0 0
      %1545 = vmatprep.subr.bf16.mxu0 0
      %1546 = vmatpush1.bf16.msra.mxu0 0
      %1547 = vmatprep.subr.bf16.mxu0 0
      %1548 = vmatpush1.bf16.msra.mxu0 0
      %1549 = vmatprep.subr.bf16.mxu0 0
      %1550 = vmatpush1.bf16.msra.mxu0 0
      %1551 = vmatprep.subr.bf16.mxu0 0
      %1552 = vmatpush1.bf16.msra.mxu0 0
      %1553 = vmatprep.subr.bf16.mxu0 0
      %1554 = vmatpush1.bf16.msra.mxu0 0
      %1555 = vmatprep.subr.bf16.mxu0 0
      %1556 = vmatpush1.bf16.msra.mxu0 0
      %1557 = vmatprep.subr.bf16.mxu0 0
      %1558 = vmatpush1.bf16.msra.mxu0 0
      %1559 = vmatprep.subr.bf16.mxu0 0
      %1560 = vmatpush1.bf16.msra.mxu0 0
      %1561 = vmatprep.subr.bf16.mxu0 0
      %1562 = vmatpush1.bf16.msra.mxu0 0
      %1563 = vmatprep.subr.bf16.mxu0 0
      %1564 = vmatpush1.bf16.msra.mxu0 0
      %1565 = vmatprep.subr.bf16.mxu0 0
      %1566 = vmatpush1.bf16.msra.mxu0 0
      %1567 = vmatprep.subr.bf16.mxu0 0
      %1568 = vmatpush1.bf16.msra.mxu0 0
      %1569 = vmatprep.subr.bf16.mxu0 0
      %1570 = vmatpush1.bf16.msra.mxu0 0
      %1571 = vmatprep.subr.bf16.mxu0 0
      %1572 = vmatpush1.bf16.msra.mxu0 0
      %1573 = vmatprep.mubr.bf16.mxu0 0
      %1574 = vmatmul.mubr.bf16.gmra.mrb[0].mxu0 %v298
      %v1575 = vpop.f32.mrb[0].mxu0
      %v1576 = vadd.f32 %v1533, %v1575
      %v1577 = vpop.f32.mrb[0].mxu0
      %v1578 = vpop.f32.mrb[0].mxu0
      %v1579 = vpop.f32.mrb[0].mxu0
      %1580 = vdwg.mxu0
      %1581 = vrot.lane.b32.xlu0 %v1492, 127
      %v1582 = vpop.permute.xlu0 %1581
      %v1584 = vsel %vm253, %v1582, 0
      %1586 = vmatprep.subr.bf16.mxu0 0
      %1587 = vmatpush1.bf16.msra.mxu0 %v1584
      %1588 = vmatprep.subr.bf16.mxu0 0
      %1589 = vmatpush1.bf16.msra.mxu0 0
      %1590 = vmatprep.subr.bf16.mxu0 0
      %1591 = vmatpush1.bf16.msra.mxu0 0
      %1592 = vmatprep.subr.bf16.mxu0 0
      %1593 = vmatpush1.bf16.msra.mxu0 0
      %1594 = vmatprep.subr.bf16.mxu0 0
      %1595 = vmatpush1.bf16.msra.mxu0 0
      %1596 = vmatprep.subr.bf16.mxu0 0
      %1597 = vmatpush1.bf16.msra.mxu0 0
      %1598 = vmatprep.subr.bf16.mxu0 0
      %1599 = vmatpush1.bf16.msra.mxu0 0
      %1600 = vmatprep.subr.bf16.mxu0 0
      %1601 = vmatpush1.bf16.msra.mxu0 0
      %1602 = vmatprep.subr.bf16.mxu0 0
      %1603 = vmatpush1.bf16.msra.mxu0 0
      %1604 = vmatprep.subr.bf16.mxu0 0
      %1605 = vmatpush1.bf16.msra.mxu0 0
      %1606 = vmatprep.subr.bf16.mxu0 0
      %1607 = vmatpush1.bf16.msra.mxu0 0
      %1608 = vmatprep.subr.bf16.mxu0 0
      %1609 = vmatpush1.bf16.msra.mxu0 0
      %1610 = vmatprep.subr.bf16.mxu0 0
      %1611 = vmatpush1.bf16.msra.mxu0 0
      %1612 = vmatprep.subr.bf16.mxu0 0
      %1613 = vmatpush1.bf16.msra.mxu0 0
      %1614 = vmatprep.subr.bf16.mxu0 0
      %1615 = vmatpush1.bf16.msra.mxu0 0
      %1616 = vmatprep.subr.bf16.mxu0 0
      %1617 = vmatpush1.bf16.msra.mxu0 0
      %1618 = vmatprep.mubr.bf16.mxu0 0
      %1619 = vmatmul.mubr.bf16.gmra.mrb[0].mxu0 %v346
      %v1620 = vpop.f32.mrb[0].mxu0
      %v1621 = vadd.f32 0.0, %v1620
      %v1622 = vpop.f32.mrb[0].mxu0
      %v1623 = vpop.f32.mrb[0].mxu0
      %v1624 = vpop.f32.mrb[0].mxu0
      %1625 = vdwg.mxu0
      %v1626 = vadd.f32 %v1576, %v1621
      %v1627 = vmul.f32 %v1626, %v395
      %v1628 = vadd.f32 %v1627, %v401
      %1629 = vmatprep.subr.bf16.mxu0 0
      %1630 = vmatpush1.bf16.msra.mxu0 %v1584
      %1631 = vmatprep.subr.bf16.mxu0 0
      %1632 = vmatpush1.bf16.msra.mxu0 0
      %1633 = vmatprep.subr.bf16.mxu0 0
      %1634 = vmatpush1.bf16.msra.mxu0 0
      %1635 = vmatprep.subr.bf16.mxu0 0
      %1636 = vmatpush1.bf16.msra.mxu0 0
      %1637 = vmatprep.subr.bf16.mxu0 0
      %1638 = vmatpush1.bf16.msra.mxu0 0
      %1639 = vmatprep.subr.bf16.mxu0 0
      %1640 = vmatpush1.bf16.msra.mxu0 0
      %1641 = vmatprep.subr.bf16.mxu0 0
      %1642 = vmatpush1.bf16.msra.mxu0 0
      %1643 = vmatprep.subr.bf16.mxu0 0
      %1644 = vmatpush1.bf16.msra.mxu0 0
      %1645 = vmatprep.subr.bf16.mxu0 0
      %1646 = vmatpush1.bf16.msra.mxu0 0
      %1647 = vmatprep.subr.bf16.mxu0 0
      %1648 = vmatpush1.bf16.msra.mxu0 0
      %1649 = vmatprep.subr.bf16.mxu0 0
      %1650 = vmatpush1.bf16.msra.mxu0 0
      %1651 = vmatprep.subr.bf16.mxu0 0
      %1652 = vmatpush1.bf16.msra.mxu0 0
      %1653 = vmatprep.subr.bf16.mxu0 0
      %1654 = vmatpush1.bf16.msra.mxu0 0
      %1655 = vmatprep.subr.bf16.mxu0 0
      %1656 = vmatpush1.bf16.msra.mxu0 0
      %1657 = vmatprep.subr.bf16.mxu0 0
      %1658 = vmatpush1.bf16.msra.mxu0 0
      %1659 = vmatprep.subr.bf16.mxu0 0
      %1660 = vmatpush1.bf16.msra.mxu0 0
      %1661 = vmatprep.mubr.bf16.mxu0 0
      %1662 = vmatmul.mubr.bf16.gmra.mrb[0].mxu0 %v251
      %v1663 = vpop.f32.mrb[0].mxu0
      %v1664 = vadd.f32 0.0, %v1663
      %v1665 = vpop.f32.mrb[0].mxu0
      %v1666 = vpop.f32.mrb[0].mxu0
      %v1667 = vpop.f32.mrb[0].mxu0
      %1668 = vdwg.mxu0
      %1669 = vmatprep.subr.bf16.mxu0 0
      %1670 = vmatpush1.bf16.msra.mxu0 %v1496
      %1671 = vmatprep.subr.bf16.mxu0 0
      %1672 = vmatpush1.bf16.msra.mxu0 0
      %1673 = vmatprep.subr.bf16.mxu0 0
      %1674 = vmatpush1.bf16.msra.mxu0 0
      %1675 = vmatprep.subr.bf16.mxu0 0
      %1676 = vmatpush1.bf16.msra.mxu0 0
      %1677 = vmatprep.subr.bf16.mxu0 0
      %1678 = vmatpush1.bf16.msra.mxu0 0
      %1679 = vmatprep.subr.bf16.mxu0 0
      %1680 = vmatpush1.bf16.msra.mxu0 0
      %1681 = vmatprep.subr.bf16.mxu0 0
      %1682 = vmatpush1.bf16.msra.mxu0 0
      %1683 = vmatprep.subr.bf16.mxu0 0
      %1684 = vmatpush1.bf16.msra.mxu0 0
      %1685 = vmatprep.subr.bf16.mxu0 0
      %1686 = vmatpush1.bf16.msra.mxu0 0
      %1687 = vmatprep.subr.bf16.mxu0 0
      %1688 = vmatpush1.bf16.msra.mxu0 0
      %1689 = vmatprep.subr.bf16.mxu0 0
      %1690 = vmatpush1.bf16.msra.mxu0 0
      %1691 = vmatprep.subr.bf16.mxu0 0
      %1692 = vmatpush1.bf16.msra.mxu0 0
      %1693 = vmatprep.subr.bf16.mxu0 0
      %1694 = vmatpush1.bf16.msra.mxu0 0
      %1695 = vmatprep.subr.bf16.mxu0 0
      %1696 = vmatpush1.bf16.msra.mxu0 0
      %1697 = vmatprep.subr.bf16.mxu0 0
      %1698 = vmatpush1.bf16.msra.mxu0 0
      %1699 = vmatprep.subr.bf16.mxu0 0
      %1700 = vmatpush1.bf16.msra.mxu0 0
      %1701 = vmatprep.mubr.bf16.mxu0 0
      %1702 = vmatmul.mubr.bf16.gmra.mrb[0].mxu0 %v298
      %v1703 = vpop.f32.mrb[0].mxu0
      %v1704 = vadd.f32 %v1664, %v1703
      %v1705 = vpop.f32.mrb[0].mxu0
      %v1706 = vpop.f32.mrb[0].mxu0
      %v1707 = vpop.f32.mrb[0].mxu0
      %1708 = vdwg.mxu0
      %1709 = vrot.lane.b32.xlu0 %v1492, 119
      %v1710 = vpop.permute.xlu0 %1709
      %v1712 = vsel %vm253, %v1710, 0
      %1714 = vmatprep.subr.bf16.mxu0 0
      %1715 = vmatpush1.bf16.msra.mxu0 %v1712
      %1716 = vmatprep.subr.bf16.mxu0 0
      %1717 = vmatpush1.bf16.msra.mxu0 0
      %1718 = vmatprep.subr.bf16.mxu0 0
      %1719 = vmatpush1.bf16.msra.mxu0 0
      %1720 = vmatprep.subr.bf16.mxu0 0
      %1721 = vmatpush1.bf16.msra.mxu0 0
      %1722 = vmatprep.subr.bf16.mxu0 0
      %1723 = vmatpush1.bf16.msra.mxu0 0
      %1724 = vmatprep.subr.bf16.mxu0 0
      %1725 = vmatpush1.bf16.msra.mxu0 0
      %1726 = vmatprep.subr.bf16.mxu0 0
      %1727 = vmatpush1.bf16.msra.mxu0 0
      %1728 = vmatprep.subr.bf16.mxu0 0
      %1729 = vmatpush1.bf16.msra.mxu0 0
      %1730 = vmatprep.subr.bf16.mxu0 0
      %1731 = vmatpush1.bf16.msra.mxu0 0
      %1732 = vmatprep.subr.bf16.mxu0 0
      %1733 = vmatpush1.bf16.msra.mxu0 0
      %1734 = vmatprep.subr.bf16.mxu0 0
      %1735 = vmatpush1.bf16.msra.mxu0 0
      %1736 = vmatprep.subr.bf16.mxu0 0
      %1737 = vmatpush1.bf16.msra.mxu0 0
      %1738 = vmatprep.subr.bf16.mxu0 0
      %1739 = vmatpush1.bf16.msra.mxu0 0
      %1740 = vmatprep.subr.bf16.mxu0 0
      %1741 = vmatpush1.bf16.msra.mxu0 0
      %1742 = vmatprep.subr.bf16.mxu0 0
      %1743 = vmatpush1.bf16.msra.mxu0 0
      %1744 = vmatprep.subr.bf16.mxu0 0
      %1745 = vmatpush1.bf16.msra.mxu0 0
      %1746 = vmatprep.mubr.bf16.mxu0 0
      %1747 = vmatmul.mubr.bf16.gmra.mrb[0].mxu0 %v346
      %v1748 = vpop.f32.mrb[0].mxu0
      %v1749 = vadd.f32 0.0, %v1748
      %v1750 = vpop.f32.mrb[0].mxu0
      %v1751 = vpop.f32.mrb[0].mxu0
      %v1752 = vpop.f32.mrb[0].mxu0
      %1753 = vdwg.mxu0
      %v1754 = vadd.f32 %v1704, %v1749
      %v1755 = vmul.f32 %v1754, %v395
      %v1756 = vadd.f32 %v1755, %v401
      %v1757 = vmax.f32 %v1628, %v1756
      %v1758 = vld [vmem:[%s223 + $0x8] sm:$0xc]
      %v1759 = vld [vmem:[%s223 + $0xc] sm:$0xf]
      %v1762 = vunpack.c.l.b16 %v1758
      %v1763 = vunpack.c.l.b16 %v1759
      %v1764 = vpack.c.b16 %v1763, %v1762
      %v1765 = vrot.slane %v1764, 2
      %1766 = vrot.lane.b32.xlu0 %v1765, 120
      %v1767 = vpop.permute.xlu0 %1766
      %v1769 = vsel %vm253, %v1767, 0
      %1771 = vmatprep.subr.bf16.mxu0 0
      %1772 = vmatpush1.bf16.msra.mxu0 %v1769
      %1773 = vmatprep.subr.bf16.mxu0 0
      %1774 = vmatpush1.bf16.msra.mxu0 0
      %1775 = vmatprep.subr.bf16.mxu0 0
      %1776 = vmatpush1.bf16.msra.mxu0 0
      %1777 = vmatprep.subr.bf16.mxu0 0
      %1778 = vmatpush1.bf16.msra.mxu0 0
      %1779 = vmatprep.subr.bf16.mxu0 0
      %1780 = vmatpush1.bf16.msra.mxu0 0
      %1781 = vmatprep.subr.bf16.mxu0 0
      %1782 = vmatpush1.bf16.msra.mxu0 0
      %1783 = vmatprep.subr.bf16.mxu0 0
      %1784 = vmatpush1.bf16.msra.mxu0 0
      %1785 = vmatprep.subr.bf16.mxu0 0
      %1786 = vmatpush1.bf16.msra.mxu0 0
      %1787 = vmatprep.subr.bf16.mxu0 0
      %1788 = vmatpush1.bf16.msra.mxu0 0
      %1789 = vmatprep.subr.bf16.mxu0 0
      %1790 = vmatpush1.bf16.msra.mxu0 0
      %1791 = vmatprep.subr.bf16.mxu0 0
      %1792 = vmatpush1.bf16.msra.mxu0 0
      %1793 = vmatprep.subr.bf16.mxu0 0
      %1794 = vmatpush1.bf16.msra.mxu0 0
      %1795 = vmatprep.subr.bf16.mxu0 0
      %1796 = vmatpush1.bf16.msra.mxu0 0
      %1797 = vmatprep.subr.bf16.mxu0 0
      %1798 = vmatpush1.bf16.msra.mxu0 0
      %1799 = vmatprep.subr.bf16.mxu0 0
      %1800 = vmatpush1.bf16.msra.mxu0 0
      %1801 = vmatprep.subr.bf16.mxu0 0
      %1802 = vmatpush1.bf16.msra.mxu0 0
      %1803 = vmatprep.mubr.bf16.mxu0 0
      %1804 = vmatmul.mubr.bf16.gmra.mrb[0].mxu0 %v251
      %v1805 = vpop.f32.mrb[0].mxu0
      %v1806 = vadd.f32 0.0, %v1805
      %v1807 = vpop.f32.mrb[0].mxu0
      %v1808 = vpop.f32.mrb[0].mxu0
      %v1809 = vpop.f32.mrb[0].mxu0
      %1810 = vdwg.mxu0
      %v1812 = vsel %vm253, %v1765, 0
      %1814 = vmatprep.subr.bf16.mxu0 0
      %1815 = vmatpush1.bf16.msra.mxu0 %v1812
      %1816 = vmatprep.subr.bf16.mxu0 0
      %1817 = vmatpush1.bf16.msra.mxu0 0
      %1818 = vmatprep.subr.bf16.mxu0 0
      %1819 = vmatpush1.bf16.msra.mxu0 0
      %1820 = vmatprep.subr.bf16.mxu0 0
      %1821 = vmatpush1.bf16.msra.mxu0 0
      %1822 = vmatprep.subr.bf16.mxu0 0
      %1823 = vmatpush1.bf16.msra.mxu0 0
      %1824 = vmatprep.subr.bf16.mxu0 0
      %1825 = vmatpush1.bf16.msra.mxu0 0
      %1826 = vmatprep.subr.bf16.mxu0 0
      %1827 = vmatpush1.bf16.msra.mxu0 0
      %1828 = vmatprep.subr.bf16.mxu0 0
      %1829 = vmatpush1.bf16.msra.mxu0 0
      %1830 = vmatprep.subr.bf16.mxu0 0
      %1831 = vmatpush1.bf16.msra.mxu0 0
      %1832 = vmatprep.subr.bf16.mxu0 0
      %1833 = vmatpush1.bf16.msra.mxu0 0
      %1834 = vmatprep.subr.bf16.mxu0 0
      %1835 = vmatpush1.bf16.msra.mxu0 0
      %1836 = vmatprep.subr.bf16.mxu0 0
      %1837 = vmatpush1.bf16.msra.mxu0 0
      %1838 = vmatprep.subr.bf16.mxu0 0
      %1839 = vmatpush1.bf16.msra.mxu0 0
      %1840 = vmatprep.subr.bf16.mxu0 0
      %1841 = vmatpush1.bf16.msra.mxu0 0
      %1842 = vmatprep.subr.bf16.mxu0 0
      %1843 = vmatpush1.bf16.msra.mxu0 0
      %1844 = vmatprep.subr.bf16.mxu0 0
      %1845 = vmatpush1.bf16.msra.mxu0 0
      %1846 = vmatprep.mubr.bf16.mxu0 0
      %1847 = vmatmul.mubr.bf16.gmra.mrb[0].mxu0 %v298
      %v1848 = vpop.f32.mrb[0].mxu0
      %v1849 = vadd.f32 %v1806, %v1848
      %v1850 = vpop.f32.mrb[0].mxu0
      %v1851 = vpop.f32.mrb[0].mxu0
      %v1852 = vpop.f32.mrb[0].mxu0
      %1853 = vdwg.mxu0
      %1854 = vrot.lane.b32.xlu0 %v1765, 127
      %v1855 = vpop.permute.xlu0 %1854
      %v1857 = vsel %vm253, %v1855, 0
      %1859 = vmatprep.subr.bf16.mxu0 0
      %1860 = vmatpush1.bf16.msra.mxu0 %v1857
      %1861 = vmatprep.subr.bf16.mxu0 0
      %1862 = vmatpush1.bf16.msra.mxu0 0
      %1863 = vmatprep.subr.bf16.mxu0 0
      %1864 = vmatpush1.bf16.msra.mxu0 0
      %1865 = vmatprep.subr.bf16.mxu0 0
      %1866 = vmatpush1.bf16.msra.mxu0 0
      %1867 = vmatprep.subr.bf16.mxu0 0
      %1868 = vmatpush1.bf16.msra.mxu0 0
      %1869 = vmatprep.subr.bf16.mxu0 0
      %1870 = vmatpush1.bf16.msra.mxu0 0
      %1871 = vmatprep.subr.bf16.mxu0 0
      %1872 = vmatpush1.bf16.msra.mxu0 0
      %1873 = vmatprep.subr.bf16.mxu0 0
      %1874 = vmatpush1.bf16.msra.mxu0 0
      %1875 = vmatprep.subr.bf16.mxu0 0
      %1876 = vmatpush1.bf16.msra.mxu0 0
      %1877 = vmatprep.subr.bf16.mxu0 0
      %1878 = vmatpush1.bf16.msra.mxu0 0
      %1879 = vmatprep.subr.bf16.mxu0 0
      %1880 = vmatpush1.bf16.msra.mxu0 0
      %1881 = vmatprep.subr.bf16.mxu0 0
      %1882 = vmatpush1.bf16.msra.mxu0 0
      %1883 = vmatprep.subr.bf16.mxu0 0
      %1884 = vmatpush1.bf16.msra.mxu0 0
      %1885 = vmatprep.subr.bf16.mxu0 0
      %1886 = vmatpush1.bf16.msra.mxu0 0
      %1887 = vmatprep.subr.bf16.mxu0 0
      %1888 = vmatpush1.bf16.msra.mxu0 0
      %1889 = vmatprep.subr.bf16.mxu0 0
      %1890 = vmatpush1.bf16.msra.mxu0 0
      %1891 = vmatprep.mubr.bf16.mxu0 0
      %1892 = vmatmul.mubr.bf16.gmra.mrb[0].mxu0 %v346
      %v1893 = vpop.f32.mrb[0].mxu0
      %v1894 = vadd.f32 0.0, %v1893
      %v1895 = vpop.f32.mrb[0].mxu0
      %v1896 = vpop.f32.mrb[0].mxu0
      %v1897 = vpop.f32.mrb[0].mxu0
      %1898 = vdwg.mxu0
      %v1899 = vadd.f32 %v1849, %v1894
      %v1900 = vmul.f32 %v1899, %v395
      %v1901 = vadd.f32 %v1900, %v401
      %v1902 = vmax.f32 %v1757, %v1901
      %1903 = vmatprep.subr.bf16.mxu0 0
      %1904 = vmatpush1.bf16.msra.mxu0 %v1857
      %1905 = vmatprep.subr.bf16.mxu0 0
      %1906 = vmatpush1.bf16.msra.mxu0 0
      %1907 = vmatprep.subr.bf16.mxu0 0
      %1908 = vmatpush1.bf16.msra.mxu0 0
      %1909 = vmatprep.subr.bf16.mxu0 0
      %1910 = vmatpush1.bf16.msra.mxu0 0
      %1911 = vmatprep.subr.bf16.mxu0 0
      %1912 = vmatpush1.bf16.msra.mxu0 0
      %1913 = vmatprep.subr.bf16.mxu0 0
      %1914 = vmatpush1.bf16.msra.mxu0 0
      %1915 = vmatprep.subr.bf16.mxu0 0
      %1916 = vmatpush1.bf16.msra.mxu0 0
      %1917 = vmatprep.subr.bf16.mxu0 0
      %1918 = vmatpush1.bf16.msra.mxu0 0
      %1919 = vmatprep.subr.bf16.mxu0 0
      %1920 = vmatpush1.bf16.msra.mxu0 0
      %1921 = vmatprep.subr.bf16.mxu0 0
      %1922 = vmatpush1.bf16.msra.mxu0 0
      %1923 = vmatprep.subr.bf16.mxu0 0
      %1924 = vmatpush1.bf16.msra.mxu0 0
      %1925 = vmatprep.subr.bf16.mxu0 0
      %1926 = vmatpush1.bf16.msra.mxu0 0
      %1927 = vmatprep.subr.bf16.mxu0 0
      %1928 = vmatpush1.bf16.msra.mxu0 0
      %1929 = vmatprep.subr.bf16.mxu0 0
      %1930 = vmatpush1.bf16.msra.mxu0 0
      %1931 = vmatprep.subr.bf16.mxu0 0
      %1932 = vmatpush1.bf16.msra.mxu0 0
      %1933 = vmatprep.subr.bf16.mxu0 0
      %1934 = vmatpush1.bf16.msra.mxu0 0
      %1935 = vmatprep.mubr.bf16.mxu0 0
      %1936 = vmatmul.mubr.bf16.gmra.mrb[0].mxu0 %v251
      %v1937 = vpop.f32.mrb[0].mxu0
      %v1938 = vadd.f32 0.0, %v1937
      %v1939 = vpop.f32.mrb[0].mxu0
      %v1940 = vpop.f32.mrb[0].mxu0
      %v1941 = vpop.f32.mrb[0].mxu0
      %1942 = vdwg.mxu0
      %1943 = vmatprep.subr.bf16.mxu0 0
      %1944 = vmatpush1.bf16.msra.mxu0 %v1769
      %1945 = vmatprep.subr.bf16.mxu0 0
      %1946 = vmatpush1.bf16.msra.mxu0 0
      %1947 = vmatprep.subr.bf16.mxu0 0
      %1948 = vmatpush1.bf16.msra.mxu0 0
      %1949 = vmatprep.subr.bf16.mxu0 0
      %1950 = vmatpush1.bf16.msra.mxu0 0
      %1951 = vmatprep.subr.bf16.mxu0 0
      %1952 = vmatpush1.bf16.msra.mxu0 0
      %1953 = vmatprep.subr.bf16.mxu0 0
      %1954 = vmatpush1.bf16.msra.mxu0 0
      %1955 = vmatprep.subr.bf16.mxu0 0
      %1956 = vmatpush1.bf16.msra.mxu0 0
      %1957 = vmatprep.subr.bf16.mxu0 0
      %1958 = vmatpush1.bf16.msra.mxu0 0
      %1959 = vmatprep.subr.bf16.mxu0 0
      %1960 = vmatpush1.bf16.msra.mxu0 0
      %1961 = vmatprep.subr.bf16.mxu0 0
      %1962 = vmatpush1.bf16.msra.mxu0 0
      %1963 = vmatprep.subr.bf16.mxu0 0
      %1964 = vmatpush1.bf16.msra.mxu0 0
      %1965 = vmatprep.subr.bf16.mxu0 0
      %1966 = vmatpush1.bf16.msra.mxu0 0
      %1967 = vmatprep.subr.bf16.mxu0 0
      %1968 = vmatpush1.bf16.msra.mxu0 0
      %1969 = vmatprep.subr.bf16.mxu0 0
      %1970 = vmatpush1.bf16.msra.mxu0 0
      %1971 = vmatprep.subr.bf16.mxu0 0
      %1972 = vmatpush1.bf16.msra.mxu0 0
      %1973 = vmatprep.subr.bf16.mxu0 0
      %1974 = vmatpush1.bf16.msra.mxu0 0
      %1975 = vmatprep.mubr.bf16.mxu0 0
      %1976 = vmatmul.mubr.bf16.gmra.mrb[0].mxu0 %v298
      %v1977 = vpop.f32.mrb[0].mxu0
      %v1978 = vadd.f32 %v1938, %v1977
      %v1979 = vpop.f32.mrb[0].mxu0
      %v1980 = vpop.f32.mrb[0].mxu0
      %v1981 = vpop.f32.mrb[0].mxu0
      %1982 = vdwg.mxu0
      %1983 = vrot.lane.b32.xlu0 %v1765, 119
      %v1984 = vpop.permute.xlu0 %1983
      %v1986 = vsel %vm253, %v1984, 0
      %1988 = vmatprep.subr.bf16.mxu0 0
      %1989 = vmatpush1.bf16.msra.mxu0 %v1986
      %1990 = vmatprep.subr.bf16.mxu0 0
      %1991 = vmatpush1.bf16.msra.mxu0 0
      %1992 = vmatprep.subr.bf16.mxu0 0
      %1993 = vmatpush1.bf16.msra.mxu0 0
      %1994 = vmatprep.subr.bf16.mxu0 0
      %1995 = vmatpush1.bf16.msra.mxu0 0
      %1996 = vmatprep.subr.bf16.mxu0 0
      %1997 = vmatpush1.bf16.msra.mxu0 0
      %1998 = vmatprep.subr.bf16.mxu0 0
      %1999 = vmatpush1.bf16.msra.mxu0 0
      %2000 = vmatprep.subr.bf16.mxu0 0
      %2001 = vmatpush1.bf16.msra.mxu0 0
      %2002 = vmatprep.subr.bf16.mxu0 0
      %2003 = vmatpush1.bf16.msra.mxu0 0
      %2004 = vmatprep.subr.bf16.mxu0 0
      %2005 = vmatpush1.bf16.msra.mxu0 0
      %2006 = vmatprep.subr.bf16.mxu0 0
      %2007 = vmatpush1.bf16.msra.mxu0 0
      %2008 = vmatprep.subr.bf16.mxu0 0
      %2009 = vmatpush1.bf16.msra.mxu0 0
      %2010 = vmatprep.subr.bf16.mxu0 0
      %2011 = vmatpush1.bf16.msra.mxu0 0
      %2012 = vmatprep.subr.bf16.mxu0 0
      %2013 = vmatpush1.bf16.msra.mxu0 0
      %2014 = vmatprep.subr.bf16.mxu0 0
      %2015 = vmatpush1.bf16.msra.mxu0 0
      %2016 = vmatprep.subr.bf16.mxu0 0
      %2017 = vmatpush1.bf16.msra.mxu0 0
      %2018 = vmatprep.subr.bf16.mxu0 0
      %2019 = vmatpush1.bf16.msra.mxu0 0
      %2020 = vmatprep.mubr.bf16.mxu0 0
      %2021 = vmatmul.mubr.bf16.gmra.mrb[0].mxu0 %v346
      %v2022 = vpop.f32.mrb[0].mxu0
      %v2023 = vadd.f32 0.0, %v2022
      %v2024 = vpop.f32.mrb[0].mxu0
      %v2025 = vpop.f32.mrb[0].mxu0
      %v2026 = vpop.f32.mrb[0].mxu0
      %2027 = vdwg.mxu0
      %v2028 = vadd.f32 %v1978, %v2023
      %v2029 = vmul.f32 %v2028, %v395
      %v2030 = vadd.f32 %v2029, %v401
      %v2031 = vmax.f32 %v1902, %v2030
      %v2033 = vcombine.high %v2031, %v2031
      %v2035 = vunpack.c.l.s4 1966171168
      %v2036 = vunpack.c.0.s8 %v2035
      %v2037 = vlaneseq
      %v2038 = vshrl.u32 %v2037, 7
      %v2039 = vsub.s32 %v2036, %v2038
      %v2040 = vrot.slane %v2031, %v2039
      %v2042 = vunpack.c.l.s4 1966171168
      %v2043 = vunpack.c.0.s8 %v2042
      %v2044 = vlaneseq
      %v2045 = vshrl.u32 %v2044, 7
      %v2046 = vsub.s32 %v2043, %v2045
      %v2047 = vrot.slane %v2033, %v2046
      %v2048 = vcombine.high %v2040, %v2040
      %v2049 = vcombine.high %v2047, %v2047
      %v2051 = vunpack.c.l.s4 1966171168
      %v2052 = vunpack.c.0.s8 %v2051
      %v2053 = vlaneseq
      %v2054 = vshrl.u32 %v2053, 7
      %v2055 = vsub.s32 %v2052, %v2054
      %v2056 = vrot.slane %v2040, %v2055
      %v2058 = vunpack.c.l.s4 1966171168
      %v2059 = vunpack.c.0.s8 %v2058
      %v2060 = vlaneseq
      %v2061 = vshrl.u32 %v2060, 7
      %v2062 = vsub.s32 %v2059, %v2061
      %v2063 = vrot.slane %v2047, %v2062
      %v2065 = vunpack.c.l.s4 1966171168
      %v2066 = vunpack.c.0.s8 %v2065
      %v2067 = vlaneseq
      %v2068 = vshrl.u32 %v2067, 7
      %v2069 = vsub.s32 %v2066, %v2068
      %v2070 = vrot.slane %v2048, %v2069
      %v2072 = vunpack.c.l.s4 1966171168
      %v2073 = vunpack.c.0.s8 %v2072
      %v2074 = vlaneseq
      %v2075 = vshrl.u32 %v2074, 7
      %v2076 = vsub.s32 %v2073, %v2075
      %v2077 = vrot.slane %v2049, %v2076
      %v2078 = vcombine.high %v2056, %v2056
      %v2079 = vcombine.high %v2063, %v2063
      %v2080 = vcombine.high %v2070, %v2070
      %v2081 = vcombine.high %v2077, %v2077
      %2090 = vst.msk [vmem:[%s231 + $0x2] sm:$0x1] %vm865, %v2056
      %2091 = vst.msk [vmem:[%s231 + $0xa] sm:$0x1] %vm865, %v2070
      %2092 = vst.msk [vmem:[%s231 + $0x12] sm:$0x1] %vm865, %v2078
      %2093 = vst.msk [vmem:[%s231 + $0x1a] sm:$0x1] %vm865, %v2080
      %2094 = vst.msk [vmem:[%s231 + $0x22] sm:$0x1] %vm865, %v2063
      %2095 = vst.msk [vmem:[%s231 + $0x2a] sm:$0x1] %vm865, %v2077
      %2096 = vst.msk [vmem:[%s231 + $0x32] sm:$0x1] %vm865, %v2079
      %2097 = vst.msk [vmem:[%s231 + $0x3a] sm:$0x1] %vm865, %v2081
      %v2098 = vld [vmem:[%s223 + $0xc] sm:$0xf]
      %v2099 = vld [vmem:[%s223 + $0x10] sm:$0x3]
      %v2102 = vunpack.c.l.b16 %v2098
      %v2103 = vunpack.c.l.b16 %v2099
      %v2104 = vpack.c.b16 %v2103, %v2102
      %2105 = vrot.lane.b32.xlu0 %v2104, 120
      %v2106 = vpop.permute.xlu0 %2105
      %v2108 = vsel %vm253, %v2106, 0
      %2110 = vmatprep.subr.bf16.mxu0 0
      %2111 = vmatpush1.bf16.msra.mxu0 %v2108
      %2112 = vmatprep.subr.bf16.mxu0 0
      %2113 = vmatpush1.bf16.msra.mxu0 0
      %2114 = vmatprep.subr.bf16.mxu0 0
      %2115 = vmatpush1.bf16.msra.mxu0 0
      %2116 = vmatprep.subr.bf16.mxu0 0
      %2117 = vmatpush1.bf16.msra.mxu0 0
      %2118 = vmatprep.subr.bf16.mxu0 0
      %2119 = vmatpush1.bf16.msra.mxu0 0
      %2120 = vmatprep.subr.bf16.mxu0 0
      %2121 = vmatpush1.bf16.msra.mxu0 0
      %2122 = vmatprep.subr.bf16.mxu0 0
      %2123 = vmatpush1.bf16.msra.mxu0 0
      %2124 = vmatprep.subr.bf16.mxu0 0
      %2125 = vmatpush1.bf16.msra.mxu0 0
      %2126 = vmatprep.subr.bf16.mxu0 0
      %2127 = vmatpush1.bf16.msra.mxu0 0
      %2128 = vmatprep.subr.bf16.mxu0 0
      %2129 = vmatpush1.bf16.msra.mxu0 0
      %2130 = vmatprep.subr.bf16.mxu0 0
      %2131 = vmatpush1.bf16.msra.mxu0 0
      %2132 = vmatprep.subr.bf16.mxu0 0
      %2133 = vmatpush1.bf16.msra.mxu0 0
      %2134 = vmatprep.subr.bf16.mxu0 0
      %2135 = vmatpush1.bf16.msra.mxu0 0
      %2136 = vmatprep.subr.bf16.mxu0 0
      %2137 = vmatpush1.bf16.msra.mxu0 0
      %2138 = vmatprep.subr.bf16.mxu0 0
      %2139 = vmatpush1.bf16.msra.mxu0 0
      %2140 = vmatprep.subr.bf16.mxu0 0
      %2141 = vmatpush1.bf16.msra.mxu0 0
      %2142 = vmatprep.mubr.bf16.mxu0 0
      %2143 = vmatmul.mubr.bf16.gmra.mrb[0].mxu0 %v251
      %v2144 = vpop.f32.mrb[0].mxu0
      %v2145 = vadd.f32 0.0, %v2144
      %v2146 = vpop.f32.mrb[0].mxu0
      %v2147 = vpop.f32.mrb[0].mxu0
      %v2148 = vpop.f32.mrb[0].mxu0
      %2149 = vdwg.mxu0
      %v2151 = vsel %vm253, %v2104, 0
      %2153 = vmatprep.subr.bf16.mxu0 0
      %2154 = vmatpush1.bf16.msra.mxu0 %v2151
      %2155 = vmatprep.subr.bf16.mxu0 0
      %2156 = vmatpush1.bf16.msra.mxu0 0
      %2157 = vmatprep.subr.bf16.mxu0 0
      %2158 = vmatpush1.bf16.msra.mxu0 0
      %2159 = vmatprep.subr.bf16.mxu0 0
      %2160 = vmatpush1.bf16.msra.mxu0 0
      %2161 = vmatprep.subr.bf16.mxu0 0
      %2162 = vmatpush1.bf16.msra.mxu0 0
      %2163 = vmatprep.subr.bf16.mxu0 0
      %2164 = vmatpush1.bf16.msra.mxu0 0
      %2165 = vmatprep.subr.bf16.mxu0 0
      %2166 = vmatpush1.bf16.msra.mxu0 0
      %2167 = vmatprep.subr.bf16.mxu0 0
      %2168 = vmatpush1.bf16.msra.mxu0 0
      %2169 = vmatprep.subr.bf16.mxu0 0
      %2170 = vmatpush1.bf16.msra.mxu0 0
      %2171 = vmatprep.subr.bf16.mxu0 0
      %2172 = vmatpush1.bf16.msra.mxu0 0
      %2173 = vmatprep.subr.bf16.mxu0 0
      %2174 = vmatpush1.bf16.msra.mxu0 0
      %2175 = vmatprep.subr.bf16.mxu0 0
      %2176 = vmatpush1.bf16.msra.mxu0 0
      %2177 = vmatprep.subr.bf16.mxu0 0
      %2178 = vmatpush1.bf16.msra.mxu0 0
      %2179 = vmatprep.subr.bf16.mxu0 0
      %2180 = vmatpush1.bf16.msra.mxu0 0
      %2181 = vmatprep.subr.bf16.mxu0 0
      %2182 = vmatpush1.bf16.msra.mxu0 0
      %2183 = vmatprep.subr.bf16.mxu0 0
      %2184 = vmatpush1.bf16.msra.mxu0 0
      %2185 = vmatprep.mubr.bf16.mxu0 0
      %2186 = vmatmul.mubr.bf16.gmra.mrb[0].mxu0 %v298
      %v2187 = vpop.f32.mrb[0].mxu0
      %v2188 = vadd.f32 %v2145, %v2187
      %v2189 = vpop.f32.mrb[0].mxu0
      %v2190 = vpop.f32.mrb[0].mxu0
      %v2191 = vpop.f32.mrb[0].mxu0
      %2192 = vdwg.mxu0
      %2193 = vrot.lane.b32.xlu0 %v2104, 127
      %v2194 = vpop.permute.xlu0 %2193
      %v2196 = vsel %vm253, %v2194, 0
      %2198 = vmatprep.subr.bf16.mxu0 0
      %2199 = vmatpush1.bf16.msra.mxu0 %v2196
      %2200 = vmatprep.subr.bf16.mxu0 0
      %2201 = vmatpush1.bf16.msra.mxu0 0
      %2202 = vmatprep.subr.bf16.mxu0 0
      %2203 = vmatpush1.bf16.msra.mxu0 0
      %2204 = vmatprep.subr.bf16.mxu0 0
      %2205 = vmatpush1.bf16.msra.mxu0 0
      %2206 = vmatprep.subr.bf16.mxu0 0
      %2207 = vmatpush1.bf16.msra.mxu0 0
      %2208 = vmatprep.subr.bf16.mxu0 0
      %2209 = vmatpush1.bf16.msra.mxu0 0
      %2210 = vmatprep.subr.bf16.mxu0 0
      %2211 = vmatpush1.bf16.msra.mxu0 0
      %2212 = vmatprep.subr.bf16.mxu0 0
      %2213 = vmatpush1.bf16.msra.mxu0 0
      %2214 = vmatprep.subr.bf16.mxu0 0
      %2215 = vmatpush1.bf16.msra.mxu0 0
      %2216 = vmatprep.subr.bf16.mxu0 0
      %2217 = vmatpush1.bf16.msra.mxu0 0
      %2218 = vmatprep.subr.bf16.mxu0 0
      %2219 = vmatpush1.bf16.msra.mxu0 0
      %2220 = vmatprep.subr.bf16.mxu0 0
      %2221 = vmatpush1.bf16.msra.mxu0 0
      %2222 = vmatprep.subr.bf16.mxu0 0
      %2223 = vmatpush1.bf16.msra.mxu0 0
      %2224 = vmatprep.subr.bf16.mxu0 0
      %2225 = vmatpush1.bf16.msra.mxu0 0
      %2226 = vmatprep.subr.bf16.mxu0 0
      %2227 = vmatpush1.bf16.msra.mxu0 0
      %2228 = vmatprep.subr.bf16.mxu0 0
      %2229 = vmatpush1.bf16.msra.mxu0 0
      %2230 = vmatprep.mubr.bf16.mxu0 0
      %2231 = vmatmul.mubr.bf16.gmra.mrb[0].mxu0 %v346
      %v2232 = vpop.f32.mrb[0].mxu0
      %v2233 = vadd.f32 0.0, %v2232
      %v2234 = vpop.f32.mrb[0].mxu0
      %v2235 = vpop.f32.mrb[0].mxu0
      %v2236 = vpop.f32.mrb[0].mxu0
      %2237 = vdwg.mxu0
      %v2238 = vadd.f32 %v2188, %v2233
      %v2239 = vmul.f32 %v2238, %v395
      %v2240 = vadd.f32 %v2239, %v401
      %2241 = vmatprep.subr.bf16.mxu0 0
      %2242 = vmatpush1.bf16.msra.mxu0 %v2196
      %2243 = vmatprep.subr.bf16.mxu0 0
      %2244 = vmatpush1.bf16.msra.mxu0 0
      %2245 = vmatprep.subr.bf16.mxu0 0
      %2246 = vmatpush1.bf16.msra.mxu0 0
      %2247 = vmatprep.subr.bf16.mxu0 0
      %2248 = vmatpush1.bf16.msra.mxu0 0
      %2249 = vmatprep.subr.bf16.mxu0 0
      %2250 = vmatpush1.bf16.msra.mxu0 0
      %2251 = vmatprep.subr.bf16.mxu0 0
      %2252 = vmatpush1.bf16.msra.mxu0 0
      %2253 = vmatprep.subr.bf16.mxu0 0
      %2254 = vmatpush1.bf16.msra.mxu0 0
      %2255 = vmatprep.subr.bf16.mxu0 0
      %2256 = vmatpush1.bf16.msra.mxu0 0
      %2257 = vmatprep.subr.bf16.mxu0 0
      %2258 = vmatpush1.bf16.msra.mxu0 0
      %2259 = vmatprep.subr.bf16.mxu0 0
      %2260 = vmatpush1.bf16.msra.mxu0 0
      %2261 = vmatprep.subr.bf16.mxu0 0
      %2262 = vmatpush1.bf16.msra.mxu0 0
      %2263 = vmatprep.subr.bf16.mxu0 0
      %2264 = vmatpush1.bf16.msra.mxu0 0
      %2265 = vmatprep.subr.bf16.mxu0 0
      %2266 = vmatpush1.bf16.msra.mxu0 0
      %2267 = vmatprep.subr.bf16.mxu0 0
      %2268 = vmatpush1.bf16.msra.mxu0 0
      %2269 = vmatprep.subr.bf16.mxu0 0
      %2270 = vmatpush1.bf16.msra.mxu0 0
      %2271 = vmatprep.subr.bf16.mxu0 0
      %2272 = vmatpush1.bf16.msra.mxu0 0
      %2273 = vmatprep.mubr.bf16.mxu0 0
      %2274 = vmatmul.mubr.bf16.gmra.mrb[0].mxu0 %v251
      %v2275 = vpop.f32.mrb[0].mxu0
      %v2276 = vadd.f32 0.0, %v2275
      %v2277 = vpop.f32.mrb[0].mxu0
      %v2278 = vpop.f32.mrb[0].mxu0
      %v2279 = vpop.f32.mrb[0].mxu0
      %2280 = vdwg.mxu0
      %2281 = vmatprep.subr.bf16.mxu0 0
      %2282 = vmatpush1.bf16.msra.mxu0 %v2108
      %2283 = vmatprep.subr.bf16.mxu0 0
      %2284 = vmatpush1.bf16.msra.mxu0 0
      %2285 = vmatprep.subr.bf16.mxu0 0
      %2286 = vmatpush1.bf16.msra.mxu0 0
      %2287 = vmatprep.subr.bf16.mxu0 0
      %2288 = vmatpush1.bf16.msra.mxu0 0
      %2289 = vmatprep.subr.bf16.mxu0 0
      %2290 = vmatpush1.bf16.msra.mxu0 0
      %2291 = vmatprep.subr.bf16.mxu0 0
      %2292 = vmatpush1.bf16.msra.mxu0 0
      %2293 = vmatprep.subr.bf16.mxu0 0
      %2294 = vmatpush1.bf16.msra.mxu0 0
      %2295 = vmatprep.subr.bf16.mxu0 0
      %2296 = vmatpush1.bf16.msra.mxu0 0
      %2297 = vmatprep.subr.bf16.mxu0 0
      %2298 = vmatpush1.bf16.msra.mxu0 0
      %2299 = vmatprep.subr.bf16.mxu0 0
      %2300 = vmatpush1.bf16.msra.mxu0 0
      %2301 = vmatprep.subr.bf16.mxu0 0
      %2302 = vmatpush1.bf16.msra.mxu0 0
      %2303 = vmatprep.subr.bf16.mxu0 0
      %2304 = vmatpush1.bf16.msra.mxu0 0
      %2305 = vmatprep.subr.bf16.mxu0 0
      %2306 = vmatpush1.bf16.msra.mxu0 0
      %2307 = vmatprep.subr.bf16.mxu0 0
      %2308 = vmatpush1.bf16.msra.mxu0 0
      %2309 = vmatprep.subr.bf16.mxu0 0
      %2310 = vmatpush1.bf16.msra.mxu0 0
      %2311 = vmatprep.subr.bf16.mxu0 0
      %2312 = vmatpush1.bf16.msra.mxu0 0
      %2313 = vmatprep.mubr.bf16.mxu0 0
      %2314 = vmatmul.mubr.bf16.gmra.mrb[0].mxu0 %v298
      %v2315 = vpop.f32.mrb[0].mxu0
      %v2316 = vadd.f32 %v2276, %v2315
      %v2317 = vpop.f32.mrb[0].mxu0
      %v2318 = vpop.f32.mrb[0].mxu0
      %v2319 = vpop.f32.mrb[0].mxu0
      %2320 = vdwg.mxu0
      %2321 = vrot.lane.b32.xlu0 %v2104, 119
      %v2322 = vpop.permute.xlu0 %2321
      %v2324 = vsel %vm253, %v2322, 0
      %2326 = vmatprep.subr.bf16.mxu0 0
      %2327 = vmatpush1.bf16.msra.mxu0 %v2324
      %2328 = vmatprep.subr.bf16.mxu0 0
      %2329 = vmatpush1.bf16.msra.mxu0 0
      %2330 = vmatprep.subr.bf16.mxu0 0
      %2331 = vmatpush1.bf16.msra.mxu0 0
      %2332 = vmatprep.subr.bf16.mxu0 0
      %2333 = vmatpush1.bf16.msra.mxu0 0
      %2334 = vmatprep.subr.bf16.mxu0 0
      %2335 = vmatpush1.bf16.msra.mxu0 0
      %2336 = vmatprep.subr.bf16.mxu0 0
      %2337 = vmatpush1.bf16.msra.mxu0 0
      %2338 = vmatprep.subr.bf16.mxu0 0
      %2339 = vmatpush1.bf16.msra.mxu0 0
      %2340 = vmatprep.subr.bf16.mxu0 0
      %2341 = vmatpush1.bf16.msra.mxu0 0
      %2342 = vmatprep.subr.bf16.mxu0 0
      %2343 = vmatpush1.bf16.msra.mxu0 0
      %2344 = vmatprep.subr.bf16.mxu0 0
      %2345 = vmatpush1.bf16.msra.mxu0 0
      %2346 = vmatprep.subr.bf16.mxu0 0
      %2347 = vmatpush1.bf16.msra.mxu0 0
      %2348 = vmatprep.subr.bf16.mxu0 0
      %2349 = vmatpush1.bf16.msra.mxu0 0
      %2350 = vmatprep.subr.bf16.mxu0 0
      %2351 = vmatpush1.bf16.msra.mxu0 0
      %2352 = vmatprep.subr.bf16.mxu0 0
      %2353 = vmatpush1.bf16.msra.mxu0 0
      %2354 = vmatprep.subr.bf16.mxu0 0
      %2355 = vmatpush1.bf16.msra.mxu0 0
      %2356 = vmatprep.subr.bf16.mxu0 0
      %2357 = vmatpush1.bf16.msra.mxu0 0
      %2358 = vmatprep.mubr.bf16.mxu0 0
      %2359 = vmatmul.mubr.bf16.gmra.mrb[0].mxu0 %v346
      %v2360 = vpop.f32.mrb[0].mxu0
      %v2361 = vadd.f32 0.0, %v2360
      %v2362 = vpop.f32.mrb[0].mxu0
      %v2363 = vpop.f32.mrb[0].mxu0
      %v2364 = vpop.f32.mrb[0].mxu0
      %2365 = vdwg.mxu0
      %v2366 = vadd.f32 %v2316, %v2361
      %v2367 = vmul.f32 %v2366, %v395
      %v2368 = vadd.f32 %v2367, %v401
      %v2369 = vmax.f32 %v2240, %v2368
      %v2370 = vld [vmem:[%s223 + $0xc] sm:$0xc]
      %v2371 = vld [vmem:[%s223 + $0x10] sm:$0xf]
      %v2374 = vunpack.c.l.b16 %v2370
      %v2375 = vunpack.c.l.b16 %v2371
      %v2376 = vpack.c.b16 %v2375, %v2374
      %v2377 = vrot.slane %v2376, 2
      %2378 = vrot.lane.b32.xlu0 %v2377, 120
      %v2379 = vpop.permute.xlu0 %2378
      %v2381 = vsel %vm253, %v2379, 0
      %2383 = vmatprep.subr.bf16.mxu0 0
      %2384 = vmatpush1.bf16.msra.mxu0 %v2381
      %2385 = vmatprep.subr.bf16.mxu0 0
      %2386 = vmatpush1.bf16.msra.mxu0 0
      %2387 = vmatprep.subr.bf16.mxu0 0
      %2388 = vmatpush1.bf16.msra.mxu0 0
      %2389 = vmatprep.subr.bf16.mxu0 0
      %2390 = vmatpush1.bf16.msra.mxu0 0
      %2391 = vmatprep.subr.bf16.mxu0 0
      %2392 = vmatpush1.bf16.msra.mxu0 0
      %2393 = vmatprep.subr.bf16.mxu0 0
      %2394 = vmatpush1.bf16.msra.mxu0 0
      %2395 = vmatprep.subr.bf16.mxu0 0
      %2396 = vmatpush1.bf16.msra.mxu0 0
      %2397 = vmatprep.subr.bf16.mxu0 0
      %2398 = vmatpush1.bf16.msra.mxu0 0
      %2399 = vmatprep.subr.bf16.mxu0 0
      %2400 = vmatpush1.bf16.msra.mxu0 0
      %2401 = vmatprep.subr.bf16.mxu0 0
      %2402 = vmatpush1.bf16.msra.mxu0 0
      %2403 = vmatprep.subr.bf16.mxu0 0
      %2404 = vmatpush1.bf16.msra.mxu0 0
      %2405 = vmatprep.subr.bf16.mxu0 0
      %2406 = vmatpush1.bf16.msra.mxu0 0
      %2407 = vmatprep.subr.bf16.mxu0 0
      %2408 = vmatpush1.bf16.msra.mxu0 0
      %2409 = vmatprep.subr.bf16.mxu0 0
      %2410 = vmatpush1.bf16.msra.mxu0 0
      %2411 = vmatprep.subr.bf16.mxu0 0
      %2412 = vmatpush1.bf16.msra.mxu0 0
      %2413 = vmatprep.subr.bf16.mxu0 0
      %2414 = vmatpush1.bf16.msra.mxu0 0
      %2415 = vmatprep.mubr.bf16.mxu0 0
      %2416 = vmatmul.mubr.bf16.gmra.mrb[0].mxu0 %v251
      %v2417 = vpop.f32.mrb[0].mxu0
      %v2418 = vadd.f32 0.0, %v2417
      %v2419 = vpop.f32.mrb[0].mxu0
      %v2420 = vpop.f32.mrb[0].mxu0
      %v2421 = vpop.f32.mrb[0].mxu0
      %2422 = vdwg.mxu0
      %v2424 = vsel %vm253, %v2377, 0
      %2426 = vmatprep.subr.bf16.mxu0 0
      %2427 = vmatpush1.bf16.msra.mxu0 %v2424
      %2428 = vmatprep.subr.bf16.mxu0 0
      %2429 = vmatpush1.bf16.msra.mxu0 0
      %2430 = vmatprep.subr.bf16.mxu0 0
      %2431 = vmatpush1.bf16.msra.mxu0 0
      %2432 = vmatprep.subr.bf16.mxu0 0
      %2433 = vmatpush1.bf16.msra.mxu0 0
      %2434 = vmatprep.subr.bf16.mxu0 0
      %2435 = vmatpush1.bf16.msra.mxu0 0
      %2436 = vmatprep.subr.bf16.mxu0 0
      %2437 = vmatpush1.bf16.msra.mxu0 0
      %2438 = vmatprep.subr.bf16.mxu0 0
      %2439 = vmatpush1.bf16.msra.mxu0 0
      %2440 = vmatprep.subr.bf16.mxu0 0
      %2441 = vmatpush1.bf16.msra.mxu0 0
      %2442 = vmatprep.subr.bf16.mxu0 0
      %2443 = vmatpush1.bf16.msra.mxu0 0
      %2444 = vmatprep.subr.bf16.mxu0 0
      %2445 = vmatpush1.bf16.msra.mxu0 0
      %2446 = vmatprep.subr.bf16.mxu0 0
      %2447 = vmatpush1.bf16.msra.mxu0 0
      %2448 = vmatprep.subr.bf16.mxu0 0
      %2449 = vmatpush1.bf16.msra.mxu0 0
      %2450 = vmatprep.subr.bf16.mxu0 0
      %2451 = vmatpush1.bf16.msra.mxu0 0
      %2452 = vmatprep.subr.bf16.mxu0 0
      %2453 = vmatpush1.bf16.msra.mxu0 0
      %2454 = vmatprep.subr.bf16.mxu0 0
      %2455 = vmatpush1.bf16.msra.mxu0 0
      %2456 = vmatprep.subr.bf16.mxu0 0
      %2457 = vmatpush1.bf16.msra.mxu0 0
      %2458 = vmatprep.mubr.bf16.mxu0 0
      %2459 = vmatmul.mubr.bf16.gmra.mrb[0].mxu0 %v298
      %v2460 = vpop.f32.mrb[0].mxu0
      %v2461 = vadd.f32 %v2418, %v2460
      %v2462 = vpop.f32.mrb[0].mxu0
      %v2463 = vpop.f32.mrb[0].mxu0
      %v2464 = vpop.f32.mrb[0].mxu0
      %2465 = vdwg.mxu0
      %2466 = vrot.lane.b32.xlu0 %v2377, 127
      %v2467 = vpop.permute.xlu0 %2466
      %v2469 = vsel %vm253, %v2467, 0
      %2471 = vmatprep.subr.bf16.mxu0 0
      %2472 = vmatpush1.bf16.msra.mxu0 %v2469
      %2473 = vmatprep.subr.bf16.mxu0 0
      %2474 = vmatpush1.bf16.msra.mxu0 0
      %2475 = vmatprep.subr.bf16.mxu0 0
      %2476 = vmatpush1.bf16.msra.mxu0 0
      %2477 = vmatprep.subr.bf16.mxu0 0
      %2478 = vmatpush1.bf16.msra.mxu0 0
      %2479 = vmatprep.subr.bf16.mxu0 0
      %2480 = vmatpush1.bf16.msra.mxu0 0
      %2481 = vmatprep.subr.bf16.mxu0 0
      %2482 = vmatpush1.bf16.msra.mxu0 0
      %2483 = vmatprep.subr.bf16.mxu0 0
      %2484 = vmatpush1.bf16.msra.mxu0 0
      %2485 = vmatprep.subr.bf16.mxu0 0
      %2486 = vmatpush1.bf16.msra.mxu0 0
      %2487 = vmatprep.subr.bf16.mxu0 0
      %2488 = vmatpush1.bf16.msra.mxu0 0
      %2489 = vmatprep.subr.bf16.mxu0 0
      %2490 = vmatpush1.bf16.msra.mxu0 0
      %2491 = vmatprep.subr.bf16.mxu0 0
      %2492 = vmatpush1.bf16.msra.mxu0 0
      %2493 = vmatprep.subr.bf16.mxu0 0
      %2494 = vmatpush1.bf16.msra.mxu0 0
      %2495 = vmatprep.subr.bf16.mxu0 0
      %2496 = vmatpush1.bf16.msra.mxu0 0
      %2497 = vmatprep.subr.bf16.mxu0 0
      %2498 = vmatpush1.bf16.msra.mxu0 0
      %2499 = vmatprep.subr.bf16.mxu0 0
      %2500 = vmatpush1.bf16.msra.mxu0 0
      %2501 = vmatprep.subr.bf16.mxu0 0
      %2502 = vmatpush1.bf16.msra.mxu0 0
      %2503 = vmatprep.mubr.bf16.mxu0 0
      %2504 = vmatmul.mubr.bf16.gmra.mrb[0].mxu0 %v346
      %v2505 = vpop.f32.mrb[0].mxu0
      %v2506 = vadd.f32 0.0, %v2505
      %v2507 = vpop.f32.mrb[0].mxu0
      %v2508 = vpop.f32.mrb[0].mxu0
      %v2509 = vpop.f32.mrb[0].mxu0
      %2510 = vdwg.mxu0
      %v2511 = vadd.f32 %v2461, %v2506
      %v2512 = vmul.f32 %v2511, %v395
      %v2513 = vadd.f32 %v2512, %v401
      %v2514 = vmax.f32 %v2369, %v2513
      %2515 = vmatprep.subr.bf16.mxu0 0
      %2516 = vmatpush1.bf16.msra.mxu0 %v2469
      %2517 = vmatprep.subr.bf16.mxu0 0
      %2518 = vmatpush1.bf16.msra.mxu0 0
      %2519 = vmatprep.subr.bf16.mxu0 0
      %2520 = vmatpush1.bf16.msra.mxu0 0
      %2521 = vmatprep.subr.bf16.mxu0 0
      %2522 = vmatpush1.bf16.msra.mxu0 0
      %2523 = vmatprep.subr.bf16.mxu0 0
      %2524 = vmatpush1.bf16.msra.mxu0 0
      %2525 = vmatprep.subr.bf16.mxu0 0
      %2526 = vmatpush1.bf16.msra.mxu0 0
      %2527 = vmatprep.subr.bf16.mxu0 0
      %2528 = vmatpush1.bf16.msra.mxu0 0
      %2529 = vmatprep.subr.bf16.mxu0 0
      %2530 = vmatpush1.bf16.msra.mxu0 0
      %2531 = vmatprep.subr.bf16.mxu0 0
      %2532 = vmatpush1.bf16.msra.mxu0 0
      %2533 = vmatprep.subr.bf16.mxu0 0
      %2534 = vmatpush1.bf16.msra.mxu0 0
      %2535 = vmatprep.subr.bf16.mxu0 0
      %2536 = vmatpush1.bf16.msra.mxu0 0
      %2537 = vmatprep.subr.bf16.mxu0 0
      %2538 = vmatpush1.bf16.msra.mxu0 0
      %2539 = vmatprep.subr.bf16.mxu0 0
      %2540 = vmatpush1.bf16.msra.mxu0 0
      %2541 = vmatprep.subr.bf16.mxu0 0
      %2542 = vmatpush1.bf16.msra.mxu0 0
      %2543 = vmatprep.subr.bf16.mxu0 0
      %2544 = vmatpush1.bf16.msra.mxu0 0
      %2545 = vmatprep.subr.bf16.mxu0 0
      %2546 = vmatpush1.bf16.msra.mxu0 0
      %2547 = vmatprep.mubr.bf16.mxu0 0
      %2548 = vmatmul.mubr.bf16.gmra.mrb[0].mxu0 %v251
      %v2549 = vpop.f32.mrb[0].mxu0
      %v2550 = vadd.f32 0.0, %v2549
      %v2551 = vpop.f32.mrb[0].mxu0
      %v2552 = vpop.f32.mrb[0].mxu0
      %v2553 = vpop.f32.mrb[0].mxu0
      %2554 = vdwg.mxu0
      %2555 = vmatprep.subr.bf16.mxu0 0
      %2556 = vmatpush1.bf16.msra.mxu0 %v2381
      %2557 = vmatprep.subr.bf16.mxu0 0
      %2558 = vmatpush1.bf16.msra.mxu0 0
      %2559 = vmatprep.subr.bf16.mxu0 0
      %2560 = vmatpush1.bf16.msra.mxu0 0
      %2561 = vmatprep.subr.bf16.mxu0 0
      %2562 = vmatpush1.bf16.msra.mxu0 0
      %2563 = vmatprep.subr.bf16.mxu0 0
      %2564 = vmatpush1.bf16.msra.mxu0 0
      %2565 = vmatprep.subr.bf16.mxu0 0
      %2566 = vmatpush1.bf16.msra.mxu0 0
      %2567 = vmatprep.subr.bf16.mxu0 0
      %2568 = vmatpush1.bf16.msra.mxu0 0
      %2569 = vmatprep.subr.bf16.mxu0 0
      %2570 = vmatpush1.bf16.msra.mxu0 0
      %2571 = vmatprep.subr.bf16.mxu0 0
      %2572 = vmatpush1.bf16.msra.mxu0 0
      %2573 = vmatprep.subr.bf16.mxu0 0
      %2574 = vmatpush1.bf16.msra.mxu0 0
      %2575 = vmatprep.subr.bf16.mxu0 0
      %2576 = vmatpush1.bf16.msra.mxu0 0
      %2577 = vmatprep.subr.bf16.mxu0 0
      %2578 = vmatpush1.bf16.msra.mxu0 0
      %2579 = vmatprep.subr.bf16.mxu0 0
      %2580 = vmatpush1.bf16.msra.mxu0 0
      %2581 = vmatprep.subr.bf16.mxu0 0
      %2582 = vmatpush1.bf16.msra.mxu0 0
      %2583 = vmatprep.subr.bf16.mxu0 0
      %2584 = vmatpush1.bf16.msra.mxu0 0
      %2585 = vmatprep.subr.bf16.mxu0 0
      %2586 = vmatpush1.bf16.msra.mxu0 0
      %2587 = vmatprep.mubr.bf16.mxu0 0
      %2588 = vmatmul.mubr.bf16.gmra.mrb[0].mxu0 %v298
      %v2589 = vpop.f32.mrb[0].mxu0
      %v2590 = vadd.f32 %v2550, %v2589
      %v2591 = vpop.f32.mrb[0].mxu0
      %v2592 = vpop.f32.mrb[0].mxu0
      %v2593 = vpop.f32.mrb[0].mxu0
      %2594 = vdwg.mxu0
      %2595 = vrot.lane.b32.xlu0 %v2377, 119
      %v2596 = vpop.permute.xlu0 %2595
      %v2598 = vsel %vm253, %v2596, 0
      %2600 = vmatprep.subr.bf16.mxu0 0
      %2601 = vmatpush1.bf16.msra.mxu0 %v2598
      %2602 = vmatprep.subr.bf16.mxu0 0
      %2603 = vmatpush1.bf16.msra.mxu0 0
      %2604 = vmatprep.subr.bf16.mxu0 0
      %2605 = vmatpush1.bf16.msra.mxu0 0
      %2606 = vmatprep.subr.bf16.mxu0 0
      %2607 = vmatpush1.bf16.msra.mxu0 0
      %2608 = vmatprep.subr.bf16.mxu0 0
      %2609 = vmatpush1.bf16.msra.mxu0 0
      %2610 = vmatprep.subr.bf16.mxu0 0
      %2611 = vmatpush1.bf16.msra.mxu0 0
      %2612 = vmatprep.subr.bf16.mxu0 0
      %2613 = vmatpush1.bf16.msra.mxu0 0
      %2614 = vmatprep.subr.bf16.mxu0 0
      %2615 = vmatpush1.bf16.msra.mxu0 0
      %2616 = vmatprep.subr.bf16.mxu0 0
      %2617 = vmatpush1.bf16.msra.mxu0 0
      %2618 = vmatprep.subr.bf16.mxu0 0
      %2619 = vmatpush1.bf16.msra.mxu0 0
      %2620 = vmatprep.subr.bf16.mxu0 0
      %2621 = vmatpush1.bf16.msra.mxu0 0
      %2622 = vmatprep.subr.bf16.mxu0 0
      %2623 = vmatpush1.bf16.msra.mxu0 0
      %2624 = vmatprep.subr.bf16.mxu0 0
      %2625 = vmatpush1.bf16.msra.mxu0 0
      %2626 = vmatprep.subr.bf16.mxu0 0
      %2627 = vmatpush1.bf16.msra.mxu0 0
      %2628 = vmatprep.subr.bf16.mxu0 0
      %2629 = vmatpush1.bf16.msra.mxu0 0
      %2630 = vmatprep.subr.bf16.mxu0 0
      %2631 = vmatpush1.bf16.msra.mxu0 0
      %2632 = vmatprep.mubr.bf16.mxu0 0
      %2633 = vmatmul.mubr.bf16.gmra.mrb[0].mxu0 %v346
      %v2634 = vpop.f32.mrb[0].mxu0
      %v2635 = vadd.f32 0.0, %v2634
      %v2636 = vpop.f32.mrb[0].mxu0
      %v2637 = vpop.f32.mrb[0].mxu0
      %v2638 = vpop.f32.mrb[0].mxu0
      %2639 = vdwg.mxu0
      %v2640 = vadd.f32 %v2590, %v2635
      %v2641 = vmul.f32 %v2640, %v395
      %v2642 = vadd.f32 %v2641, %v401
      %v2643 = vmax.f32 %v2514, %v2642
      %v2645 = vcombine.high %v2643, %v2643
      %v2647 = vunpack.c.l.s4 1966171168
      %v2648 = vunpack.c.0.s8 %v2647
      %v2649 = vlaneseq
      %v2650 = vshrl.u32 %v2649, 7
      %v2651 = vsub.s32 %v2648, %v2650
      %v2652 = vrot.slane %v2643, %v2651
      %v2654 = vunpack.c.l.s4 1966171168
      %v2655 = vunpack.c.0.s8 %v2654
      %v2656 = vlaneseq
      %v2657 = vshrl.u32 %v2656, 7
      %v2658 = vsub.s32 %v2655, %v2657
      %v2659 = vrot.slane %v2645, %v2658
      %v2660 = vcombine.high %v2652, %v2652
      %v2661 = vcombine.high %v2659, %v2659
      %v2663 = vunpack.c.l.s4 1966171168
      %v2664 = vunpack.c.0.s8 %v2663
      %v2665 = vlaneseq
      %v2666 = vshrl.u32 %v2665, 7
      %v2667 = vsub.s32 %v2664, %v2666
      %v2668 = vrot.slane %v2652, %v2667
      %v2670 = vunpack.c.l.s4 1966171168
      %v2671 = vunpack.c.0.s8 %v2670
      %v2672 = vlaneseq
      %v2673 = vshrl.u32 %v2672, 7
      %v2674 = vsub.s32 %v2671, %v2673
      %v2675 = vrot.slane %v2659, %v2674
      %v2677 = vunpack.c.l.s4 1966171168
      %v2678 = vunpack.c.0.s8 %v2677
      %v2679 = vlaneseq
      %v2680 = vshrl.u32 %v2679, 7
      %v2681 = vsub.s32 %v2678, %v2680
      %v2682 = vrot.slane %v2660, %v2681
      %v2684 = vunpack.c.l.s4 1966171168
      %v2685 = vunpack.c.0.s8 %v2684
      %v2686 = vlaneseq
      %v2687 = vshrl.u32 %v2686, 7
      %v2688 = vsub.s32 %v2685, %v2687
      %v2689 = vrot.slane %v2661, %v2688
      %v2690 = vcombine.high %v2668, %v2668
      %v2691 = vcombine.high %v2675, %v2675
      %v2692 = vcombine.high %v2682, %v2682
      %v2693 = vcombine.high %v2689, %v2689
      %2702 = vst.msk [vmem:[%s231 + $0x3] sm:$0x1] %vm865, %v2668
      %2703 = vst.msk [vmem:[%s231 + $0xb] sm:$0x1] %vm865, %v2682
      %2704 = vst.msk [vmem:[%s231 + $0x13] sm:$0x1] %vm865, %v2690
      %2705 = vst.msk [vmem:[%s231 + $0x1b] sm:$0x1] %vm865, %v2692
      %2706 = vst.msk [vmem:[%s231 + $0x23] sm:$0x1] %vm865, %v2675
      %2707 = vst.msk [vmem:[%s231 + $0x2b] sm:$0x1] %vm865, %v2689
      %2708 = vst.msk [vmem:[%s231 + $0x33] sm:$0x1] %vm865, %v2691
      %2709 = vst.msk [vmem:[%s231 + $0x3b] sm:$0x1] %vm865, %v2693
      %v2710 = vld [vmem:[%s223 + $0x10] sm:$0xf]
      %v2711 = vld [vmem:[%s223 + $0x14] sm:$0x3]
      %v2714 = vunpack.c.l.b16 %v2710
      %v2715 = vunpack.c.l.b16 %v2711
      %v2716 = vpack.c.b16 %v2715, %v2714
      %2717 = vrot.lane.b32.xlu0 %v2716, 120
      %v2718 = vpop.permute.xlu0 %2717
      %v2720 = vsel %vm253, %v2718, 0
      %2722 = vmatprep.subr.bf16.mxu0 0
      %2723 = vmatpush1.bf16.msra.mxu0 %v2720
      %2724 = vmatprep.subr.bf16.mxu0 0
      %2725 = vmatpush1.bf16.msra.mxu0 0
      %2726 = vmatprep.subr.bf16.mxu0 0
      %2727 = vmatpush1.bf16.msra.mxu0 0
      %2728 = vmatprep.subr.bf16.mxu0 0
      %2729 = vmatpush1.bf16.msra.mxu0 0
      %2730 = vmatprep.subr.bf16.mxu0 0
      %2731 = vmatpush1.bf16.msra.mxu0 0
      %2732 = vmatprep.subr.bf16.mxu0 0
      %2733 = vmatpush1.bf16.msra.mxu0 0
      %2734 = vmatprep.subr.bf16.mxu0 0
      %2735 = vmatpush1.bf16.msra.mxu0 0
      %2736 = vmatprep.subr.bf16.mxu0 0
      %2737 = vmatpush1.bf16.msra.mxu0 0
      %2738 = vmatprep.subr.bf16.mxu0 0
      %2739 = vmatpush1.bf16.msra.mxu0 0
      %2740 = vmatprep.subr.bf16.mxu0 0
      %2741 = vmatpush1.bf16.msra.mxu0 0
      %2742 = vmatprep.subr.bf16.mxu0 0
      %2743 = vmatpush1.bf16.msra.mxu0 0
      %2744 = vmatprep.subr.bf16.mxu0 0
      %2745 = vmatpush1.bf16.msra.mxu0 0
      %2746 = vmatprep.subr.bf16.mxu0 0
      %2747 = vmatpush1.bf16.msra.mxu0 0
      %2748 = vmatprep.subr.bf16.mxu0 0
      %2749 = vmatpush1.bf16.msra.mxu0 0
      %2750 = vmatprep.subr.bf16.mxu0 0
      %2751 = vmatpush1.bf16.msra.mxu0 0
      %2752 = vmatprep.subr.bf16.mxu0 0
      %2753 = vmatpush1.bf16.msra.mxu0 0
      %2754 = vmatprep.mubr.bf16.mxu0 0
      %2755 = vmatmul.mubr.bf16.gmra.mrb[0].mxu0 %v251
      %v2756 = vpop.f32.mrb[0].mxu0
      %v2757 = vadd.f32 0.0, %v2756
      %v2758 = vpop.f32.mrb[0].mxu0
      %v2759 = vpop.f32.mrb[0].mxu0
      %v2760 = vpop.f32.mrb[0].mxu0
      %2761 = vdwg.mxu0
      %v2763 = vsel %vm253, %v2716, 0
      %2765 = vmatprep.subr.bf16.mxu0 0
      %2766 = vmatpush1.bf16.msra.mxu0 %v2763
      %2767 = vmatprep.subr.bf16.mxu0 0
      %2768 = vmatpush1.bf16.msra.mxu0 0
      %2769 = vmatprep.subr.bf16.mxu0 0
      %2770 = vmatpush1.bf16.msra.mxu0 0
      %2771 = vmatprep.subr.bf16.mxu0 0
      %2772 = vmatpush1.bf16.msra.mxu0 0
      %2773 = vmatprep.subr.bf16.mxu0 0
      %2774 = vmatpush1.bf16.msra.mxu0 0
      %2775 = vmatprep.subr.bf16.mxu0 0
      %2776 = vmatpush1.bf16.msra.mxu0 0
      %2777 = vmatprep.subr.bf16.mxu0 0
      %2778 = vmatpush1.bf16.msra.mxu0 0
      %2779 = vmatprep.subr.bf16.mxu0 0
      %2780 = vmatpush1.bf16.msra.mxu0 0
      %2781 = vmatprep.subr.bf16.mxu0 0
      %2782 = vmatpush1.bf16.msra.mxu0 0
      %2783 = vmatprep.subr.bf16.mxu0 0
      %2784 = vmatpush1.bf16.msra.mxu0 0
      %2785 = vmatprep.subr.bf16.mxu0 0
      %2786 = vmatpush1.bf16.msra.mxu0 0
      %2787 = vmatprep.subr.bf16.mxu0 0
      %2788 = vmatpush1.bf16.msra.mxu0 0
      %2789 = vmatprep.subr.bf16.mxu0 0
      %2790 = vmatpush1.bf16.msra.mxu0 0
      %2791 = vmatprep.subr.bf16.mxu0 0
      %2792 = vmatpush1.bf16.msra.mxu0 0
      %2793 = vmatprep.subr.bf16.mxu0 0
      %2794 = vmatpush1.bf16.msra.mxu0 0
      %2795 = vmatprep.subr.bf16.mxu0 0
      %2796 = vmatpush1.bf16.msra.mxu0 0
      %2797 = vmatprep.mubr.bf16.mxu0 0
      %2798 = vmatmul.mubr.bf16.gmra.mrb[0].mxu0 %v298
      %v2799 = vpop.f32.mrb[0].mxu0
      %v2800 = vadd.f32 %v2757, %v2799
      %v2801 = vpop.f32.mrb[0].mxu0
      %v2802 = vpop.f32.mrb[0].mxu0
      %v2803 = vpop.f32.mrb[0].mxu0
      %2804 = vdwg.mxu0
      %2805 = vrot.lane.b32.xlu0 %v2716, 127
      %v2806 = vpop.permute.xlu0 %2805
      %v2808 = vsel %vm253, %v2806, 0
      %2810 = vmatprep.subr.bf16.mxu0 0
      %2811 = vmatpush1.bf16.msra.mxu0 %v2808
      %2812 = vmatprep.subr.bf16.mxu0 0
      %2813 = vmatpush1.bf16.msra.mxu0 0
      %2814 = vmatprep.subr.bf16.mxu0 0
      %2815 = vmatpush1.bf16.msra.mxu0 0
      %2816 = vmatprep.subr.bf16.mxu0 0
      %2817 = vmatpush1.bf16.msra.mxu0 0
      %2818 = vmatprep.subr.bf16.mxu0 0
      %2819 = vmatpush1.bf16.msra.mxu0 0
      %2820 = vmatprep.subr.bf16.mxu0 0
      %2821 = vmatpush1.bf16.msra.mxu0 0
      %2822 = vmatprep.subr.bf16.mxu0 0
      %2823 = vmatpush1.bf16.msra.mxu0 0
      %2824 = vmatprep.subr.bf16.mxu0 0
      %2825 = vmatpush1.bf16.msra.mxu0 0
      %2826 = vmatprep.subr.bf16.mxu0 0
      %2827 = vmatpush1.bf16.msra.mxu0 0
      %2828 = vmatprep.subr.bf16.mxu0 0
      %2829 = vmatpush1.bf16.msra.mxu0 0
      %2830 = vmatprep.subr.bf16.mxu0 0
      %2831 = vmatpush1.bf16.msra.mxu0 0
      %2832 = vmatprep.subr.bf16.mxu0 0
      %2833 = vmatpush1.bf16.msra.mxu0 0
      %2834 = vmatprep.subr.bf16.mxu0 0
      %2835 = vmatpush1.bf16.msra.mxu0 0
      %2836 = vmatprep.subr.bf16.mxu0 0
      %2837 = vmatpush1.bf16.msra.mxu0 0
      %2838 = vmatprep.subr.bf16.mxu0 0
      %2839 = vmatpush1.bf16.msra.mxu0 0
      %2840 = vmatprep.subr.bf16.mxu0 0
      %2841 = vmatpush1.bf16.msra.mxu0 0
      %2842 = vmatprep.mubr.bf16.mxu0 0
      %2843 = vmatmul.mubr.bf16.gmra.mrb[0].mxu0 %v346
      %v2844 = vpop.f32.mrb[0].mxu0
      %v2845 = vadd.f32 0.0, %v2844
      %v2846 = vpop.f32.mrb[0].mxu0
      %v2847 = vpop.f32.mrb[0].mxu0
      %v2848 = vpop.f32.mrb[0].mxu0
      %2849 = vdwg.mxu0
      %v2850 = vadd.f32 %v2800, %v2845
      %v2851 = vmul.f32 %v2850, %v395
      %v2852 = vadd.f32 %v2851, %v401
      %2853 = vmatprep.subr.bf16.mxu0 0
      %2854 = vmatpush1.bf16.msra.mxu0 %v2808
      %2855 = vmatprep.subr.bf16.mxu0 0
      %2856 = vmatpush1.bf16.msra.mxu0 0
      %2857 = vmatprep.subr.bf16.mxu0 0
      %2858 = vmatpush1.bf16.msra.mxu0 0
      %2859 = vmatprep.subr.bf16.mxu0 0
      %2860 = vmatpush1.bf16.msra.mxu0 0
      %2861 = vmatprep.subr.bf16.mxu0 0
      %2862 = vmatpush1.bf16.msra.mxu0 0
      %2863 = vmatprep.subr.bf16.mxu0 0
      %2864 = vmatpush1.bf16.msra.mxu0 0
      %2865 = vmatprep.subr.bf16.mxu0 0
      %2866 = vmatpush1.bf16.msra.mxu0 0
      %2867 = vmatprep.subr.bf16.mxu0 0
      %2868 = vmatpush1.bf16.msra.mxu0 0
      %2869 = vmatprep.subr.bf16.mxu0 0
      %2870 = vmatpush1.bf16.msra.mxu0 0
      %2871 = vmatprep.subr.bf16.mxu0 0
      %2872 = vmatpush1.bf16.msra.mxu0 0
      %2873 = vmatprep.subr.bf16.mxu0 0
      %2874 = vmatpush1.bf16.msra.mxu0 0
      %2875 = vmatprep.subr.bf16.mxu0 0
      %2876 = vmatpush1.bf16.msra.mxu0 0
      %2877 = vmatprep.subr.bf16.mxu0 0
      %2878 = vmatpush1.bf16.msra.mxu0 0
      %2879 = vmatprep.subr.bf16.mxu0 0
      %2880 = vmatpush1.bf16.msra.mxu0 0
      %2881 = vmatprep.subr.bf16.mxu0 0
      %2882 = vmatpush1.bf16.msra.mxu0 0
      %2883 = vmatprep.subr.bf16.mxu0 0
      %2884 = vmatpush1.bf16.msra.mxu0 0
      %2885 = vmatprep.mubr.bf16.mxu0 0
      %2886 = vmatmul.mubr.bf16.gmra.mrb[0].mxu0 %v251
      %v2887 = vpop.f32.mrb[0].mxu0
      %v2888 = vadd.f32 0.0, %v2887
      %v2889 = vpop.f32.mrb[0].mxu0
      %v2890 = vpop.f32.mrb[0].mxu0
      %v2891 = vpop.f32.mrb[0].mxu0
      %2892 = vdwg.mxu0
      %2893 = vmatprep.subr.bf16.mxu0 0
      %2894 = vmatpush1.bf16.msra.mxu0 %v2720
      %2895 = vmatprep.subr.bf16.mxu0 0
      %2896 = vmatpush1.bf16.msra.mxu0 0
      %2897 = vmatprep.subr.bf16.mxu0 0
      %2898 = vmatpush1.bf16.msra.mxu0 0
      %2899 = vmatprep.subr.bf16.mxu0 0
      %2900 = vmatpush1.bf16.msra.mxu0 0
      %2901 = vmatprep.subr.bf16.mxu0 0
      %2902 = vmatpush1.bf16.msra.mxu0 0
      %2903 = vmatprep.subr.bf16.mxu0 0
      %2904 = vmatpush1.bf16.msra.mxu0 0
      %2905 = vmatprep.subr.bf16.mxu0 0
      %2906 = vmatpush1.bf16.msra.mxu0 0
      %2907 = vmatprep.subr.bf16.mxu0 0
      %2908 = vmatpush1.bf16.msra.mxu0 0
      %2909 = vmatprep.subr.bf16.mxu0 0
      %2910 = vmatpush1.bf16.msra.mxu0 0
      %2911 = vmatprep.subr.bf16.mxu0 0
      %2912 = vmatpush1.bf16.msra.mxu0 0
      %2913 = vmatprep.subr.bf16.mxu0 0
      %2914 = vmatpush1.bf16.msra.mxu0 0
      %2915 = vmatprep.subr.bf16.mxu0 0
      %2916 = vmatpush1.bf16.msra.mxu0 0
      %2917 = vmatprep.subr.bf16.mxu0 0
      %2918 = vmatpush1.bf16.msra.mxu0 0
      %2919 = vmatprep.subr.bf16.mxu0 0
      %2920 = vmatpush1.bf16.msra.mxu0 0
      %2921 = vmatprep.subr.bf16.mxu0 0
      %2922 = vmatpush1.bf16.msra.mxu0 0
      %2923 = vmatprep.subr.bf16.mxu0 0
      %2924 = vmatpush1.bf16.msra.mxu0 0
      %2925 = vmatprep.mubr.bf16.mxu0 0
      %2926 = vmatmul.mubr.bf16.gmra.mrb[0].mxu0 %v298
      %v2927 = vpop.f32.mrb[0].mxu0
      %v2928 = vadd.f32 %v2888, %v2927
      %v2929 = vpop.f32.mrb[0].mxu0
      %v2930 = vpop.f32.mrb[0].mxu0
      %v2931 = vpop.f32.mrb[0].mxu0
      %2932 = vdwg.mxu0
      %2933 = vrot.lane.b32.xlu0 %v2716, 119
      %v2934 = vpop.permute.xlu0 %2933
      %v2936 = vsel %vm253, %v2934, 0
      %2938 = vmatprep.subr.bf16.mxu0 0
      %2939 = vmatpush1.bf16.msra.mxu0 %v2936
      %2940 = vmatprep.subr.bf16.mxu0 0
      %2941 = vmatpush1.bf16.msra.mxu0 0
      %2942 = vmatprep.subr.bf16.mxu0 0
      %2943 = vmatpush1.bf16.msra.mxu0 0
      %2944 = vmatprep.subr.bf16.mxu0 0
      %2945 = vmatpush1.bf16.msra.mxu0 0
      %2946 = vmatprep.subr.bf16.mxu0 0
      %2947 = vmatpush1.bf16.msra.mxu0 0
      %2948 = vmatprep.subr.bf16.mxu0 0
      %2949 = vmatpush1.bf16.msra.mxu0 0
      %2950 = vmatprep.subr.bf16.mxu0 0
      %2951 = vmatpush1.bf16.msra.mxu0 0
      %2952 = vmatprep.subr.bf16.mxu0 0
      %2953 = vmatpush1.bf16.msra.mxu0 0
      %2954 = vmatprep.subr.bf16.mxu0 0
      %2955 = vmatpush1.bf16.msra.mxu0 0
      %2956 = vmatprep.subr.bf16.mxu0 0
      %2957 = vmatpush1.bf16.msra.mxu0 0
      %2958 = vmatprep.subr.bf16.mxu0 0
      %2959 = vmatpush1.bf16.msra.mxu0 0
      %2960 = vmatprep.subr.bf16.mxu0 0
      %2961 = vmatpush1.bf16.msra.mxu0 0
      %2962 = vmatprep.subr.bf16.mxu0 0
      %2963 = vmatpush1.bf16.msra.mxu0 0
      %2964 = vmatprep.subr.bf16.mxu0 0
      %2965 = vmatpush1.bf16.msra.mxu0 0
      %2966 = vmatprep.subr.bf16.mxu0 0
      %2967 = vmatpush1.bf16.msra.mxu0 0
      %2968 = vmatprep.subr.bf16.mxu0 0
      %2969 = vmatpush1.bf16.msra.mxu0 0
      %2970 = vmatprep.mubr.bf16.mxu0 0
      %2971 = vmatmul.mubr.bf16.gmra.mrb[0].mxu0 %v346
      %v2972 = vpop.f32.mrb[0].mxu0
      %v2973 = vadd.f32 0.0, %v2972
      %v2974 = vpop.f32.mrb[0].mxu0
      %v2975 = vpop.f32.mrb[0].mxu0
      %v2976 = vpop.f32.mrb[0].mxu0
      %2977 = vdwg.mxu0
      %v2978 = vadd.f32 %v2928, %v2973
      %v2979 = vmul.f32 %v2978, %v395
      %v2980 = vadd.f32 %v2979, %v401
      %v2981 = vmax.f32 %v2852, %v2980
      %v2982 = vld [vmem:[%s223 + $0x10] sm:$0xc]
      %v2983 = vld [vmem:[%s223 + $0x14] sm:$0xf]
      %v2986 = vunpack.c.l.b16 %v2982
      %v2987 = vunpack.c.l.b16 %v2983
      %v2988 = vpack.c.b16 %v2987, %v2986
      %v2989 = vrot.slane %v2988, 2
      %2990 = vrot.lane.b32.xlu0 %v2989, 120
      %v2991 = vpop.permute.xlu0 %2990
      %v2993 = vsel %vm253, %v2991, 0
      %2995 = vmatprep.subr.bf16.mxu0 0
      %2996 = vmatpush1.bf16.msra.mxu0 %v2993
      %2997 = vmatprep.subr.bf16.mxu0 0
      %2998 = vmatpush1.bf16.msra.mxu0 0
      %2999 = vmatprep.subr.bf16.mxu0 0
      %3000 = vmatpush1.bf16.msra.mxu0 0
      %3001 = vmatprep.subr.bf16.mxu0 0
      %3002 = vmatpush1.bf16.msra.mxu0 0
      %3003 = vmatprep.subr.bf16.mxu0 0
      %3004 = vmatpush1.bf16.msra.mxu0 0
      %3005 = vmatprep.subr.bf16.mxu0 0
      %3006 = vmatpush1.bf16.msra.mxu0 0
      %3007 = vmatprep.subr.bf16.mxu0 0
      %3008 = vmatpush1.bf16.msra.mxu0 0
      %3009 = vmatprep.subr.bf16.mxu0 0
      %3010 = vmatpush1.bf16.msra.mxu0 0
      %3011 = vmatprep.subr.bf16.mxu0 0
      %3012 = vmatpush1.bf16.msra.mxu0 0
      %3013 = vmatprep.subr.bf16.mxu0 0
      %3014 = vmatpush1.bf16.msra.mxu0 0
      %3015 = vmatprep.subr.bf16.mxu0 0
      %3016 = vmatpush1.bf16.msra.mxu0 0
      %3017 = vmatprep.subr.bf16.mxu0 0
      %3018 = vmatpush1.bf16.msra.mxu0 0
      %3019 = vmatprep.subr.bf16.mxu0 0
      %3020 = vmatpush1.bf16.msra.mxu0 0
      %3021 = vmatprep.subr.bf16.mxu0 0
      %3022 = vmatpush1.bf16.msra.mxu0 0
      %3023 = vmatprep.subr.bf16.mxu0 0
      %3024 = vmatpush1.bf16.msra.mxu0 0
      %3025 = vmatprep.subr.bf16.mxu0 0
      %3026 = vmatpush1.bf16.msra.mxu0 0
      %3027 = vmatprep.mubr.bf16.mxu0 0
      %3028 = vmatmul.mubr.bf16.gmra.mrb[0].mxu0 %v251
      %v3029 = vpop.f32.mrb[0].mxu0
      %v3030 = vadd.f32 0.0, %v3029
      %v3031 = vpop.f32.mrb[0].mxu0
      %v3032 = vpop.f32.mrb[0].mxu0
      %v3033 = vpop.f32.mrb[0].mxu0
      %3034 = vdwg.mxu0
      %v3036 = vsel %vm253, %v2989, 0
      %3038 = vmatprep.subr.bf16.mxu0 0
      %3039 = vmatpush1.bf16.msra.mxu0 %v3036
      %3040 = vmatprep.subr.bf16.mxu0 0
      %3041 = vmatpush1.bf16.msra.mxu0 0
      %3042 = vmatprep.subr.bf16.mxu0 0
      %3043 = vmatpush1.bf16.msra.mxu0 0
      %3044 = vmatprep.subr.bf16.mxu0 0
      %3045 = vmatpush1.bf16.msra.mxu0 0
      %3046 = vmatprep.subr.bf16.mxu0 0
      %3047 = vmatpush1.bf16.msra.mxu0 0
      %3048 = vmatprep.subr.bf16.mxu0 0
      %3049 = vmatpush1.bf16.msra.mxu0 0
      %3050 = vmatprep.subr.bf16.mxu0 0
      %3051 = vmatpush1.bf16.msra.mxu0 0
      %3052 = vmatprep.subr.bf16.mxu0 0
      %3053 = vmatpush1.bf16.msra.mxu0 0
      %3054 = vmatprep.subr.bf16.mxu0 0
      %3055 = vmatpush1.bf16.msra.mxu0 0
      %3056 = vmatprep.subr.bf16.mxu0 0
      %3057 = vmatpush1.bf16.msra.mxu0 0
      %3058 = vmatprep.subr.bf16.mxu0 0
      %3059 = vmatpush1.bf16.msra.mxu0 0
      %3060 = vmatprep.subr.bf16.mxu0 0
      %3061 = vmatpush1.bf16.msra.mxu0 0
      %3062 = vmatprep.subr.bf16.mxu0 0
      %3063 = vmatpush1.bf16.msra.mxu0 0
      %3064 = vmatprep.subr.bf16.mxu0 0
      %3065 = vmatpush1.bf16.msra.mxu0 0
      %3066 = vmatprep.subr.bf16.mxu0 0
      %3067 = vmatpush1.bf16.msra.mxu0 0
      %3068 = vmatprep.subr.bf16.mxu0 0
      %3069 = vmatpush1.bf16.msra.mxu0 0
      %3070 = vmatprep.mubr.bf16.mxu0 0
      %3071 = vmatmul.mubr.bf16.gmra.mrb[0].mxu0 %v298
      %v3072 = vpop.f32.mrb[0].mxu0
      %v3073 = vadd.f32 %v3030, %v3072
      %v3074 = vpop.f32.mrb[0].mxu0
      %v3075 = vpop.f32.mrb[0].mxu0
      %v3076 = vpop.f32.mrb[0].mxu0
      %3077 = vdwg.mxu0
      %3078 = vrot.lane.b32.xlu0 %v2989, 127
      %v3079 = vpop.permute.xlu0 %3078
      %v3081 = vsel %vm253, %v3079, 0
      %3083 = vmatprep.subr.bf16.mxu0 0
      %3084 = vmatpush1.bf16.msra.mxu0 %v3081
      %3085 = vmatprep.subr.bf16.mxu0 0
      %3086 = vmatpush1.bf16.msra.mxu0 0
      %3087 = vmatprep.subr.bf16.mxu0 0
      %3088 = vmatpush1.bf16.msra.mxu0 0
      %3089 = vmatprep.subr.bf16.mxu0 0
      %3090 = vmatpush1.bf16.msra.mxu0 0
      %3091 = vmatprep.subr.bf16.mxu0 0
      %3092 = vmatpush1.bf16.msra.mxu0 0
      %3093 = vmatprep.subr.bf16.mxu0 0
      %3094 = vmatpush1.bf16.msra.mxu0 0
      %3095 = vmatprep.subr.bf16.mxu0 0
      %3096 = vmatpush1.bf16.msra.mxu0 0
      %3097 = vmatprep.subr.bf16.mxu0 0
      %3098 = vmatpush1.bf16.msra.mxu0 0
      %3099 = vmatprep.subr.bf16.mxu0 0
      %3100 = vmatpush1.bf16.msra.mxu0 0
      %3101 = vmatprep.subr.bf16.mxu0 0
      %3102 = vmatpush1.bf16.msra.mxu0 0
      %3103 = vmatprep.subr.bf16.mxu0 0
      %3104 = vmatpush1.bf16.msra.mxu0 0
      %3105 = vmatprep.subr.bf16.mxu0 0
      %3106 = vmatpush1.bf16.msra.mxu0 0
      %3107 = vmatprep.subr.bf16.mxu0 0
      %3108 = vmatpush1.bf16.msra.mxu0 0
      %3109 = vmatprep.subr.bf16.mxu0 0
      %3110 = vmatpush1.bf16.msra.mxu0 0
      %3111 = vmatprep.subr.bf16.mxu0 0
      %3112 = vmatpush1.bf16.msra.mxu0 0
      %3113 = vmatprep.subr.bf16.mxu0 0
      %3114 = vmatpush1.bf16.msra.mxu0 0
      %3115 = vmatprep.mubr.bf16.mxu0 0
      %3116 = vmatmul.mubr.bf16.gmra.mrb[0].mxu0 %v346
      %v3117 = vpop.f32.mrb[0].mxu0
      %v3118 = vadd.f32 0.0, %v3117
      %v3119 = vpop.f32.mrb[0].mxu0
      %v3120 = vpop.f32.mrb[0].mxu0
      %v3121 = vpop.f32.mrb[0].mxu0
      %3122 = vdwg.mxu0
      %v3123 = vadd.f32 %v3073, %v3118
      %v3124 = vmul.f32 %v3123, %v395
      %v3125 = vadd.f32 %v3124, %v401
      %v3126 = vmax.f32 %v2981, %v3125
      %3127 = vmatprep.subr.bf16.mxu0 0
      %3128 = vmatpush1.bf16.msra.mxu0 %v3081
      %3129 = vmatprep.subr.bf16.mxu0 0
      %3130 = vmatpush1.bf16.msra.mxu0 0
      %3131 = vmatprep.subr.bf16.mxu0 0
      %3132 = vmatpush1.bf16.msra.mxu0 0
      %3133 = vmatprep.subr.bf16.mxu0 0
      %3134 = vmatpush1.bf16.msra.mxu0 0
      %3135 = vmatprep.subr.bf16.mxu0 0
      %3136 = vmatpush1.bf16.msra.mxu0 0
      %3137 = vmatprep.subr.bf16.mxu0 0
      %3138 = vmatpush1.bf16.msra.mxu0 0
      %3139 = vmatprep.subr.bf16.mxu0 0
      %3140 = vmatpush1.bf16.msra.mxu0 0
      %3141 = vmatprep.subr.bf16.mxu0 0
      %3142 = vmatpush1.bf16.msra.mxu0 0
      %3143 = vmatprep.subr.bf16.mxu0 0
      %3144 = vmatpush1.bf16.msra.mxu0 0
      %3145 = vmatprep.subr.bf16.mxu0 0
      %3146 = vmatpush1.bf16.msra.mxu0 0
      %3147 = vmatprep.subr.bf16.mxu0 0
      %3148 = vmatpush1.bf16.msra.mxu0 0
      %3149 = vmatprep.subr.bf16.mxu0 0
      %3150 = vmatpush1.bf16.msra.mxu0 0
      %3151 = vmatprep.subr.bf16.mxu0 0
      %3152 = vmatpush1.bf16.msra.mxu0 0
      %3153 = vmatprep.subr.bf16.mxu0 0
      %3154 = vmatpush1.bf16.msra.mxu0 0
      %3155 = vmatprep.subr.bf16.mxu0 0
      %3156 = vmatpush1.bf16.msra.mxu0 0
      %3157 = vmatprep.subr.bf16.mxu0 0
      %3158 = vmatpush1.bf16.msra.mxu0 0
      %3159 = vmatprep.mubr.bf16.mxu0 0
      %3160 = vmatmul.mubr.bf16.gmra.mrb[0].mxu0 %v251
      %v3161 = vpop.f32.mrb[0].mxu0
      %v3162 = vadd.f32 0.0, %v3161
      %v3163 = vpop.f32.mrb[0].mxu0
      %v3164 = vpop.f32.mrb[0].mxu0
      %v3165 = vpop.f32.mrb[0].mxu0
      %3166 = vdwg.mxu0
      %3167 = vmatprep.subr.bf16.mxu0 0
      %3168 = vmatpush1.bf16.msra.mxu0 %v2993
      %3169 = vmatprep.subr.bf16.mxu0 0
      %3170 = vmatpush1.bf16.msra.mxu0 0
      %3171 = vmatprep.subr.bf16.mxu0 0
      %3172 = vmatpush1.bf16.msra.mxu0 0
      %3173 = vmatprep.subr.bf16.mxu0 0
      %3174 = vmatpush1.bf16.msra.mxu0 0
      %3175 = vmatprep.subr.bf16.mxu0 0
      %3176 = vmatpush1.bf16.msra.mxu0 0
      %3177 = vmatprep.subr.bf16.mxu0 0
      %3178 = vmatpush1.bf16.msra.mxu0 0
      %3179 = vmatprep.subr.bf16.mxu0 0
      %3180 = vmatpush1.bf16.msra.mxu0 0
      %3181 = vmatprep.subr.bf16.mxu0 0
      %3182 = vmatpush1.bf16.msra.mxu0 0
      %3183 = vmatprep.subr.bf16.mxu0 0
      %3184 = vmatpush1.bf16.msra.mxu0 0
      %3185 = vmatprep.subr.bf16.mxu0 0
      %3186 = vmatpush1.bf16.msra.mxu0 0
      %3187 = vmatprep.subr.bf16.mxu0 0
      %3188 = vmatpush1.bf16.msra.mxu0 0
      %3189 = vmatprep.subr.bf16.mxu0 0
      %3190 = vmatpush1.bf16.msra.mxu0 0
      %3191 = vmatprep.subr.bf16.mxu0 0
      %3192 = vmatpush1.bf16.msra.mxu0 0
      %3193 = vmatprep.subr.bf16.mxu0 0
      %3194 = vmatpush1.bf16.msra.mxu0 0
      %3195 = vmatprep.subr.bf16.mxu0 0
      %3196 = vmatpush1.bf16.msra.mxu0 0
      %3197 = vmatprep.subr.bf16.mxu0 0
      %3198 = vmatpush1.bf16.msra.mxu0 0
      %3199 = vmatprep.mubr.bf16.mxu0 0
      %3200 = vmatmul.mubr.bf16.gmra.mrb[0].mxu0 %v298
      %v3201 = vpop.f32.mrb[0].mxu0
      %v3202 = vadd.f32 %v3162, %v3201
      %v3203 = vpop.f32.mrb[0].mxu0
      %v3204 = vpop.f32.mrb[0].mxu0
      %v3205 = vpop.f32.mrb[0].mxu0
      %3206 = vdwg.mxu0
      %3207 = vrot.lane.b32.xlu0 %v2989, 119
      %v3208 = vpop.permute.xlu0 %3207
      %v3210 = vsel %vm253, %v3208, 0
      %3212 = vmatprep.subr.bf16.mxu0 0
      %3213 = vmatpush1.bf16.msra.mxu0 %v3210
      %3214 = vmatprep.subr.bf16.mxu0 0
      %3215 = vmatpush1.bf16.msra.mxu0 0
      %3216 = vmatprep.subr.bf16.mxu0 0
      %3217 = vmatpush1.bf16.msra.mxu0 0
      %3218 = vmatprep.subr.bf16.mxu0 0
      %3219 = vmatpush1.bf16.msra.mxu0 0
      %3220 = vmatprep.subr.bf16.mxu0 0
      %3221 = vmatpush1.bf16.msra.mxu0 0
      %3222 = vmatprep.subr.bf16.mxu0 0
      %3223 = vmatpush1.bf16.msra.mxu0 0
      %3224 = vmatprep.subr.bf16.mxu0 0
      %3225 = vmatpush1.bf16.msra.mxu0 0
      %3226 = vmatprep.subr.bf16.mxu0 0
      %3227 = vmatpush1.bf16.msra.mxu0 0
      %3228 = vmatprep.subr.bf16.mxu0 0
      %3229 = vmatpush1.bf16.msra.mxu0 0
      %3230 = vmatprep.subr.bf16.mxu0 0
      %3231 = vmatpush1.bf16.msra.mxu0 0
      %3232 = vmatprep.subr.bf16.mxu0 0
      %3233 = vmatpush1.bf16.msra.mxu0 0
      %3234 = vmatprep.subr.bf16.mxu0 0
      %3235 = vmatpush1.bf16.msra.mxu0 0
      %3236 = vmatprep.subr.bf16.mxu0 0
      %3237 = vmatpush1.bf16.msra.mxu0 0
      %3238 = vmatprep.subr.bf16.mxu0 0
      %3239 = vmatpush1.bf16.msra.mxu0 0
      %3240 = vmatprep.subr.bf16.mxu0 0
      %3241 = vmatpush1.bf16.msra.mxu0 0
      %3242 = vmatprep.subr.bf16.mxu0 0
      %3243 = vmatpush1.bf16.msra.mxu0 0
      %3244 = vmatprep.mubr.bf16.mxu0 0
      %3245 = vmatmul.mubr.bf16.gmra.mrb[0].mxu0 %v346
      %v3246 = vpop.f32.mrb[0].mxu0
      %v3247 = vadd.f32 0.0, %v3246
      %v3248 = vpop.f32.mrb[0].mxu0
      %v3249 = vpop.f32.mrb[0].mxu0
      %v3250 = vpop.f32.mrb[0].mxu0
      %3251 = vdwg.mxu0
      %v3252 = vadd.f32 %v3202, %v3247
      %v3253 = vmul.f32 %v3252, %v395
      %v3254 = vadd.f32 %v3253, %v401
      %v3255 = vmax.f32 %v3126, %v3254
      %v3257 = vcombine.high %v3255, %v3255
      %v3259 = vunpack.c.l.s4 1966171168
      %v3260 = vunpack.c.0.s8 %v3259
      %v3261 = vlaneseq
      %v3262 = vshrl.u32 %v3261, 7
      %v3263 = vsub.s32 %v3260, %v3262
      %v3264 = vrot.slane %v3255, %v3263
      %v3266 = vunpack.c.l.s4 1966171168
      %v3267 = vunpack.c.0.s8 %v3266
      %v3268 = vlaneseq
      %v3269 = vshrl.u32 %v3268, 7
      %v3270 = vsub.s32 %v3267, %v3269
      %v3271 = vrot.slane %v3257, %v3270
      %v3272 = vcombine.high %v3264, %v3264
      %v3273 = vcombine.high %v3271, %v3271
      %v3275 = vunpack.c.l.s4 1966171168
      %v3276 = vunpack.c.0.s8 %v3275
      %v3277 = vlaneseq
      %v3278 = vshrl.u32 %v3277, 7
      %v3279 = vsub.s32 %v3276, %v3278
      %v3280 = vrot.slane %v3264, %v3279
      %v3282 = vunpack.c.l.s4 1966171168
      %v3283 = vunpack.c.0.s8 %v3282
      %v3284 = vlaneseq
      %v3285 = vshrl.u32 %v3284, 7
      %v3286 = vsub.s32 %v3283, %v3285
      %v3287 = vrot.slane %v3271, %v3286
      %v3289 = vunpack.c.l.s4 1966171168
      %v3290 = vunpack.c.0.s8 %v3289
      %v3291 = vlaneseq
      %v3292 = vshrl.u32 %v3291, 7
      %v3293 = vsub.s32 %v3290, %v3292
      %v3294 = vrot.slane %v3272, %v3293
      %v3296 = vunpack.c.l.s4 1966171168
      %v3297 = vunpack.c.0.s8 %v3296
      %v3298 = vlaneseq
      %v3299 = vshrl.u32 %v3298, 7
      %v3300 = vsub.s32 %v3297, %v3299
      %v3301 = vrot.slane %v3273, %v3300
      %v3302 = vcombine.high %v3280, %v3280
      %v3303 = vcombine.high %v3287, %v3287
      %v3304 = vcombine.high %v3294, %v3294
      %v3305 = vcombine.high %v3301, %v3301
      %3314 = vst.msk [vmem:[%s231 + $0x4] sm:$0x1] %vm865, %v3280
      %3315 = vst.msk [vmem:[%s231 + $0xc] sm:$0x1] %vm865, %v3294
      %3316 = vst.msk [vmem:[%s231 + $0x14] sm:$0x1] %vm865, %v3302
      %3317 = vst.msk [vmem:[%s231 + $0x1c] sm:$0x1] %vm865, %v3304
      %3318 = vst.msk [vmem:[%s231 + $0x24] sm:$0x1] %vm865, %v3287
      %3319 = vst.msk [vmem:[%s231 + $0x2c] sm:$0x1] %vm865, %v3301
      %3320 = vst.msk [vmem:[%s231 + $0x34] sm:$0x1] %vm865, %v3303
      %3321 = vst.msk [vmem:[%s231 + $0x3c] sm:$0x1] %vm865, %v3305
      %v3322 = vld [vmem:[%s223 + $0x14] sm:$0xf]
      %v3323 = vld [vmem:[%s223 + $0x18] sm:$0x3]
      %v3326 = vunpack.c.l.b16 %v3322
      %v3327 = vunpack.c.l.b16 %v3323
      %v3328 = vpack.c.b16 %v3327, %v3326
      %3329 = vrot.lane.b32.xlu0 %v3328, 120
      %v3330 = vpop.permute.xlu0 %3329
      %v3332 = vsel %vm253, %v3330, 0
      %3334 = vmatprep.subr.bf16.mxu0 0
      %3335 = vmatpush1.bf16.msra.mxu0 %v3332
      %3336 = vmatprep.subr.bf16.mxu0 0
      %3337 = vmatpush1.bf16.msra.mxu0 0
      %3338 = vmatprep.subr.bf16.mxu0 0
      %3339 = vmatpush1.bf16.msra.mxu0 0
      %3340 = vmatprep.subr.bf16.mxu0 0
      %3341 = vmatpush1.bf16.msra.mxu0 0
      %3342 = vmatprep.subr.bf16.mxu0 0
      %3343 = vmatpush1.bf16.msra.mxu0 0
      %3344 = vmatprep.subr.bf16.mxu0 0
      %3345 = vmatpush1.bf16.msra.mxu0 0
      %3346 = vmatprep.subr.bf16.mxu0 0
      %3347 = vmatpush1.bf16.msra.mxu0 0
      %3348 = vmatprep.subr.bf16.mxu0 0
      %3349 = vmatpush1.bf16.msra.mxu0 0
      %3350 = vmatprep.subr.bf16.mxu0 0
      %3351 = vmatpush1.bf16.msra.mxu0 0
      %3352 = vmatprep.subr.bf16.mxu0 0
      %3353 = vmatpush1.bf16.msra.mxu0 0
      %3354 = vmatprep.subr.bf16.mxu0 0
      %3355 = vmatpush1.bf16.msra.mxu0 0
      %3356 = vmatprep.subr.bf16.mxu0 0
      %3357 = vmatpush1.bf16.msra.mxu0 0
      %3358 = vmatprep.subr.bf16.mxu0 0
      %3359 = vmatpush1.bf16.msra.mxu0 0
      %3360 = vmatprep.subr.bf16.mxu0 0
      %3361 = vmatpush1.bf16.msra.mxu0 0
      %3362 = vmatprep.subr.bf16.mxu0 0
      %3363 = vmatpush1.bf16.msra.mxu0 0
      %3364 = vmatprep.subr.bf16.mxu0 0
      %3365 = vmatpush1.bf16.msra.mxu0 0
      %3366 = vmatprep.mubr.bf16.mxu0 0
      %3367 = vmatmul.mubr.bf16.gmra.mrb[0].mxu0 %v251
      %v3368 = vpop.f32.mrb[0].mxu0
      %v3369 = vadd.f32 0.0, %v3368
      %v3370 = vpop.f32.mrb[0].mxu0
      %v3371 = vpop.f32.mrb[0].mxu0
      %v3372 = vpop.f32.mrb[0].mxu0
      %3373 = vdwg.mxu0
      %v3375 = vsel %vm253, %v3328, 0
      %3377 = vmatprep.subr.bf16.mxu0 0
      %3378 = vmatpush1.bf16.msra.mxu0 %v3375
      %3379 = vmatprep.subr.bf16.mxu0 0
      %3380 = vmatpush1.bf16.msra.mxu0 0
      %3381 = vmatprep.subr.bf16.mxu0 0
      %3382 = vmatpush1.bf16.msra.mxu0 0
      %3383 = vmatprep.subr.bf16.mxu0 0
      %3384 = vmatpush1.bf16.msra.mxu0 0
      %3385 = vmatprep.subr.bf16.mxu0 0
      %3386 = vmatpush1.bf16.msra.mxu0 0
      %3387 = vmatprep.subr.bf16.mxu0 0
      %3388 = vmatpush1.bf16.msra.mxu0 0
      %3389 = vmatprep.subr.bf16.mxu0 0
      %3390 = vmatpush1.bf16.msra.mxu0 0
      %3391 = vmatprep.subr.bf16.mxu0 0
      %3392 = vmatpush1.bf16.msra.mxu0 0
      %3393 = vmatprep.subr.bf16.mxu0 0
      %3394 = vmatpush1.bf16.msra.mxu0 0
      %3395 = vmatprep.subr.bf16.mxu0 0
      %3396 = vmatpush1.bf16.msra.mxu0 0
      %3397 = vmatprep.subr.bf16.mxu0 0
      %3398 = vmatpush1.bf16.msra.mxu0 0
      %3399 = vmatprep.subr.bf16.mxu0 0
      %3400 = vmatpush1.bf16.msra.mxu0 0
      %3401 = vmatprep.subr.bf16.mxu0 0
      %3402 = vmatpush1.bf16.msra.mxu0 0
      %3403 = vmatprep.subr.bf16.mxu0 0
      %3404 = vmatpush1.bf16.msra.mxu0 0
      %3405 = vmatprep.subr.bf16.mxu0 0
      %3406 = vmatpush1.bf16.msra.mxu0 0
      %3407 = vmatprep.subr.bf16.mxu0 0
      %3408 = vmatpush1.bf16.msra.mxu0 0
      %3409 = vmatprep.mubr.bf16.mxu0 0
      %3410 = vmatmul.mubr.bf16.gmra.mrb[0].mxu0 %v298
      %v3411 = vpop.f32.mrb[0].mxu0
      %v3412 = vadd.f32 %v3369, %v3411
      %v3413 = vpop.f32.mrb[0].mxu0
      %v3414 = vpop.f32.mrb[0].mxu0
      %v3415 = vpop.f32.mrb[0].mxu0
      %3416 = vdwg.mxu0
      %3417 = vrot.lane.b32.xlu0 %v3328, 127
      %v3418 = vpop.permute.xlu0 %3417
      %v3420 = vsel %vm253, %v3418, 0
      %3422 = vmatprep.subr.bf16.mxu0 0
      %3423 = vmatpush1.bf16.msra.mxu0 %v3420
      %3424 = vmatprep.subr.bf16.mxu0 0
      %3425 = vmatpush1.bf16.msra.mxu0 0
      %3426 = vmatprep.subr.bf16.mxu0 0
      %3427 = vmatpush1.bf16.msra.mxu0 0
      %3428 = vmatprep.subr.bf16.mxu0 0
      %3429 = vmatpush1.bf16.msra.mxu0 0
      %3430 = vmatprep.subr.bf16.mxu0 0
      %3431 = vmatpush1.bf16.msra.mxu0 0
      %3432 = vmatprep.subr.bf16.mxu0 0
      %3433 = vmatpush1.bf16.msra.mxu0 0
      %3434 = vmatprep.subr.bf16.mxu0 0
      %3435 = vmatpush1.bf16.msra.mxu0 0
      %3436 = vmatprep.subr.bf16.mxu0 0
      %3437 = vmatpush1.bf16.msra.mxu0 0
      %3438 = vmatprep.subr.bf16.mxu0 0
      %3439 = vmatpush1.bf16.msra.mxu0 0
      %3440 = vmatprep.subr.bf16.mxu0 0
      %3441 = vmatpush1.bf16.msra.mxu0 0
      %3442 = vmatprep.subr.bf16.mxu0 0
      %3443 = vmatpush1.bf16.msra.mxu0 0
      %3444 = vmatprep.subr.bf16.mxu0 0
      %3445 = vmatpush1.bf16.msra.mxu0 0
      %3446 = vmatprep.subr.bf16.mxu0 0
      %3447 = vmatpush1.bf16.msra.mxu0 0
      %3448 = vmatprep.subr.bf16.mxu0 0
      %3449 = vmatpush1.bf16.msra.mxu0 0
      %3450 = vmatprep.subr.bf16.mxu0 0
      %3451 = vmatpush1.bf16.msra.mxu0 0
      %3452 = vmatprep.subr.bf16.mxu0 0
      %3453 = vmatpush1.bf16.msra.mxu0 0
      %3454 = vmatprep.mubr.bf16.mxu0 0
      %3455 = vmatmul.mubr.bf16.gmra.mrb[0].mxu0 %v346
      %v3456 = vpop.f32.mrb[0].mxu0
      %v3457 = vadd.f32 0.0, %v3456
      %v3458 = vpop.f32.mrb[0].mxu0
      %v3459 = vpop.f32.mrb[0].mxu0
      %v3460 = vpop.f32.mrb[0].mxu0
      %3461 = vdwg.mxu0
      %v3462 = vadd.f32 %v3412, %v3457
      %v3463 = vmul.f32 %v3462, %v395
      %v3464 = vadd.f32 %v3463, %v401
      %3465 = vmatprep.subr.bf16.mxu0 0
      %3466 = vmatpush1.bf16.msra.mxu0 %v3420
      %3467 = vmatprep.subr.bf16.mxu0 0
      %3468 = vmatpush1.bf16.msra.mxu0 0
      %3469 = vmatprep.subr.bf16.mxu0 0
      %3470 = vmatpush1.bf16.msra.mxu0 0
      %3471 = vmatprep.subr.bf16.mxu0 0
      %3472 = vmatpush1.bf16.msra.mxu0 0
      %3473 = vmatprep.subr.bf16.mxu0 0
      %3474 = vmatpush1.bf16.msra.mxu0 0
      %3475 = vmatprep.subr.bf16.mxu0 0
      %3476 = vmatpush1.bf16.msra.mxu0 0
      %3477 = vmatprep.subr.bf16.mxu0 0
      %3478 = vmatpush1.bf16.msra.mxu0 0
      %3479 = vmatprep.subr.bf16.mxu0 0
      %3480 = vmatpush1.bf16.msra.mxu0 0
      %3481 = vmatprep.subr.bf16.mxu0 0
      %3482 = vmatpush1.bf16.msra.mxu0 0
      %3483 = vmatprep.subr.bf16.mxu0 0
      %3484 = vmatpush1.bf16.msra.mxu0 0
      %3485 = vmatprep.subr.bf16.mxu0 0
      %3486 = vmatpush1.bf16.msra.mxu0 0
      %3487 = vmatprep.subr.bf16.mxu0 0
      %3488 = vmatpush1.bf16.msra.mxu0 0
      %3489 = vmatprep.subr.bf16.mxu0 0
      %3490 = vmatpush1.bf16.msra.mxu0 0
      %3491 = vmatprep.subr.bf16.mxu0 0
      %3492 = vmatpush1.bf16.msra.mxu0 0
      %3493 = vmatprep.subr.bf16.mxu0 0
      %3494 = vmatpush1.bf16.msra.mxu0 0
      %3495 = vmatprep.subr.bf16.mxu0 0
      %3496 = vmatpush1.bf16.msra.mxu0 0
      %3497 = vmatprep.mubr.bf16.mxu0 0
      %3498 = vmatmul.mubr.bf16.gmra.mrb[0].mxu0 %v251
      %v3499 = vpop.f32.mrb[0].mxu0
      %v3500 = vadd.f32 0.0, %v3499
      %v3501 = vpop.f32.mrb[0].mxu0
      %v3502 = vpop.f32.mrb[0].mxu0
      %v3503 = vpop.f32.mrb[0].mxu0
      %3504 = vdwg.mxu0
      %3505 = vmatprep.subr.bf16.mxu0 0
      %3506 = vmatpush1.bf16.msra.mxu0 %v3332
      %3507 = vmatprep.subr.bf16.mxu0 0
      %3508 = vmatpush1.bf16.msra.mxu0 0
      %3509 = vmatprep.subr.bf16.mxu0 0
      %3510 = vmatpush1.bf16.msra.mxu0 0
      %3511 = vmatprep.subr.bf16.mxu0 0
      %3512 = vmatpush1.bf16.msra.mxu0 0
      %3513 = vmatprep.subr.bf16.mxu0 0
      %3514 = vmatpush1.bf16.msra.mxu0 0
      %3515 = vmatprep.subr.bf16.mxu0 0
      %3516 = vmatpush1.bf16.msra.mxu0 0
      %3517 = vmatprep.subr.bf16.mxu0 0
      %3518 = vmatpush1.bf16.msra.mxu0 0
      %3519 = vmatprep.subr.bf16.mxu0 0
      %3520 = vmatpush1.bf16.msra.mxu0 0
      %3521 = vmatprep.subr.bf16.mxu0 0
      %3522 = vmatpush1.bf16.msra.mxu0 0
      %3523 = vmatprep.subr.bf16.mxu0 0
      %3524 = vmatpush1.bf16.msra.mxu0 0
      %3525 = vmatprep.subr.bf16.mxu0 0
      %3526 = vmatpush1.bf16.msra.mxu0 0
      %3527 = vmatprep.subr.bf16.mxu0 0
      %3528 = vmatpush1.bf16.msra.mxu0 0
      %3529 = vmatprep.subr.bf16.mxu0 0
      %3530 = vmatpush1.bf16.msra.mxu0 0
      %3531 = vmatprep.subr.bf16.mxu0 0
      %3532 = vmatpush1.bf16.msra.mxu0 0
      %3533 = vmatprep.subr.bf16.mxu0 0
      %3534 = vmatpush1.bf16.msra.mxu0 0
      %3535 = vmatprep.subr.bf16.mxu0 0
      %3536 = vmatpush1.bf16.msra.mxu0 0
      %3537 = vmatprep.mubr.bf16.mxu0 0
      %3538 = vmatmul.mubr.bf16.gmra.mrb[0].mxu0 %v298
      %v3539 = vpop.f32.mrb[0].mxu0
      %v3540 = vadd.f32 %v3500, %v3539
      %v3541 = vpop.f32.mrb[0].mxu0
      %v3542 = vpop.f32.mrb[0].mxu0
      %v3543 = vpop.f32.mrb[0].mxu0
      %3544 = vdwg.mxu0
      %3545 = vrot.lane.b32.xlu0 %v3328, 119
      %v3546 = vpop.permute.xlu0 %3545
      %v3548 = vsel %vm253, %v3546, 0
      %3550 = vmatprep.subr.bf16.mxu0 0
      %3551 = vmatpush1.bf16.msra.mxu0 %v3548
      %3552 = vmatprep.subr.bf16.mxu0 0
      %3553 = vmatpush1.bf16.msra.mxu0 0
      %3554 = vmatprep.subr.bf16.mxu0 0
      %3555 = vmatpush1.bf16.msra.mxu0 0
      %3556 = vmatprep.subr.bf16.mxu0 0
      %3557 = vmatpush1.bf16.msra.mxu0 0
      %3558 = vmatprep.subr.bf16.mxu0 0
      %3559 = vmatpush1.bf16.msra.mxu0 0
      %3560 = vmatprep.subr.bf16.mxu0 0
      %3561 = vmatpush1.bf16.msra.mxu0 0
      %3562 = vmatprep.subr.bf16.mxu0 0
      %3563 = vmatpush1.bf16.msra.mxu0 0
      %3564 = vmatprep.subr.bf16.mxu0 0
      %3565 = vmatpush1.bf16.msra.mxu0 0
      %3566 = vmatprep.subr.bf16.mxu0 0
      %3567 = vmatpush1.bf16.msra.mxu0 0
      %3568 = vmatprep.subr.bf16.mxu0 0
      %3569 = vmatpush1.bf16.msra.mxu0 0
      %3570 = vmatprep.subr.bf16.mxu0 0
      %3571 = vmatpush1.bf16.msra.mxu0 0
      %3572 = vmatprep.subr.bf16.mxu0 0
      %3573 = vmatpush1.bf16.msra.mxu0 0
      %3574 = vmatprep.subr.bf16.mxu0 0
      %3575 = vmatpush1.bf16.msra.mxu0 0
      %3576 = vmatprep.subr.bf16.mxu0 0
      %3577 = vmatpush1.bf16.msra.mxu0 0
      %3578 = vmatprep.subr.bf16.mxu0 0
      %3579 = vmatpush1.bf16.msra.mxu0 0
      %3580 = vmatprep.subr.bf16.mxu0 0
      %3581 = vmatpush1.bf16.msra.mxu0 0
      %3582 = vmatprep.mubr.bf16.mxu0 0
      %3583 = vmatmul.mubr.bf16.gmra.mrb[0].mxu0 %v346
      %v3584 = vpop.f32.mrb[0].mxu0
      %v3585 = vadd.f32 0.0, %v3584
      %v3586 = vpop.f32.mrb[0].mxu0
      %v3587 = vpop.f32.mrb[0].mxu0
      %v3588 = vpop.f32.mrb[0].mxu0
      %3589 = vdwg.mxu0
      %v3590 = vadd.f32 %v3540, %v3585
      %v3591 = vmul.f32 %v3590, %v395
      %v3592 = vadd.f32 %v3591, %v401
      %v3593 = vmax.f32 %v3464, %v3592
      %v3594 = vld [vmem:[%s223 + $0x14] sm:$0xc]
      %v3595 = vld [vmem:[%s223 + $0x18] sm:$0xf]
      %v3598 = vunpack.c.l.b16 %v3594
      %v3599 = vunpack.c.l.b16 %v3595
      %v3600 = vpack.c.b16 %v3599, %v3598
      %v3601 = vrot.slane %v3600, 2
      %3602 = vrot.lane.b32.xlu0 %v3601, 120
      %v3603 = vpop.permute.xlu0 %3602
      %v3605 = vsel %vm253, %v3603, 0
      %3607 = vmatprep.subr.bf16.mxu0 0
      %3608 = vmatpush1.bf16.msra.mxu0 %v3605
      %3609 = vmatprep.subr.bf16.mxu0 0
      %3610 = vmatpush1.bf16.msra.mxu0 0
      %3611 = vmatprep.subr.bf16.mxu0 0
      %3612 = vmatpush1.bf16.msra.mxu0 0
      %3613 = vmatprep.subr.bf16.mxu0 0
      %3614 = vmatpush1.bf16.msra.mxu0 0
      %3615 = vmatprep.subr.bf16.mxu0 0
      %3616 = vmatpush1.bf16.msra.mxu0 0
      %3617 = vmatprep.subr.bf16.mxu0 0
      %3618 = vmatpush1.bf16.msra.mxu0 0
      %3619 = vmatprep.subr.bf16.mxu0 0
      %3620 = vmatpush1.bf16.msra.mxu0 0
      %3621 = vmatprep.subr.bf16.mxu0 0
      %3622 = vmatpush1.bf16.msra.mxu0 0
      %3623 = vmatprep.subr.bf16.mxu0 0
      %3624 = vmatpush1.bf16.msra.mxu0 0
      %3625 = vmatprep.subr.bf16.mxu0 0
      %3626 = vmatpush1.bf16.msra.mxu0 0
      %3627 = vmatprep.subr.bf16.mxu0 0
      %3628 = vmatpush1.bf16.msra.mxu0 0
      %3629 = vmatprep.subr.bf16.mxu0 0
      %3630 = vmatpush1.bf16.msra.mxu0 0
      %3631 = vmatprep.subr.bf16.mxu0 0
      %3632 = vmatpush1.bf16.msra.mxu0 0
      %3633 = vmatprep.subr.bf16.mxu0 0
      %3634 = vmatpush1.bf16.msra.mxu0 0
      %3635 = vmatprep.subr.bf16.mxu0 0
      %3636 = vmatpush1.bf16.msra.mxu0 0
      %3637 = vmatprep.subr.bf16.mxu0 0
      %3638 = vmatpush1.bf16.msra.mxu0 0
      %3639 = vmatprep.mubr.bf16.mxu0 0
      %3640 = vmatmul.mubr.bf16.gmra.mrb[0].mxu0 %v251
      %v3641 = vpop.f32.mrb[0].mxu0
      %v3642 = vadd.f32 0.0, %v3641
      %v3643 = vpop.f32.mrb[0].mxu0
      %v3644 = vpop.f32.mrb[0].mxu0
      %v3645 = vpop.f32.mrb[0].mxu0
      %3646 = vdwg.mxu0
      %v3648 = vsel %vm253, %v3601, 0
      %3650 = vmatprep.subr.bf16.mxu0 0
      %3651 = vmatpush1.bf16.msra.mxu0 %v3648
      %3652 = vmatprep.subr.bf16.mxu0 0
      %3653 = vmatpush1.bf16.msra.mxu0 0
      %3654 = vmatprep.subr.bf16.mxu0 0
      %3655 = vmatpush1.bf16.msra.mxu0 0
      %3656 = vmatprep.subr.bf16.mxu0 0
      %3657 = vmatpush1.bf16.msra.mxu0 0
      %3658 = vmatprep.subr.bf16.mxu0 0
      %3659 = vmatpush1.bf16.msra.mxu0 0
      %3660 = vmatprep.subr.bf16.mxu0 0
      %3661 = vmatpush1.bf16.msra.mxu0 0
      %3662 = vmatprep.subr.bf16.mxu0 0
      %3663 = vmatpush1.bf16.msra.mxu0 0
      %3664 = vmatprep.subr.bf16.mxu0 0
      %3665 = vmatpush1.bf16.msra.mxu0 0
      %3666 = vmatprep.subr.bf16.mxu0 0
      %3667 = vmatpush1.bf16.msra.mxu0 0
      %3668 = vmatprep.subr.bf16.mxu0 0
      %3669 = vmatpush1.bf16.msra.mxu0 0
      %3670 = vmatprep.subr.bf16.mxu0 0
      %3671 = vmatpush1.bf16.msra.mxu0 0
      %3672 = vmatprep.subr.bf16.mxu0 0
      %3673 = vmatpush1.bf16.msra.mxu0 0
      %3674 = vmatprep.subr.bf16.mxu0 0
      %3675 = vmatpush1.bf16.msra.mxu0 0
      %3676 = vmatprep.subr.bf16.mxu0 0
      %3677 = vmatpush1.bf16.msra.mxu0 0
      %3678 = vmatprep.subr.bf16.mxu0 0
      %3679 = vmatpush1.bf16.msra.mxu0 0
      %3680 = vmatprep.subr.bf16.mxu0 0
      %3681 = vmatpush1.bf16.msra.mxu0 0
      %3682 = vmatprep.mubr.bf16.mxu0 0
      %3683 = vmatmul.mubr.bf16.gmra.mrb[0].mxu0 %v298
      %v3684 = vpop.f32.mrb[0].mxu0
      %v3685 = vadd.f32 %v3642, %v3684
      %v3686 = vpop.f32.mrb[0].mxu0
      %v3687 = vpop.f32.mrb[0].mxu0
      %v3688 = vpop.f32.mrb[0].mxu0
      %3689 = vdwg.mxu0
      %3690 = vrot.lane.b32.xlu0 %v3601, 127
      %v3691 = vpop.permute.xlu0 %3690
      %v3693 = vsel %vm253, %v3691, 0
      %3695 = vmatprep.subr.bf16.mxu0 0
      %3696 = vmatpush1.bf16.msra.mxu0 %v3693
      %3697 = vmatprep.subr.bf16.mxu0 0
      %3698 = vmatpush1.bf16.msra.mxu0 0
      %3699 = vmatprep.subr.bf16.mxu0 0
      %3700 = vmatpush1.bf16.msra.mxu0 0
      %3701 = vmatprep.subr.bf16.mxu0 0
      %3702 = vmatpush1.bf16.msra.mxu0 0
      %3703 = vmatprep.subr.bf16.mxu0 0
      %3704 = vmatpush1.bf16.msra.mxu0 0
      %3705 = vmatprep.subr.bf16.mxu0 0
      %3706 = vmatpush1.bf16.msra.mxu0 0
      %3707 = vmatprep.subr.bf16.mxu0 0
      %3708 = vmatpush1.bf16.msra.mxu0 0
      %3709 = vmatprep.subr.bf16.mxu0 0
      %3710 = vmatpush1.bf16.msra.mxu0 0
      %3711 = vmatprep.subr.bf16.mxu0 0
      %3712 = vmatpush1.bf16.msra.mxu0 0
      %3713 = vmatprep.subr.bf16.mxu0 0
      %3714 = vmatpush1.bf16.msra.mxu0 0
      %3715 = vmatprep.subr.bf16.mxu0 0
      %3716 = vmatpush1.bf16.msra.mxu0 0
      %3717 = vmatprep.subr.bf16.mxu0 0
      %3718 = vmatpush1.bf16.msra.mxu0 0
      %3719 = vmatprep.subr.bf16.mxu0 0
      %3720 = vmatpush1.bf16.msra.mxu0 0
      %3721 = vmatprep.subr.bf16.mxu0 0
      %3722 = vmatpush1.bf16.msra.mxu0 0
      %3723 = vmatprep.subr.bf16.mxu0 0
      %3724 = vmatpush1.bf16.msra.mxu0 0
      %3725 = vmatprep.subr.bf16.mxu0 0
      %3726 = vmatpush1.bf16.msra.mxu0 0
      %3727 = vmatprep.mubr.bf16.mxu0 0
      %3728 = vmatmul.mubr.bf16.gmra.mrb[0].mxu0 %v346
      %v3729 = vpop.f32.mrb[0].mxu0
      %v3730 = vadd.f32 0.0, %v3729
      %v3731 = vpop.f32.mrb[0].mxu0
      %v3732 = vpop.f32.mrb[0].mxu0
      %v3733 = vpop.f32.mrb[0].mxu0
      %3734 = vdwg.mxu0
      %v3735 = vadd.f32 %v3685, %v3730
      %v3736 = vmul.f32 %v3735, %v395
      %v3737 = vadd.f32 %v3736, %v401
      %v3738 = vmax.f32 %v3593, %v3737
      %3739 = vmatprep.subr.bf16.mxu0 0
      %3740 = vmatpush1.bf16.msra.mxu0 %v3693
      %3741 = vmatprep.subr.bf16.mxu0 0
      %3742 = vmatpush1.bf16.msra.mxu0 0
      %3743 = vmatprep.subr.bf16.mxu0 0
      %3744 = vmatpush1.bf16.msra.mxu0 0
      %3745 = vmatprep.subr.bf16.mxu0 0
      %3746 = vmatpush1.bf16.msra.mxu0 0
      %3747 = vmatprep.subr.bf16.mxu0 0
      %3748 = vmatpush1.bf16.msra.mxu0 0
      %3749 = vmatprep.subr.bf16.mxu0 0
      %3750 = vmatpush1.bf16.msra.mxu0 0
      %3751 = vmatprep.subr.bf16.mxu0 0
      %3752 = vmatpush1.bf16.msra.mxu0 0
      %3753 = vmatprep.subr.bf16.mxu0 0
      %3754 = vmatpush1.bf16.msra.mxu0 0
      %3755 = vmatprep.subr.bf16.mxu0 0
      %3756 = vmatpush1.bf16.msra.mxu0 0
      %3757 = vmatprep.subr.bf16.mxu0 0
      %3758 = vmatpush1.bf16.msra.mxu0 0
      %3759 = vmatprep.subr.bf16.mxu0 0
      %3760 = vmatpush1.bf16.msra.mxu0 0
      %3761 = vmatprep.subr.bf16.mxu0 0
      %3762 = vmatpush1.bf16.msra.mxu0 0
      %3763 = vmatprep.subr.bf16.mxu0 0
      %3764 = vmatpush1.bf16.msra.mxu0 0
      %3765 = vmatprep.subr.bf16.mxu0 0
      %3766 = vmatpush1.bf16.msra.mxu0 0
      %3767 = vmatprep.subr.bf16.mxu0 0
      %3768 = vmatpush1.bf16.msra.mxu0 0
      %3769 = vmatprep.subr.bf16.mxu0 0
      %3770 = vmatpush1.bf16.msra.mxu0 0
      %3771 = vmatprep.mubr.bf16.mxu0 0
      %3772 = vmatmul.mubr.bf16.gmra.mrb[0].mxu0 %v251
      %v3773 = vpop.f32.mrb[0].mxu0
      %v3774 = vadd.f32 0.0, %v3773
      %v3775 = vpop.f32.mrb[0].mxu0
      %v3776 = vpop.f32.mrb[0].mxu0
      %v3777 = vpop.f32.mrb[0].mxu0
      %3778 = vdwg.mxu0
      %3779 = vmatprep.subr.bf16.mxu0 0
      %3780 = vmatpush1.bf16.msra.mxu0 %v3605
      %3781 = vmatprep.subr.bf16.mxu0 0
      %3782 = vmatpush1.bf16.msra.mxu0 0
      %3783 = vmatprep.subr.bf16.mxu0 0
      %3784 = vmatpush1.bf16.msra.mxu0 0
      %3785 = vmatprep.subr.bf16.mxu0 0
      %3786 = vmatpush1.bf16.msra.mxu0 0
      %3787 = vmatprep.subr.bf16.mxu0 0
      %3788 = vmatpush1.bf16.msra.mxu0 0
      %3789 = vmatprep.subr.bf16.mxu0 0
      %3790 = vmatpush1.bf16.msra.mxu0 0
      %3791 = vmatprep.subr.bf16.mxu0 0
      %3792 = vmatpush1.bf16.msra.mxu0 0
      %3793 = vmatprep.subr.bf16.mxu0 0
      %3794 = vmatpush1.bf16.msra.mxu0 0
      %3795 = vmatprep.subr.bf16.mxu0 0
      %3796 = vmatpush1.bf16.msra.mxu0 0
      %3797 = vmatprep.subr.bf16.mxu0 0
      %3798 = vmatpush1.bf16.msra.mxu0 0
      %3799 = vmatprep.subr.bf16.mxu0 0
      %3800 = vmatpush1.bf16.msra.mxu0 0
      %3801 = vmatprep.subr.bf16.mxu0 0
      %3802 = vmatpush1.bf16.msra.mxu0 0
      %3803 = vmatprep.subr.bf16.mxu0 0
      %3804 = vmatpush1.bf16.msra.mxu0 0
      %3805 = vmatprep.subr.bf16.mxu0 0
      %3806 = vmatpush1.bf16.msra.mxu0 0
      %3807 = vmatprep.subr.bf16.mxu0 0
      %3808 = vmatpush1.bf16.msra.mxu0 0
      %3809 = vmatprep.subr.bf16.mxu0 0
      %3810 = vmatpush1.bf16.msra.mxu0 0
      %3811 = vmatprep.mubr.bf16.mxu0 0
      %3812 = vmatmul.mubr.bf16.gmra.mrb[0].mxu0 %v298
      %v3813 = vpop.f32.mrb[0].mxu0
      %v3814 = vadd.f32 %v3774, %v3813
      %v3815 = vpop.f32.mrb[0].mxu0
      %v3816 = vpop.f32.mrb[0].mxu0
      %v3817 = vpop.f32.mrb[0].mxu0
      %3818 = vdwg.mxu0
      %3819 = vrot.lane.b32.xlu0 %v3601, 119
      %v3820 = vpop.permute.xlu0 %3819
      %v3822 = vsel %vm253, %v3820, 0
      %3824 = vmatprep.subr.bf16.mxu0 0
      %3825 = vmatpush1.bf16.msra.mxu0 %v3822
      %3826 = vmatprep.subr.bf16.mxu0 0
      %3827 = vmatpush1.bf16.msra.mxu0 0
      %3828 = vmatprep.subr.bf16.mxu0 0
      %3829 = vmatpush1.bf16.msra.mxu0 0
      %3830 = vmatprep.subr.bf16.mxu0 0
      %3831 = vmatpush1.bf16.msra.mxu0 0
      %3832 = vmatprep.subr.bf16.mxu0 0
      %3833 = vmatpush1.bf16.msra.mxu0 0
      %3834 = vmatprep.subr.bf16.mxu0 0
      %3835 = vmatpush1.bf16.msra.mxu0 0
      %3836 = vmatprep.subr.bf16.mxu0 0
      %3837 = vmatpush1.bf16.msra.mxu0 0
      %3838 = vmatprep.subr.bf16.mxu0 0
      %3839 = vmatpush1.bf16.msra.mxu0 0
      %3840 = vmatprep.subr.bf16.mxu0 0
      %3841 = vmatpush1.bf16.msra.mxu0 0
      %3842 = vmatprep.subr.bf16.mxu0 0
      %3843 = vmatpush1.bf16.msra.mxu0 0
      %3844 = vmatprep.subr.bf16.mxu0 0
      %3845 = vmatpush1.bf16.msra.mxu0 0
      %3846 = vmatprep.subr.bf16.mxu0 0
      %3847 = vmatpush1.bf16.msra.mxu0 0
      %3848 = vmatprep.subr.bf16.mxu0 0
      %3849 = vmatpush1.bf16.msra.mxu0 0
      %3850 = vmatprep.subr.bf16.mxu0 0
      %3851 = vmatpush1.bf16.msra.mxu0 0
      %3852 = vmatprep.subr.bf16.mxu0 0
      %3853 = vmatpush1.bf16.msra.mxu0 0
      %3854 = vmatprep.subr.bf16.mxu0 0
      %3855 = vmatpush1.bf16.msra.mxu0 0
      %3856 = vmatprep.mubr.bf16.mxu0 0
      %3857 = vmatmul.mubr.bf16.gmra.mrb[0].mxu0 %v346
      %v3858 = vpop.f32.mrb[0].mxu0
      %v3859 = vadd.f32 0.0, %v3858
      %v3860 = vpop.f32.mrb[0].mxu0
      %v3861 = vpop.f32.mrb[0].mxu0
      %v3862 = vpop.f32.mrb[0].mxu0
      %3863 = vdwg.mxu0
      %v3864 = vadd.f32 %v3814, %v3859
      %v3865 = vmul.f32 %v3864, %v395
      %v3866 = vadd.f32 %v3865, %v401
      %v3867 = vmax.f32 %v3738, %v3866
      %v3869 = vcombine.high %v3867, %v3867
      %v3871 = vunpack.c.l.s4 1966171168
      %v3872 = vunpack.c.0.s8 %v3871
      %v3873 = vlaneseq
      %v3874 = vshrl.u32 %v3873, 7
      %v3875 = vsub.s32 %v3872, %v3874
      %v3876 = vrot.slane %v3867, %v3875
      %v3878 = vunpack.c.l.s4 1966171168
      %v3879 = vunpack.c.0.s8 %v3878
      %v3880 = vlaneseq
      %v3881 = vshrl.u32 %v3880, 7
      %v3882 = vsub.s32 %v3879, %v3881
      %v3883 = vrot.slane %v3869, %v3882
      %v3884 = vcombine.high %v3876, %v3876
      %v3885 = vcombine.high %v3883, %v3883
      %v3887 = vunpack.c.l.s4 1966171168
      %v3888 = vunpack.c.0.s8 %v3887
      %v3889 = vlaneseq
      %v3890 = vshrl.u32 %v3889, 7
      %v3891 = vsub.s32 %v3888, %v3890
      %v3892 = vrot.slane %v3876, %v3891
      %v3894 = vunpack.c.l.s4 1966171168
      %v3895 = vunpack.c.0.s8 %v3894
      %v3896 = vlaneseq
      %v3897 = vshrl.u32 %v3896, 7
      %v3898 = vsub.s32 %v3895, %v3897
      %v3899 = vrot.slane %v3883, %v3898
      %v3901 = vunpack.c.l.s4 1966171168
      %v3902 = vunpack.c.0.s8 %v3901
      %v3903 = vlaneseq
      %v3904 = vshrl.u32 %v3903, 7
      %v3905 = vsub.s32 %v3902, %v3904
      %v3906 = vrot.slane %v3884, %v3905
      %v3908 = vunpack.c.l.s4 1966171168
      %v3909 = vunpack.c.0.s8 %v3908
      %v3910 = vlaneseq
      %v3911 = vshrl.u32 %v3910, 7
      %v3912 = vsub.s32 %v3909, %v3911
      %v3913 = vrot.slane %v3885, %v3912
      %v3914 = vcombine.high %v3892, %v3892
      %v3915 = vcombine.high %v3899, %v3899
      %v3916 = vcombine.high %v3906, %v3906
      %v3917 = vcombine.high %v3913, %v3913
      %3926 = vst.msk [vmem:[%s231 + $0x5] sm:$0x1] %vm865, %v3892
      %3927 = vst.msk [vmem:[%s231 + $0xd] sm:$0x1] %vm865, %v3906
      %3928 = vst.msk [vmem:[%s231 + $0x15] sm:$0x1] %vm865, %v3914
      %3929 = vst.msk [vmem:[%s231 + $0x1d] sm:$0x1] %vm865, %v3916
      %3930 = vst.msk [vmem:[%s231 + $0x25] sm:$0x1] %vm865, %v3899
      %3931 = vst.msk [vmem:[%s231 + $0x2d] sm:$0x1] %vm865, %v3913
      %3932 = vst.msk [vmem:[%s231 + $0x35] sm:$0x1] %vm865, %v3915
      %3933 = vst.msk [vmem:[%s231 + $0x3d] sm:$0x1] %vm865, %v3917
      %v3934 = vld [vmem:[%s223 + $0x18] sm:$0xf]
      %v3935 = vld [vmem:[%s223 + $0x1c] sm:$0x3]
      %v3938 = vunpack.c.l.b16 %v3934
      %v3939 = vunpack.c.l.b16 %v3935
      %v3940 = vpack.c.b16 %v3939, %v3938
      %3941 = vrot.lane.b32.xlu0 %v3940, 120
      %v3942 = vpop.permute.xlu0 %3941
      %v3944 = vsel %vm253, %v3942, 0
      %3946 = vmatprep.subr.bf16.mxu0 0
      %3947 = vmatpush1.bf16.msra.mxu0 %v3944
      %3948 = vmatprep.subr.bf16.mxu0 0
      %3949 = vmatpush1.bf16.msra.mxu0 0
      %3950 = vmatprep.subr.bf16.mxu0 0
      %3951 = vmatpush1.bf16.msra.mxu0 0
      %3952 = vmatprep.subr.bf16.mxu0 0
      %3953 = vmatpush1.bf16.msra.mxu0 0
      %3954 = vmatprep.subr.bf16.mxu0 0
      %3955 = vmatpush1.bf16.msra.mxu0 0
      %3956 = vmatprep.subr.bf16.mxu0 0
      %3957 = vmatpush1.bf16.msra.mxu0 0
      %3958 = vmatprep.subr.bf16.mxu0 0
      %3959 = vmatpush1.bf16.msra.mxu0 0
      %3960 = vmatprep.subr.bf16.mxu0 0
      %3961 = vmatpush1.bf16.msra.mxu0 0
      %3962 = vmatprep.subr.bf16.mxu0 0
      %3963 = vmatpush1.bf16.msra.mxu0 0
      %3964 = vmatprep.subr.bf16.mxu0 0
      %3965 = vmatpush1.bf16.msra.mxu0 0
      %3966 = vmatprep.subr.bf16.mxu0 0
      %3967 = vmatpush1.bf16.msra.mxu0 0
      %3968 = vmatprep.subr.bf16.mxu0 0
      %3969 = vmatpush1.bf16.msra.mxu0 0
      %3970 = vmatprep.subr.bf16.mxu0 0
      %3971 = vmatpush1.bf16.msra.mxu0 0
      %3972 = vmatprep.subr.bf16.mxu0 0
      %3973 = vmatpush1.bf16.msra.mxu0 0
      %3974 = vmatprep.subr.bf16.mxu0 0
      %3975 = vmatpush1.bf16.msra.mxu0 0
      %3976 = vmatprep.subr.bf16.mxu0 0
      %3977 = vmatpush1.bf16.msra.mxu0 0
      %3978 = vmatprep.mubr.bf16.mxu0 0
      %3979 = vmatmul.mubr.bf16.gmra.mrb[0].mxu0 %v251
      %v3980 = vpop.f32.mrb[0].mxu0
      %v3981 = vadd.f32 0.0, %v3980
      %v3982 = vpop.f32.mrb[0].mxu0
      %v3983 = vpop.f32.mrb[0].mxu0
      %v3984 = vpop.f32.mrb[0].mxu0
      %3985 = vdwg.mxu0
      %v3987 = vsel %vm253, %v3940, 0
      %3989 = vmatprep.subr.bf16.mxu0 0
      %3990 = vmatpush1.bf16.msra.mxu0 %v3987
      %3991 = vmatprep.subr.bf16.mxu0 0
      %3992 = vmatpush1.bf16.msra.mxu0 0
      %3993 = vmatprep.subr.bf16.mxu0 0
      %3994 = vmatpush1.bf16.msra.mxu0 0
      %3995 = vmatprep.subr.bf16.mxu0 0
      %3996 = vmatpush1.bf16.msra.mxu0 0
      %3997 = vmatprep.subr.bf16.mxu0 0
      %3998 = vmatpush1.bf16.msra.mxu0 0
      %3999 = vmatprep.subr.bf16.mxu0 0
      %4000 = vmatpush1.bf16.msra.mxu0 0
      %4001 = vmatprep.subr.bf16.mxu0 0
      %4002 = vmatpush1.bf16.msra.mxu0 0
      %4003 = vmatprep.subr.bf16.mxu0 0
      %4004 = vmatpush1.bf16.msra.mxu0 0
      %4005 = vmatprep.subr.bf16.mxu0 0
      %4006 = vmatpush1.bf16.msra.mxu0 0
      %4007 = vmatprep.subr.bf16.mxu0 0
      %4008 = vmatpush1.bf16.msra.mxu0 0
      %4009 = vmatprep.subr.bf16.mxu0 0
      %4010 = vmatpush1.bf16.msra.mxu0 0
      %4011 = vmatprep.subr.bf16.mxu0 0
      %4012 = vmatpush1.bf16.msra.mxu0 0
      %4013 = vmatprep.subr.bf16.mxu0 0
      %4014 = vmatpush1.bf16.msra.mxu0 0
      %4015 = vmatprep.subr.bf16.mxu0 0
      %4016 = vmatpush1.bf16.msra.mxu0 0
      %4017 = vmatprep.subr.bf16.mxu0 0
      %4018 = vmatpush1.bf16.msra.mxu0 0
      %4019 = vmatprep.subr.bf16.mxu0 0
      %4020 = vmatpush1.bf16.msra.mxu0 0
      %4021 = vmatprep.mubr.bf16.mxu0 0
      %4022 = vmatmul.mubr.bf16.gmra.mrb[0].mxu0 %v298
      %v4023 = vpop.f32.mrb[0].mxu0
      %v4024 = vadd.f32 %v3981, %v4023
      %v4025 = vpop.f32.mrb[0].mxu0
      %v4026 = vpop.f32.mrb[0].mxu0
      %v4027 = vpop.f32.mrb[0].mxu0
      %4028 = vdwg.mxu0
      %4029 = vrot.lane.b32.xlu0 %v3940, 127
      %v4030 = vpop.permute.xlu0 %4029
      %v4032 = vsel %vm253, %v4030, 0
      %4034 = vmatprep.subr.bf16.mxu0 0
      %4035 = vmatpush1.bf16.msra.mxu0 %v4032
      %4036 = vmatprep.subr.bf16.mxu0 0
      %4037 = vmatpush1.bf16.msra.mxu0 0
      %4038 = vmatprep.subr.bf16.mxu0 0
      %4039 = vmatpush1.bf16.msra.mxu0 0
      %4040 = vmatprep.subr.bf16.mxu0 0
      %4041 = vmatpush1.bf16.msra.mxu0 0
      %4042 = vmatprep.subr.bf16.mxu0 0
      %4043 = vmatpush1.bf16.msra.mxu0 0
      %4044 = vmatprep.subr.bf16.mxu0 0
      %4045 = vmatpush1.bf16.msra.mxu0 0
      %4046 = vmatprep.subr.bf16.mxu0 0
      %4047 = vmatpush1.bf16.msra.mxu0 0
      %4048 = vmatprep.subr.bf16.mxu0 0
      %4049 = vmatpush1.bf16.msra.mxu0 0
      %4050 = vmatprep.subr.bf16.mxu0 0
      %4051 = vmatpush1.bf16.msra.mxu0 0
      %4052 = vmatprep.subr.bf16.mxu0 0
      %4053 = vmatpush1.bf16.msra.mxu0 0
      %4054 = vmatprep.subr.bf16.mxu0 0
      %4055 = vmatpush1.bf16.msra.mxu0 0
      %4056 = vmatprep.subr.bf16.mxu0 0
      %4057 = vmatpush1.bf16.msra.mxu0 0
      %4058 = vmatprep.subr.bf16.mxu0 0
      %4059 = vmatpush1.bf16.msra.mxu0 0
      %4060 = vmatprep.subr.bf16.mxu0 0
      %4061 = vmatpush1.bf16.msra.mxu0 0
      %4062 = vmatprep.subr.bf16.mxu0 0
      %4063 = vmatpush1.bf16.msra.mxu0 0
      %4064 = vmatprep.subr.bf16.mxu0 0
      %4065 = vmatpush1.bf16.msra.mxu0 0
      %4066 = vmatprep.mubr.bf16.mxu0 0
      %4067 = vmatmul.mubr.bf16.gmra.mrb[0].mxu0 %v346
      %v4068 = vpop.f32.mrb[0].mxu0
      %v4069 = vadd.f32 0.0, %v4068
      %v4070 = vpop.f32.mrb[0].mxu0
      %v4071 = vpop.f32.mrb[0].mxu0
      %v4072 = vpop.f32.mrb[0].mxu0
      %4073 = vdwg.mxu0
      %v4074 = vadd.f32 %v4024, %v4069
      %v4075 = vmul.f32 %v4074, %v395
      %v4076 = vadd.f32 %v4075, %v401
      %4077 = vmatprep.subr.bf16.mxu0 0
      %4078 = vmatpush1.bf16.msra.mxu0 %v4032
      %4079 = vmatprep.subr.bf16.mxu0 0
      %4080 = vmatpush1.bf16.msra.mxu0 0
      %4081 = vmatprep.subr.bf16.mxu0 0
      %4082 = vmatpush1.bf16.msra.mxu0 0
      %4083 = vmatprep.subr.bf16.mxu0 0
      %4084 = vmatpush1.bf16.msra.mxu0 0
      %4085 = vmatprep.subr.bf16.mxu0 0
      %4086 = vmatpush1.bf16.msra.mxu0 0
      %4087 = vmatprep.subr.bf16.mxu0 0
      %4088 = vmatpush1.bf16.msra.mxu0 0
      %4089 = vmatprep.subr.bf16.mxu0 0
      %4090 = vmatpush1.bf16.msra.mxu0 0
      %4091 = vmatprep.subr.bf16.mxu0 0
      %4092 = vmatpush1.bf16.msra.mxu0 0
      %4093 = vmatprep.subr.bf16.mxu0 0
      %4094 = vmatpush1.bf16.msra.mxu0 0
      %4095 = vmatprep.subr.bf16.mxu0 0
      %4096 = vmatpush1.bf16.msra.mxu0 0
      %4097 = vmatprep.subr.bf16.mxu0 0
      %4098 = vmatpush1.bf16.msra.mxu0 0
      %4099 = vmatprep.subr.bf16.mxu0 0
      %4100 = vmatpush1.bf16.msra.mxu0 0
      %4101 = vmatprep.subr.bf16.mxu0 0
      %4102 = vmatpush1.bf16.msra.mxu0 0
      %4103 = vmatprep.subr.bf16.mxu0 0
      %4104 = vmatpush1.bf16.msra.mxu0 0
      %4105 = vmatprep.subr.bf16.mxu0 0
      %4106 = vmatpush1.bf16.msra.mxu0 0
      %4107 = vmatprep.subr.bf16.mxu0 0
      %4108 = vmatpush1.bf16.msra.mxu0 0
      %4109 = vmatprep.mubr.bf16.mxu0 0
      %4110 = vmatmul.mubr.bf16.gmra.mrb[0].mxu0 %v251
      %v4111 = vpop.f32.mrb[0].mxu0
      %v4112 = vadd.f32 0.0, %v4111
      %v4113 = vpop.f32.mrb[0].mxu0
      %v4114 = vpop.f32.mrb[0].mxu0
      %v4115 = vpop.f32.mrb[0].mxu0
      %4116 = vdwg.mxu0
      %4117 = vmatprep.subr.bf16.mxu0 0
      %4118 = vmatpush1.bf16.msra.mxu0 %v3944
      %4119 = vmatprep.subr.bf16.mxu0 0
      %4120 = vmatpush1.bf16.msra.mxu0 0
      %4121 = vmatprep.subr.bf16.mxu0 0
      %4122 = vmatpush1.bf16.msra.mxu0 0
      %4123 = vmatprep.subr.bf16.mxu0 0
      %4124 = vmatpush1.bf16.msra.mxu0 0
      %4125 = vmatprep.subr.bf16.mxu0 0
      %4126 = vmatpush1.bf16.msra.mxu0 0
      %4127 = vmatprep.subr.bf16.mxu0 0
      %4128 = vmatpush1.bf16.msra.mxu0 0
      %4129 = vmatprep.subr.bf16.mxu0 0
      %4130 = vmatpush1.bf16.msra.mxu0 0
      %4131 = vmatprep.subr.bf16.mxu0 0
      %4132 = vmatpush1.bf16.msra.mxu0 0
      %4133 = vmatprep.subr.bf16.mxu0 0
      %4134 = vmatpush1.bf16.msra.mxu0 0
      %4135 = vmatprep.subr.bf16.mxu0 0
      %4136 = vmatpush1.bf16.msra.mxu0 0
      %4137 = vmatprep.subr.bf16.mxu0 0
      %4138 = vmatpush1.bf16.msra.mxu0 0
      %4139 = vmatprep.subr.bf16.mxu0 0
      %4140 = vmatpush1.bf16.msra.mxu0 0
      %4141 = vmatprep.subr.bf16.mxu0 0
      %4142 = vmatpush1.bf16.msra.mxu0 0
      %4143 = vmatprep.subr.bf16.mxu0 0
      %4144 = vmatpush1.bf16.msra.mxu0 0
      %4145 = vmatprep.subr.bf16.mxu0 0
      %4146 = vmatpush1.bf16.msra.mxu0 0
      %4147 = vmatprep.subr.bf16.mxu0 0
      %4148 = vmatpush1.bf16.msra.mxu0 0
      %4149 = vmatprep.mubr.bf16.mxu0 0
      %4150 = vmatmul.mubr.bf16.gmra.mrb[0].mxu0 %v298
      %v4151 = vpop.f32.mrb[0].mxu0
      %v4152 = vadd.f32 %v4112, %v4151
      %v4153 = vpop.f32.mrb[0].mxu0
      %v4154 = vpop.f32.mrb[0].mxu0
      %v4155 = vpop.f32.mrb[0].mxu0
      %4156 = vdwg.mxu0
      %4157 = vrot.lane.b32.xlu0 %v3940, 119
      %v4158 = vpop.permute.xlu0 %4157
      %v4160 = vsel %vm253, %v4158, 0
      %4162 = vmatprep.subr.bf16.mxu0 0
      %4163 = vmatpush1.bf16.msra.mxu0 %v4160
      %4164 = vmatprep.subr.bf16.mxu0 0
      %4165 = vmatpush1.bf16.msra.mxu0 0
      %4166 = vmatprep.subr.bf16.mxu0 0
      %4167 = vmatpush1.bf16.msra.mxu0 0
      %4168 = vmatprep.subr.bf16.mxu0 0
      %4169 = vmatpush1.bf16.msra.mxu0 0
      %4170 = vmatprep.subr.bf16.mxu0 0
      %4171 = vmatpush1.bf16.msra.mxu0 0
      %4172 = vmatprep.subr.bf16.mxu0 0
      %4173 = vmatpush1.bf16.msra.mxu0 0
      %4174 = vmatprep.subr.bf16.mxu0 0
      %4175 = vmatpush1.bf16.msra.mxu0 0
      %4176 = vmatprep.subr.bf16.mxu0 0
      %4177 = vmatpush1.bf16.msra.mxu0 0
      %4178 = vmatprep.subr.bf16.mxu0 0
      %4179 = vmatpush1.bf16.msra.mxu0 0
      %4180 = vmatprep.subr.bf16.mxu0 0
      %4181 = vmatpush1.bf16.msra.mxu0 0
      %4182 = vmatprep.subr.bf16.mxu0 0
      %4183 = vmatpush1.bf16.msra.mxu0 0
      %4184 = vmatprep.subr.bf16.mxu0 0
      %4185 = vmatpush1.bf16.msra.mxu0 0
      %4186 = vmatprep.subr.bf16.mxu0 0
      %4187 = vmatpush1.bf16.msra.mxu0 0
      %4188 = vmatprep.subr.bf16.mxu0 0
      %4189 = vmatpush1.bf16.msra.mxu0 0
      %4190 = vmatprep.subr.bf16.mxu0 0
      %4191 = vmatpush1.bf16.msra.mxu0 0
      %4192 = vmatprep.subr.bf16.mxu0 0
      %4193 = vmatpush1.bf16.msra.mxu0 0
      %4194 = vmatprep.mubr.bf16.mxu0 0
      %4195 = vmatmul.mubr.bf16.gmra.mrb[0].mxu0 %v346
      %v4196 = vpop.f32.mrb[0].mxu0
      %v4197 = vadd.f32 0.0, %v4196
      %v4198 = vpop.f32.mrb[0].mxu0
      %v4199 = vpop.f32.mrb[0].mxu0
      %v4200 = vpop.f32.mrb[0].mxu0
      %4201 = vdwg.mxu0
      %v4202 = vadd.f32 %v4152, %v4197
      %v4203 = vmul.f32 %v4202, %v395
      %v4204 = vadd.f32 %v4203, %v401
      %v4205 = vmax.f32 %v4076, %v4204
      %v4206 = vld [vmem:[%s223 + $0x18] sm:$0xc]
      %v4207 = vld [vmem:[%s223 + $0x1c] sm:$0xf]
      %v4210 = vunpack.c.l.b16 %v4206
      %v4211 = vunpack.c.l.b16 %v4207
      %v4212 = vpack.c.b16 %v4211, %v4210
      %v4213 = vrot.slane %v4212, 2
      %4214 = vrot.lane.b32.xlu0 %v4213, 120
      %v4215 = vpop.permute.xlu0 %4214
      %v4217 = vsel %vm253, %v4215, 0
      %4219 = vmatprep.subr.bf16.mxu0 0
      %4220 = vmatpush1.bf16.msra.mxu0 %v4217
      %4221 = vmatprep.subr.bf16.mxu0 0
      %4222 = vmatpush1.bf16.msra.mxu0 0
      %4223 = vmatprep.subr.bf16.mxu0 0
      %4224 = vmatpush1.bf16.msra.mxu0 0
      %4225 = vmatprep.subr.bf16.mxu0 0
      %4226 = vmatpush1.bf16.msra.mxu0 0
      %4227 = vmatprep.subr.bf16.mxu0 0
      %4228 = vmatpush1.bf16.msra.mxu0 0
      %4229 = vmatprep.subr.bf16.mxu0 0
      %4230 = vmatpush1.bf16.msra.mxu0 0
      %4231 = vmatprep.subr.bf16.mxu0 0
      %4232 = vmatpush1.bf16.msra.mxu0 0
      %4233 = vmatprep.subr.bf16.mxu0 0
      %4234 = vmatpush1.bf16.msra.mxu0 0
      %4235 = vmatprep.subr.bf16.mxu0 0
      %4236 = vmatpush1.bf16.msra.mxu0 0
      %4237 = vmatprep.subr.bf16.mxu0 0
      %4238 = vmatpush1.bf16.msra.mxu0 0
      %4239 = vmatprep.subr.bf16.mxu0 0
      %4240 = vmatpush1.bf16.msra.mxu0 0
      %4241 = vmatprep.subr.bf16.mxu0 0
      %4242 = vmatpush1.bf16.msra.mxu0 0
      %4243 = vmatprep.subr.bf16.mxu0 0
      %4244 = vmatpush1.bf16.msra.mxu0 0
      %4245 = vmatprep.subr.bf16.mxu0 0
      %4246 = vmatpush1.bf16.msra.mxu0 0
      %4247 = vmatprep.subr.bf16.mxu0 0
      %4248 = vmatpush1.bf16.msra.mxu0 0
      %4249 = vmatprep.subr.bf16.mxu0 0
      %4250 = vmatpush1.bf16.msra.mxu0 0
      %4251 = vmatprep.mubr.bf16.mxu0 0
      %4252 = vmatmul.mubr.bf16.gmra.mrb[0].mxu0 %v251
      %v4253 = vpop.f32.mrb[0].mxu0
      %v4254 = vadd.f32 0.0, %v4253
      %v4255 = vpop.f32.mrb[0].mxu0
      %v4256 = vpop.f32.mrb[0].mxu0
      %v4257 = vpop.f32.mrb[0].mxu0
      %4258 = vdwg.mxu0
      %v4260 = vsel %vm253, %v4213, 0
      %4262 = vmatprep.subr.bf16.mxu0 0
      %4263 = vmatpush1.bf16.msra.mxu0 %v4260
      %4264 = vmatprep.subr.bf16.mxu0 0
      %4265 = vmatpush1.bf16.msra.mxu0 0
      %4266 = vmatprep.subr.bf16.mxu0 0
      %4267 = vmatpush1.bf16.msra.mxu0 0
      %4268 = vmatprep.subr.bf16.mxu0 0
      %4269 = vmatpush1.bf16.msra.mxu0 0
      %4270 = vmatprep.subr.bf16.mxu0 0
      %4271 = vmatpush1.bf16.msra.mxu0 0
      %4272 = vmatprep.subr.bf16.mxu0 0
      %4273 = vmatpush1.bf16.msra.mxu0 0
      %4274 = vmatprep.subr.bf16.mxu0 0
      %4275 = vmatpush1.bf16.msra.mxu0 0
      %4276 = vmatprep.subr.bf16.mxu0 0
      %4277 = vmatpush1.bf16.msra.mxu0 0
      %4278 = vmatprep.subr.bf16.mxu0 0
      %4279 = vmatpush1.bf16.msra.mxu0 0
      %4280 = vmatprep.subr.bf16.mxu0 0
      %4281 = vmatpush1.bf16.msra.mxu0 0
      %4282 = vmatprep.subr.bf16.mxu0 0
      %4283 = vmatpush1.bf16.msra.mxu0 0
      %4284 = vmatprep.subr.bf16.mxu0 0
      %4285 = vmatpush1.bf16.msra.mxu0 0
      %4286 = vmatprep.subr.bf16.mxu0 0
      %4287 = vmatpush1.bf16.msra.mxu0 0
      %4288 = vmatprep.subr.bf16.mxu0 0
      %4289 = vmatpush1.bf16.msra.mxu0 0
      %4290 = vmatprep.subr.bf16.mxu0 0
      %4291 = vmatpush1.bf16.msra.mxu0 0
      %4292 = vmatprep.subr.bf16.mxu0 0
      %4293 = vmatpush1.bf16.msra.mxu0 0
      %4294 = vmatprep.mubr.bf16.mxu0 0
      %4295 = vmatmul.mubr.bf16.gmra.mrb[0].mxu0 %v298
      %v4296 = vpop.f32.mrb[0].mxu0
      %v4297 = vadd.f32 %v4254, %v4296
      %v4298 = vpop.f32.mrb[0].mxu0
      %v4299 = vpop.f32.mrb[0].mxu0
      %v4300 = vpop.f32.mrb[0].mxu0
      %4301 = vdwg.mxu0
      %4302 = vrot.lane.b32.xlu0 %v4213, 127
      %v4303 = vpop.permute.xlu0 %4302
      %v4305 = vsel %vm253, %v4303, 0
      %4307 = vmatprep.subr.bf16.mxu0 0
      %4308 = vmatpush1.bf16.msra.mxu0 %v4305
      %4309 = vmatprep.subr.bf16.mxu0 0
      %4310 = vmatpush1.bf16.msra.mxu0 0
      %4311 = vmatprep.subr.bf16.mxu0 0
      %4312 = vmatpush1.bf16.msra.mxu0 0
      %4313 = vmatprep.subr.bf16.mxu0 0
      %4314 = vmatpush1.bf16.msra.mxu0 0
      %4315 = vmatprep.subr.bf16.mxu0 0
      %4316 = vmatpush1.bf16.msra.mxu0 0
      %4317 = vmatprep.subr.bf16.mxu0 0
      %4318 = vmatpush1.bf16.msra.mxu0 0
      %4319 = vmatprep.subr.bf16.mxu0 0
      %4320 = vmatpush1.bf16.msra.mxu0 0
      %4321 = vmatprep.subr.bf16.mxu0 0
      %4322 = vmatpush1.bf16.msra.mxu0 0
      %4323 = vmatprep.subr.bf16.mxu0 0
      %4324 = vmatpush1.bf16.msra.mxu0 0
      %4325 = vmatprep.subr.bf16.mxu0 0
      %4326 = vmatpush1.bf16.msra.mxu0 0
      %4327 = vmatprep.subr.bf16.mxu0 0
      %4328 = vmatpush1.bf16.msra.mxu0 0
      %4329 = vmatprep.subr.bf16.mxu0 0
      %4330 = vmatpush1.bf16.msra.mxu0 0
      %4331 = vmatprep.subr.bf16.mxu0 0
      %4332 = vmatpush1.bf16.msra.mxu0 0
      %4333 = vmatprep.subr.bf16.mxu0 0
      %4334 = vmatpush1.bf16.msra.mxu0 0
      %4335 = vmatprep.subr.bf16.mxu0 0
      %4336 = vmatpush1.bf16.msra.mxu0 0
      %4337 = vmatprep.subr.bf16.mxu0 0
      %4338 = vmatpush1.bf16.msra.mxu0 0
      %4339 = vmatprep.mubr.bf16.mxu0 0
      %4340 = vmatmul.mubr.bf16.gmra.mrb[0].mxu0 %v346
      %v4341 = vpop.f32.mrb[0].mxu0
      %v4342 = vadd.f32 0.0, %v4341
      %v4343 = vpop.f32.mrb[0].mxu0
      %v4344 = vpop.f32.mrb[0].mxu0
      %v4345 = vpop.f32.mrb[0].mxu0
      %4346 = vdwg.mxu0
      %v4347 = vadd.f32 %v4297, %v4342
      %v4348 = vmul.f32 %v4347, %v395
      %v4349 = vadd.f32 %v4348, %v401
      %v4350 = vmax.f32 %v4205, %v4349
      %4351 = vmatprep.subr.bf16.mxu0 0
      %4352 = vmatpush1.bf16.msra.mxu0 %v4305
      %4353 = vmatprep.subr.bf16.mxu0 0
      %4354 = vmatpush1.bf16.msra.mxu0 0
      %4355 = vmatprep.subr.bf16.mxu0 0
      %4356 = vmatpush1.bf16.msra.mxu0 0
      %4357 = vmatprep.subr.bf16.mxu0 0
      %4358 = vmatpush1.bf16.msra.mxu0 0
      %4359 = vmatprep.subr.bf16.mxu0 0
      %4360 = vmatpush1.bf16.msra.mxu0 0
      %4361 = vmatprep.subr.bf16.mxu0 0
      %4362 = vmatpush1.bf16.msra.mxu0 0
      %4363 = vmatprep.subr.bf16.mxu0 0
      %4364 = vmatpush1.bf16.msra.mxu0 0
      %4365 = vmatprep.subr.bf16.mxu0 0
      %4366 = vmatpush1.bf16.msra.mxu0 0
      %4367 = vmatprep.subr.bf16.mxu0 0
      %4368 = vmatpush1.bf16.msra.mxu0 0
      %4369 = vmatprep.subr.bf16.mxu0 0
      %4370 = vmatpush1.bf16.msra.mxu0 0
      %4371 = vmatprep.subr.bf16.mxu0 0
      %4372 = vmatpush1.bf16.msra.mxu0 0
      %4373 = vmatprep.subr.bf16.mxu0 0
      %4374 = vmatpush1.bf16.msra.mxu0 0
      %4375 = vmatprep.subr.bf16.mxu0 0
      %4376 = vmatpush1.bf16.msra.mxu0 0
      %4377 = vmatprep.subr.bf16.mxu0 0
      %4378 = vmatpush1.bf16.msra.mxu0 0
      %4379 = vmatprep.subr.bf16.mxu0 0
      %4380 = vmatpush1.bf16.msra.mxu0 0
      %4381 = vmatprep.subr.bf16.mxu0 0
      %4382 = vmatpush1.bf16.msra.mxu0 0
      %4383 = vmatprep.mubr.bf16.mxu0 0
      %4384 = vmatmul.mubr.bf16.gmra.mrb[0].mxu0 %v251
      %v4385 = vpop.f32.mrb[0].mxu0
      %v4386 = vadd.f32 0.0, %v4385
      %v4387 = vpop.f32.mrb[0].mxu0
      %v4388 = vpop.f32.mrb[0].mxu0
      %v4389 = vpop.f32.mrb[0].mxu0
      %4390 = vdwg.mxu0
      %4391 = vmatprep.subr.bf16.mxu0 0
      %4392 = vmatpush1.bf16.msra.mxu0 %v4217
      %4393 = vmatprep.subr.bf16.mxu0 0
      %4394 = vmatpush1.bf16.msra.mxu0 0
      %4395 = vmatprep.subr.bf16.mxu0 0
      %4396 = vmatpush1.bf16.msra.mxu0 0
      %4397 = vmatprep.subr.bf16.mxu0 0
      %4398 = vmatpush1.bf16.msra.mxu0 0
      %4399 = vmatprep.subr.bf16.mxu0 0
      %4400 = vmatpush1.bf16.msra.mxu0 0
      %4401 = vmatprep.subr.bf16.mxu0 0
      %4402 = vmatpush1.bf16.msra.mxu0 0
      %4403 = vmatprep.subr.bf16.mxu0 0
      %4404 = vmatpush1.bf16.msra.mxu0 0
      %4405 = vmatprep.subr.bf16.mxu0 0
      %4406 = vmatpush1.bf16.msra.mxu0 0
      %4407 = vmatprep.subr.bf16.mxu0 0
      %4408 = vmatpush1.bf16.msra.mxu0 0
      %4409 = vmatprep.subr.bf16.mxu0 0
      %4410 = vmatpush1.bf16.msra.mxu0 0
      %4411 = vmatprep.subr.bf16.mxu0 0
      %4412 = vmatpush1.bf16.msra.mxu0 0
      %4413 = vmatprep.subr.bf16.mxu0 0
      %4414 = vmatpush1.bf16.msra.mxu0 0
      %4415 = vmatprep.subr.bf16.mxu0 0
      %4416 = vmatpush1.bf16.msra.mxu0 0
      %4417 = vmatprep.subr.bf16.mxu0 0
      %4418 = vmatpush1.bf16.msra.mxu0 0
      %4419 = vmatprep.subr.bf16.mxu0 0
      %4420 = vmatpush1.bf16.msra.mxu0 0
      %4421 = vmatprep.subr.bf16.mxu0 0
      %4422 = vmatpush1.bf16.msra.mxu0 0
      %4423 = vmatprep.mubr.bf16.mxu0 0
      %4424 = vmatmul.mubr.bf16.gmra.mrb[0].mxu0 %v298
      %v4425 = vpop.f32.mrb[0].mxu0
      %v4426 = vadd.f32 %v4386, %v4425
      %v4427 = vpop.f32.mrb[0].mxu0
      %v4428 = vpop.f32.mrb[0].mxu0
      %v4429 = vpop.f32.mrb[0].mxu0
      %4430 = vdwg.mxu0
      %4431 = vrot.lane.b32.xlu0 %v4213, 119
      %v4432 = vpop.permute.xlu0 %4431
      %v4434 = vsel %vm253, %v4432, 0
      %4436 = vmatprep.subr.bf16.mxu0 0
      %4437 = vmatpush1.bf16.msra.mxu0 %v4434
      %4438 = vmatprep.subr.bf16.mxu0 0
      %4439 = vmatpush1.bf16.msra.mxu0 0
      %4440 = vmatprep.subr.bf16.mxu0 0
      %4441 = vmatpush1.bf16.msra.mxu0 0
      %4442 = vmatprep.subr.bf16.mxu0 0
      %4443 = vmatpush1.bf16.msra.mxu0 0
      %4444 = vmatprep.subr.bf16.mxu0 0
      %4445 = vmatpush1.bf16.msra.mxu0 0
      %4446 = vmatprep.subr.bf16.mxu0 0
      %4447 = vmatpush1.bf16.msra.mxu0 0
      %4448 = vmatprep.subr.bf16.mxu0 0
      %4449 = vmatpush1.bf16.msra.mxu0 0
      %4450 = vmatprep.subr.bf16.mxu0 0
      %4451 = vmatpush1.bf16.msra.mxu0 0
      %4452 = vmatprep.subr.bf16.mxu0 0
      %4453 = vmatpush1.bf16.msra.mxu0 0
      %4454 = vmatprep.subr.bf16.mxu0 0
      %4455 = vmatpush1.bf16.msra.mxu0 0
      %4456 = vmatprep.subr.bf16.mxu0 0
      %4457 = vmatpush1.bf16.msra.mxu0 0
      %4458 = vmatprep.subr.bf16.mxu0 0
      %4459 = vmatpush1.bf16.msra.mxu0 0
      %4460 = vmatprep.subr.bf16.mxu0 0
      %4461 = vmatpush1.bf16.msra.mxu0 0
      %4462 = vmatprep.subr.bf16.mxu0 0
      %4463 = vmatpush1.bf16.msra.mxu0 0
      %4464 = vmatprep.subr.bf16.mxu0 0
      %4465 = vmatpush1.bf16.msra.mxu0 0
      %4466 = vmatprep.subr.bf16.mxu0 0
      %4467 = vmatpush1.bf16.msra.mxu0 0
      %4468 = vmatprep.mubr.bf16.mxu0 0
      %4469 = vmatmul.mubr.bf16.gmra.mrb[0].mxu0 %v346
      %v4470 = vpop.f32.mrb[0].mxu0
      %v4471 = vadd.f32 0.0, %v4470
      %v4472 = vpop.f32.mrb[0].mxu0
      %v4473 = vpop.f32.mrb[0].mxu0
      %v4474 = vpop.f32.mrb[0].mxu0
      %4475 = vdwg.mxu0
      %v4476 = vadd.f32 %v4426, %v4471
      %v4477 = vmul.f32 %v4476, %v395
      %v4478 = vadd.f32 %v4477, %v401
      %v4479 = vmax.f32 %v4350, %v4478
      %v4481 = vcombine.high %v4479, %v4479
      %v4483 = vunpack.c.l.s4 1966171168
      %v4484 = vunpack.c.0.s8 %v4483
      %v4485 = vlaneseq
      %v4486 = vshrl.u32 %v4485, 7
      %v4487 = vsub.s32 %v4484, %v4486
      %v4488 = vrot.slane %v4479, %v4487
      %v4490 = vunpack.c.l.s4 1966171168
      %v4491 = vunpack.c.0.s8 %v4490
      %v4492 = vlaneseq
      %v4493 = vshrl.u32 %v4492, 7
      %v4494 = vsub.s32 %v4491, %v4493
      %v4495 = vrot.slane %v4481, %v4494
      %v4496 = vcombine.high %v4488, %v4488
      %v4497 = vcombine.high %v4495, %v4495
      %v4499 = vunpack.c.l.s4 1966171168
      %v4500 = vunpack.c.0.s8 %v4499
      %v4501 = vlaneseq
      %v4502 = vshrl.u32 %v4501, 7
      %v4503 = vsub.s32 %v4500, %v4502
      %v4504 = vrot.slane %v4488, %v4503
      %v4506 = vunpack.c.l.s4 1966171168
      %v4507 = vunpack.c.0.s8 %v4506
      %v4508 = vlaneseq
      %v4509 = vshrl.u32 %v4508, 7
      %v4510 = vsub.s32 %v4507, %v4509
      %v4511 = vrot.slane %v4495, %v4510
      %v4513 = vunpack.c.l.s4 1966171168
      %v4514 = vunpack.c.0.s8 %v4513
      %v4515 = vlaneseq
      %v4516 = vshrl.u32 %v4515, 7
      %v4517 = vsub.s32 %v4514, %v4516
      %v4518 = vrot.slane %v4496, %v4517
      %v4520 = vunpack.c.l.s4 1966171168
      %v4521 = vunpack.c.0.s8 %v4520
      %v4522 = vlaneseq
      %v4523 = vshrl.u32 %v4522, 7
      %v4524 = vsub.s32 %v4521, %v4523
      %v4525 = vrot.slane %v4497, %v4524
      %v4526 = vcombine.high %v4504, %v4504
      %v4527 = vcombine.high %v4511, %v4511
      %v4528 = vcombine.high %v4518, %v4518
      %v4529 = vcombine.high %v4525, %v4525
      %4538 = vst.msk [vmem:[%s231 + $0x6] sm:$0x1] %vm865, %v4504
      %4539 = vst.msk [vmem:[%s231 + $0xe] sm:$0x1] %vm865, %v4518
      %4540 = vst.msk [vmem:[%s231 + $0x16] sm:$0x1] %vm865, %v4526
      %4541 = vst.msk [vmem:[%s231 + $0x1e] sm:$0x1] %vm865, %v4528
      %4542 = vst.msk [vmem:[%s231 + $0x26] sm:$0x1] %vm865, %v4511
      %4543 = vst.msk [vmem:[%s231 + $0x2e] sm:$0x1] %vm865, %v4525
      %4544 = vst.msk [vmem:[%s231 + $0x36] sm:$0x1] %vm865, %v4527
      %4545 = vst.msk [vmem:[%s231 + $0x3e] sm:$0x1] %vm865, %v4529
      %p4546 = scmp.lt.s32.totalorder %s19, 1
      %s4547 = scalar_select %p4546, %s19, 1
      %p4548 = scmp.lt.s32.totalorder %s20, 0
      %s4549 = scalar_select %p4548, %s20, 0
      %s4550 = smul.addr %s4547, 8
      %s4551 = sadd.s32 %s4549, %s4550
      %s4552 = smul.addr %s4551, 8
      %s4553 = scalar_lea.vmem %s4, %s4552
      // Predicated region
      $region37: #{tpu_custom_call.1} parent=35 // pred_check
        %p4554 = pneg %p138
      $region38: #{tpu_custom_call.1} parent=35 // pred_check_branch
        %4556 = sbr.rel (%p4554) target = $region40
      $region39: #{tpu_custom_call.1} parent=35 // pred_region
        _
      $region40: #{tpu_custom_call.1} parent=35 // pred_fallthru
        _
    $region36: #{tpu_custom_call.1} parent=5 // pred_fallthru
      _
    %p4557 = scmp.le.s32.totalorder 2, %s10
    // Predicated region
    $region41: #{tpu_custom_call.1} parent=5 // pred_check
      %p4558 = pneg %p4557
    $region42: #{tpu_custom_call.1} parent=5 // pred_check_branch
      %4560 = sbr.rel (%p4558) target = $region44
    $region43: #{tpu_custom_call.1} parent=5 // pred_region
      %s4561 = ssub.s32 %s10, 2
      // Predicated region
      $region45: #{tpu_custom_call.1} parent=43 // pred_check
        %p4562 = pneg %p144
      $region46: #{tpu_custom_call.1} parent=43 // pred_check_branch
        %4564 = sbr.rel (%p4562) target = $region48
      $region47: #{tpu_custom_call.1} parent=43 // pred_region
        %p4565 = scmp.lt.s32.totalorder %s21, 1
        %s4566 = scalar_select %p4565, %s21, 1
        %p4567 = scmp.lt.s32.totalorder %s22, 0
        %s4568 = scalar_select %p4567, %s22, 0
        %s4569 = smul.addr %s4566, 8
        %s4570 = sadd.s32 %s4568, %s4569
        %s4571 = smul.addr %s4570, 8
        %s4572 = scalar_lea.vmem %s4, %s4571
      $region48: #{tpu_custom_call.1} parent=43 // pred_fallthru
        _
    $region44: #{tpu_custom_call.1} parent=5 // pred_fallthru
      _
  $region6: #{tpu_custom_call.1} parent=0 // loop_footer
    %s14 = sadd.s32 1, %s10
  $region7: #{tpu_custom_call.1} parent=0 // loop_footer_branch
    %9 = sbr.rel target = $region3
  $region8: #{tpu_custom_call.1} parent=0 // loop_exit
    _

</llo_original>
